<compile_context>
chip_gen: v6e
topology: v6e:2x2x1
jax: 0.10.0
libtpu: 0.0.40
codegen_flags: <defaults>
</compile_context>

<pallas_src>
import jax
import jax.numpy as jnp
from jax.experimental import pallas as pl
from jax.experimental.pallas import tpu as pltpu

_BN_EPS = 1e-5


# ---------------------------------------------------------------------------
# Kernel A: conv1 + BN1 + tanh + 2x2 max-pool
#   a_ref : (4, M1, 128)  im2col rows grouped by pool-window element (ph*2+pw)
#   b_ref : (128, 128)    conv1 weights (49 taps zero-padded to 128) x Cout
#   scale/bias : (1, 128) folded conv bias + inference BatchNorm affine
#   o_ref : (M1, 128)     pooled NHWC-flat activations, rows = (n, oh, ow)
# ---------------------------------------------------------------------------
def _conv1_bn_tanh_pool_kernel(a_ref, b_ref, scale_ref, bias_ref, o_ref):
    scale = scale_ref[...]
    bias = bias_ref[...]
    b = b_ref[...]
    pooled = None
    for p in range(a_ref.shape[0]):              # 4 pool-window elements (static)
        y = jnp.dot(a_ref[p], b, preferred_element_type=jnp.float32)
        t = jnp.tanh(y * scale + bias)           # dropout(p=0.2) == identity (eval)
        pooled = t if pooled is None else jnp.maximum(pooled, t)
    o_ref[...] = pooled


# ---------------------------------------------------------------------------
# Kernel B: conv2 + BN2 + tanh + 2x2 max-pool + conv3(centre tap) + BN3 + tanh
#   a2_ref : (4, N, 2048)  conv2 im2col, grouped by the 4 surviving pool taps
#   b2_ref : (2048, 256)   conv2 weights;  b3_ref : (256, 512) conv3 centre tap
#   o_ref  : (N, 512)
# ---------------------------------------------------------------------------
def _conv2_pool_conv3_kernel(a2_ref, b2_ref, s2_ref, bi2_ref,
                             b3_ref, s3_ref, bi3_ref, o_ref):
    s2 = s2_ref[...]
    bi2 = bi2_ref[...]
    b2 = b2_ref[...]
    pooled = None
    for p in range(a2_ref.shape[0]):             # 4 pool-window elements (static)
        y = jnp.dot(a2_ref[p], b2, preferred_element_type=jnp.float32)
        t = jnp.tanh(y * s2 + bi2)
        pooled = t if pooled is None else jnp.maximum(pooled, t)
    y3 = jnp.dot(pooled, b3_ref[...], preferred_element_type=jnp.float32)
    o_ref[...] = jnp.tanh(y3 * s3_ref[...] + bi3_ref[...])


# ---------------------------------------------------------------------------
# pallas_call wrappers (single grid step, full-array VMEM-resident blocks)
# ---------------------------------------------------------------------------
def _full_block(shape):
    ndim = len(shape)

    def idx(i):
        return (0,) * ndim

    return pl.BlockSpec(tuple(shape), idx)


def _conv1_stage(a1, b1, scale, bias):
    _, m1, _ = a1.shape
    c1 = b1.shape[1]
    return pl.pallas_call(
        _conv1_bn_tanh_pool_kernel,
        out_shape=jax.ShapeDtypeStruct((m1, c1), jnp.float32),
        grid_spec=pltpu.PrefetchScalarGridSpec(
            num_scalar_prefetch=0,
            grid=(1,),
            in_specs=[_full_block(a1.shape), _full_block(b1.shape),
                      _full_block(scale.shape), _full_block(bias.shape)],
            out_specs=_full_block((m1, c1)),
        ),
    )(a1, b1, scale, bias)


def _conv23_stage(a2, b2, s2, bi2, b3, s3, bi3):
    n = a2.shape[1]
    c3 = b3.shape[1]
    return pl.pallas_call(
        _conv2_pool_conv3_kernel,
        out_shape=jax.ShapeDtypeStruct((n, c3), jnp.float32),
        grid_spec=pltpu.PrefetchScalarGridSpec(
            num_scalar_prefetch=0,
            grid=(1,),
            in_specs=[_full_block(a2.shape), _full_block(b2.shape),
                      _full_block(s2.shape), _full_block(bi2.shape),
                      _full_block(b3.shape), _full_block(s3.shape),
                      _full_block(bi3.shape)],
            out_specs=_full_block((n, c3)),
        ),
    )(a2, b2, s2, bi2, b3, s3, bi3)


# ---------------------------------------------------------------------------
# Host-side glue: im2col (pool-grouped) and BN folding -- tiny tensors only.
# ---------------------------------------------------------------------------
def _fold_bn(conv_b, gamma, beta, rmean, rvar, eps=_BN_EPS):
    scale = gamma * jax.lax.rsqrt(rvar + eps)
    bias = beta + (conv_b - rmean) * scale
    return scale[None, :], bias[None, :]


def _im2col_conv1_pool_grouped(x):
    """x: (N, 1, 28, 28) -> (4, N*49, 128) f32.
    Leading axis = 2x2 pool-window element (ph*2+pw); rows = (n, oh, ow) over
    the pooled 7x7 grid; columns = the 49 conv1 taps zero-padded to 128."""
    n = x.shape[0]
    xp = jnp.pad(x[:, 0], ((0, 0), (3, 3), (3, 3)))            # (N, 34, 34)
    cols = []
    for i in range(7):
        for j in range(7):
            cols.append(xp[:, i:i + 28:2, j:j + 28:2])         # (N, 14, 14)
    p = jnp.stack(cols, axis=-1)                               # (N, 14, 14, 49)
    p = p.reshape(n, 7, 2, 7, 2, 49).transpose(2, 4, 0, 1, 3, 5)
    p = p.reshape(4, n * 49, 49)                               # (ph*2+pw, n*49, 49)
    return jnp.pad(p, ((0, 0), (0, 0), (0, 128 - 49)))


def _im2col_conv2_pool_grouped(pooled1, n):
    """pooled1: (N*49, 128) NHWC-flat 7x7 map -> (4, N, 2048).
    Only the 4 conv2 output positions kept by the 3x3->1x1 max-pool (top-left
    2x2) are materialized; K index = (ki*4+kj)*128 + c (tap-major, C-minor)."""
    t = pooled1.reshape(n, 7, 7, 128)
    tp = jnp.pad(t, ((0, 0), (1, 1), (1, 1), (0, 0)))          # (N, 9, 9, 128)
    taps = []
    for ki in range(4):
        for kj in range(4):
            taps.append(tp[:, ki:ki + 3:2, kj:kj + 3:2, :])    # (N, 2, 2, 128)
    a2 = jnp.stack(taps, axis=3)                               # (N, 2, 2, 16, 128)
    a2 = a2.transpose(1, 2, 0, 3, 4)                           # (oh, ow, N, 16, 128)
    return a2.reshape(4, n, 16 * 128)


# ---------------------------------------------------------------------------
# Model: deterministic parameter construction + forward
# ---------------------------------------------------------------------------
def _make_conv_params(key, cout, cin, k):
    kw_, kb = jax.random.split(key)
    w = jax.random.normal(kw_, (cout, cin, k, k), jnp.float32) * 0.05
    b = jax.random.normal(kb, (cout,), jnp.float32) * 0.05
    return w, b


def _make_bn_params(key, c):
    k1, k2, k3, k4 = jax.random.split(key, 4)
    gamma = 1.0 + 0.1 * jax.random.normal(k1, (c,), jnp.float32)
    beta = 0.1 * jax.random.normal(k2, (c,), jnp.float32)
    rmean = 0.1 * jax.random.normal(k3, (c,), jnp.float32)
    rvar = 1.0 + 0.5 * jax.random.uniform(k4, (c,), jnp.float32)
    return gamma, beta, rmean, rvar


def make_params(seed=0):
    keys = jax.random.split(jax.random.PRNGKey(seed), 6)
    p = {}
    p["conv1"] = _make_conv_params(keys[0], 128, 1, 7)
    p["bn1"] = _make_bn_params(keys[1], 128)
    p["conv2"] = _make_conv_params(keys[2], 256, 128, 4)
    p["bn2"] = _make_bn_params(keys[3], 256)
    p["conv3"] = _make_conv_params(keys[4], 512, 256, 5)
    p["bn3"] = _make_bn_params(keys[5], 512)
    return p


@jax.jit
def model_forward(x, params):
    n = x.shape[0]
    w1, cb1 = params["conv1"]
    g1, be1, m1, v1 = params["bn1"]
    w2, cb2 = params["conv2"]
    g2, be2, m2, v2 = params["bn2"]
    w3, cb3 = params["conv3"]
    g3, be3, m3, v3 = params["bn3"]

    # Fold conv bias + inference BatchNorm into a per-channel scale/bias epilogue.
    s1, bi1 = _fold_bn(cb1, g1, be1, m1, v1)
    s2, bi2 = _fold_bn(cb2, g2, be2, m2, v2)
    s3, bi3 = _fold_bn(cb3, g3, be3, m3, v3)

    # Matmul-ready weights (lane-dense Cout, K ordering matching the im2cols).
    b1m = jnp.pad(w1.reshape(128, 49).T, ((0, 128 - 49), (0, 0)))   # (128, 128)
    b2m = w2.transpose(2, 3, 1, 0).reshape(16 * 128, 256)           # (2048, 256)
    b3m = w3[:, :, 2, 2].T                                          # (256, 512) centre tap (exact: 1x1 input, pad=2)

    # Stage A: conv1 -> BN1 -> tanh -> (dropout=id) -> maxpool  (one pallas_call)
    a1 = _im2col_conv1_pool_grouped(x)                              # (4, N*49, 128)
    pooled1 = _conv1_stage(a1, b1m, s1, bi1)                        # (N*49, 128) NHWC-flat

    # Stage B: conv2 -> BN2 -> tanh -> maxpool -> conv3 -> BN3 -> tanh (one pallas_call)
    a2 = _im2col_conv2_pool_grouped(pooled1, n)                     # (4, N, 2048)
    y = _conv23_stage(a2, b2m, s2, bi2, b3m, s3, bi3)               # (N, 512)
    return y.reshape(n, 512, 1, 1)                                  # NCHW, H=W=1


if __name__ == "__main__":
    key = jax.random.PRNGKey(0)
    x = jax.random.normal(key, (2, 1, 28, 28), jnp.float32)  # small batch
    params = make_params(seed=0)

    out = model_forward(x, params)
    out = jax.block_until_ready(out)

    assert out.shape == (2, 512, 1, 1), out.shape
    assert out.dtype == jnp.float32
    assert bool(jnp.all(jnp.isfinite(out)))
    print("KERNEL_OK")
</pallas_src>

<mosaic_0001>
module attributes {stable_mosaic.version = 11 : i64} {
  func.func @_conv1_bn_tanh_pool_kernel(%arg0: i32, %arg1: memref<4x98x128xf32, #tpu.memory_space<vmem>>, %arg2: memref<128x128xf32, #tpu.memory_space<vmem>>, %arg3: memref<1x128xf32, #tpu.memory_space<vmem>>, %arg4: memref<1x128xf32, #tpu.memory_space<vmem>>, %arg5: memref<98x128xf32, #tpu.memory_space<vmem>>) attributes {dimension_semantics = [#tpu.dimension_semantics<arbitrary>], iteration_bounds = array<i64: 1>, scalar_prefetch = 0 : i64, scratch_operands = 0 : i64, tpu.core_type = #tpu.core_type<tc>, window_params = [{pipeline_mode = #tpu.pipeline_mode<synchronous>, transform_indices = @transform_0, window_bounds = array<i64: 4, 98, 128>}, {pipeline_mode = #tpu.pipeline_mode<synchronous>, transform_indices = @transform_1, window_bounds = array<i64: 128, 128>}, {pipeline_mode = #tpu.pipeline_mode<synchronous>, transform_indices = @transform_2, window_bounds = array<i64: 1, 128>}, {pipeline_mode = #tpu.pipeline_mode<synchronous>, transform_indices = @transform_3, window_bounds = array<i64: 1, 128>}, {pipeline_mode = #tpu.pipeline_mode<synchronous>, transform_indices = @transform_4, window_bounds = array<i64: 98, 128>}]} {
    %c0 = arith.constant 0 : index
    %c0_0 = arith.constant 0 : index
    %0 = vector.load %arg3[%c0, %c0_0] : memref<1x128xf32, #tpu.memory_space<vmem>>, vector<1x128xf32>
    %c0_1 = arith.constant 0 : index
    %c0_2 = arith.constant 0 : index
    %1 = vector.load %arg4[%c0_1, %c0_2] : memref<1x128xf32, #tpu.memory_space<vmem>>, vector<1x128xf32>
    %c0_3 = arith.constant 0 : index
    %c0_4 = arith.constant 0 : index
    %2 = vector.load %arg2[%c0_3, %c0_4] : memref<128x128xf32, #tpu.memory_space<vmem>>, vector<128x128xf32>
    %c0_5 = arith.constant 0 : index
    %c0_6 = arith.constant 0 : index
    %c0_7 = arith.constant 0 : index
    %3 = vector.load %arg1[%c0_5, %c0_6, %c0_7] : memref<4x98x128xf32, #tpu.memory_space<vmem>>, vector<1x98x128xf32>
    %4 = vector.shape_cast %3 : vector<1x98x128xf32> to vector<98x128xf32>
    %cst = arith.constant dense<0.000000e+00> : vector<98x128xf32>
    %5 = tpu.matmul %4, %2, %cst {dimension_numbers = #tpu.dot_dimension_numbers<[1], [0], [0], [1], [0, 0, 1, 1], [], []>} : vector<98x128xf32>, vector<128x128xf32>, vector<98x128xf32> -> vector<98x128xf32>
    %6 = vector.broadcast %0 : vector<1x128xf32> to vector<98x128xf32>
    %7 = arith.mulf %5, %6 : vector<98x128xf32>
    %8 = vector.broadcast %1 : vector<1x128xf32> to vector<98x128xf32>
    %9 = arith.addf %7, %8 : vector<98x128xf32>
    %10 = math.tanh %9 : vector<98x128xf32>
    %c1 = arith.constant 1 : index
    %c0_8 = arith.constant 0 : index
    %c0_9 = arith.constant 0 : index
    %11 = vector.load %arg1[%c1, %c0_8, %c0_9] : memref<4x98x128xf32, #tpu.memory_space<vmem>>, vector<1x98x128xf32>
    %12 = vector.shape_cast %11 : vector<1x98x128xf32> to vector<98x128xf32>
    %cst_10 = arith.constant dense<0.000000e+00> : vector<98x128xf32>
    %13 = tpu.matmul %12, %2, %cst_10 {dimension_numbers = #tpu.dot_dimension_numbers<[1], [0], [0], [1], [0, 0, 1, 1], [], []>} : vector<98x128xf32>, vector<128x128xf32>, vector<98x128xf32> -> vector<98x128xf32>
    %14 = vector.broadcast %0 : vector<1x128xf32> to vector<98x128xf32>
    %15 = arith.mulf %13, %14 : vector<98x128xf32>
    %16 = vector.broadcast %1 : vector<1x128xf32> to vector<98x128xf32>
    %17 = arith.addf %15, %16 : vector<98x128xf32>
    %18 = math.tanh %17 : vector<98x128xf32>
    %19 = arith.maximumf %10, %18 : vector<98x128xf32>
    %c2 = arith.constant 2 : index
    %c0_11 = arith.constant 0 : index
    %c0_12 = arith.constant 0 : index
    %20 = vector.load %arg1[%c2, %c0_11, %c0_12] : memref<4x98x128xf32, #tpu.memory_space<vmem>>, vector<1x98x128xf32>
    %21 = vector.shape_cast %20 : vector<1x98x128xf32> to vector<98x128xf32>
    %cst_13 = arith.constant dense<0.000000e+00> : vector<98x128xf32>
    %22 = tpu.matmul %21, %2, %cst_13 {dimension_numbers = #tpu.dot_dimension_numbers<[1], [0], [0], [1], [0, 0, 1, 1], [], []>} : vector<98x128xf32>, vector<128x128xf32>, vector<98x128xf32> -> vector<98x128xf32>
    %23 = vector.broadcast %0 : vector<1x128xf32> to vector<98x128xf32>
    %24 = arith.mulf %22, %23 : vector<98x128xf32>
    %25 = vector.broadcast %1 : vector<1x128xf32> to vector<98x128xf32>
    %26 = arith.addf %24, %25 : vector<98x128xf32>
    %27 = math.tanh %26 : vector<98x128xf32>
    %28 = arith.maximumf %19, %27 : vector<98x128xf32>
    %c3 = arith.constant 3 : index
    %c0_14 = arith.constant 0 : index
    %c0_15 = arith.constant 0 : index
    %29 = vector.load %arg1[%c3, %c0_14, %c0_15] : memref<4x98x128xf32, #tpu.memory_space<vmem>>, vector<1x98x128xf32>
    %30 = vector.shape_cast %29 : vector<1x98x128xf32> to vector<98x128xf32>
    %cst_16 = arith.constant dense<0.000000e+00> : vector<98x128xf32>
    %31 = tpu.matmul %30, %2, %cst_16 {dimension_numbers = #tpu.dot_dimension_numbers<[1], [0], [0], [1], [0, 0, 1, 1], [], []>} : vector<98x128xf32>, vector<128x128xf32>, vector<98x128xf32> -> vector<98x128xf32>
    %32 = vector.broadcast %0 : vector<1x128xf32> to vector<98x128xf32>
    %33 = arith.mulf %31, %32 : vector<98x128xf32>
    %34 = vector.broadcast %1 : vector<1x128xf32> to vector<98x128xf32>
    %35 = arith.addf %33, %34 : vector<98x128xf32>
    %36 = math.tanh %35 : vector<98x128xf32>
    %37 = arith.maximumf %28, %36 : vector<98x128xf32>
    %c0_17 = arith.constant 0 : index
    %c0_18 = arith.constant 0 : index
    %38 = vector.load %arg5[%c0_17, %c0_18] : memref<98x128xf32, #tpu.memory_space<vmem>>, vector<98x128xf32>
    tpu.vector_store %arg5[%c0_17, %c0_18], %37 {strides = array<i32>} : memref<98x128xf32, #tpu.memory_space<vmem>>, vector<98x128xf32>,
    return
  }
  func.func @transform_0(%arg0: i32) -> (i32, i32, i32) {
    %c0_i32 = arith.constant 0 : i32
    %c0_i32_0 = arith.constant 0 : i32
    %c0_i32_1 = arith.constant 0 : i32
    %c0_i32_2 = arith.constant 0 : i32
    return %c0_i32, %c0_i32_0, %c0_i32_1 : i32, i32, i32
  }
  func.func @transform_1(%arg0: i32) -> (i32, i32) {
    %c0_i32 = arith.constant 0 : i32
    %c0_i32_0 = arith.constant 0 : i32
    %c0_i32_1 = arith.constant 0 : i32
    return %c0_i32, %c0_i32_0 : i32, i32
  }
  func.func @transform_2(%arg0: i32) -> (i32, i32) {
    %c0_i32 = arith.constant 0 : i32
    %c0_i32_0 = arith.constant 0 : i32
    %c0_i32_1 = arith.constant 0 : i32
    return %c0_i32, %c0_i32_0 : i32, i32
  }
  func.func @transform_3(%arg0: i32) -> (i32, i32) {
    %c0_i32 = arith.constant 0 : i32
    %c0_i32_0 = arith.constant 0 : i32
    %c0_i32_1 = arith.constant 0 : i32
    return %c0_i32, %c0_i32_0 : i32, i32
  }
  func.func @transform_4(%arg0: i32) -> (i32, i32) {
    %c0_i32 = arith.constant 0 : i32
    %c0_i32_0 = arith.constant 0 : i32
    %c0_i32_1 = arith.constant 0 : i32
    return %c0_i32, %c0_i32_0 : i32, i32
  }
}

module attributes {stable_mosaic.version = 11 : i64} {
  func.func @_conv2_pool_conv3_kernel(%arg0: i32, %arg1: memref<4x2x2048xf32, #tpu.memory_space<vmem>>, %arg2: memref<2048x256xf32, #tpu.memory_space<vmem>>, %arg3: memref<1x256xf32, #tpu.memory_space<vmem>>, %arg4: memref<1x256xf32, #tpu.memory_space<vmem>>, %arg5: memref<256x512xf32, #tpu.memory_space<vmem>>, %arg6: memref<1x512xf32, #tpu.memory_space<vmem>>, %arg7: memref<1x512xf32, #tpu.memory_space<vmem>>, %arg8: memref<2x512xf32, #tpu.memory_space<vmem>>) attributes {dimension_semantics = [#tpu.dimension_semantics<arbitrary>], iteration_bounds = array<i64: 1>, scalar_prefetch = 0 : i64, scratch_operands = 0 : i64, tpu.core_type = #tpu.core_type<tc>, window_params = [{pipeline_mode = #tpu.pipeline_mode<synchronous>, transform_indices = @transform_0, window_bounds = array<i64: 4, 2, 2048>}, {pipeline_mode = #tpu.pipeline_mode<synchronous>, transform_indices = @transform_1, window_bounds = array<i64: 2048, 256>}, {pipeline_mode = #tpu.pipeline_mode<synchronous>, transform_indices = @transform_2, window_bounds = array<i64: 1, 256>}, {pipeline_mode = #tpu.pipeline_mode<synchronous>, transform_indices = @transform_3, window_bounds = array<i64: 1, 256>}, {pipeline_mode = #tpu.pipeline_mode<synchronous>, transform_indices = @transform_4, window_bounds = array<i64: 256, 512>}, {pipeline_mode = #tpu.pipeline_mode<synchronous>, transform_indices = @transform_5, window_bounds = array<i64: 1, 512>}, {pipeline_mode = #tpu.pipeline_mode<synchronous>, transform_indices = @transform_6, window_bounds = array<i64: 1, 512>}, {pipeline_mode = #tpu.pipeline_mode<synchronous>, transform_indices = @transform_7, window_bounds = array<i64: 2, 512>}]} {
    %c0 = arith.constant 0 : index
    %c0_0 = arith.constant 0 : index
    %0 = vector.load %arg3[%c0, %c0_0] : memref<1x256xf32, #tpu.memory_space<vmem>>, vector<1x256xf32>
    %c0_1 = arith.constant 0 : index
    %c0_2 = arith.constant 0 : index
    %1 = vector.load %arg4[%c0_1, %c0_2] : memref<1x256xf32, #tpu.memory_space<vmem>>, vector<1x256xf32>
    %c0_3 = arith.constant 0 : index
    %c0_4 = arith.constant 0 : index
    %2 = vector.load %arg2[%c0_3, %c0_4] : memref<2048x256xf32, #tpu.memory_space<vmem>>, vector<2048x256xf32>
    %c0_5 = arith.constant 0 : index
    %c0_6 = arith.constant 0 : index
    %c0_7 = arith.constant 0 : index
    %3 = vector.load %arg1[%c0_5, %c0_6, %c0_7] : memref<4x2x2048xf32, #tpu.memory_space<vmem>>, vector<1x2x2048xf32>
    %4 = vector.shape_cast %3 : vector<1x2x2048xf32> to vector<2x2048xf32>
    %cst = arith.constant dense<0.000000e+00> : vector<2x256xf32>
    %5 = tpu.matmul %4, %2, %cst {dimension_numbers = #tpu.dot_dimension_numbers<[1], [0], [0], [1], [0, 0, 1, 1], [], []>} : vector<2x2048xf32>, vector<2048x256xf32>, vector<2x256xf32> -> vector<2x256xf32>
    %6 = vector.broadcast %0 : vector<1x256xf32> to vector<2x256xf32>
    %7 = arith.mulf %5, %6 : vector<2x256xf32>
    %8 = vector.broadcast %1 : vector<1x256xf32> to vector<2x256xf32>
    %9 = arith.addf %7, %8 : vector<2x256xf32>
    %10 = math.tanh %9 : vector<2x256xf32>
    %c1 = arith.constant 1 : index
    %c0_8 = arith.constant 0 : index
    %c0_9 = arith.constant 0 : index
    %11 = vector.load %arg1[%c1, %c0_8, %c0_9] : memref<4x2x2048xf32, #tpu.memory_space<vmem>>, vector<1x2x2048xf32>
    %12 = vector.shape_cast %11 : vector<1x2x2048xf32> to vector<2x2048xf32>
    %cst_10 = arith.constant dense<0.000000e+00> : vector<2x256xf32>
    %13 = tpu.matmul %12, %2, %cst_10 {dimension_numbers = #tpu.dot_dimension_numbers<[1], [0], [0], [1], [0, 0, 1, 1], [], []>} : vector<2x2048xf32>, vector<2048x256xf32>, vector<2x256xf32> -> vector<2x256xf32>
    %14 = vector.broadcast %0 : vector<1x256xf32> to vector<2x256xf32>
    %15 = arith.mulf %13, %14 : vector<2x256xf32>
    %16 = vector.broadcast %1 : vector<1x256xf32> to vector<2x256xf32>
    %17 = arith.addf %15, %16 : vector<2x256xf32>
    %18 = math.tanh %17 : vector<2x256xf32>
    %19 = arith.maximumf %10, %18 : vector<2x256xf32>
    %c2 = arith.constant 2 : index
    %c0_11 = arith.constant 0 : index
    %c0_12 = arith.constant 0 : index
    %20 = vector.load %arg1[%c2, %c0_11, %c0_12] : memref<4x2x2048xf32, #tpu.memory_space<vmem>>, vector<1x2x2048xf32>
    %21 = vector.shape_cast %20 : vector<1x2x2048xf32> to vector<2x2048xf32>
    %cst_13 = arith.constant dense<0.000000e+00> : vector<2x256xf32>
    %22 = tpu.matmul %21, %2, %cst_13 {dimension_numbers = #tpu.dot_dimension_numbers<[1], [0], [0], [1], [0, 0, 1, 1], [], []>} : vector<2x2048xf32>, vector<2048x256xf32>, vector<2x256xf32> -> vector<2x256xf32>
    %23 = vector.broadcast %0 : vector<1x256xf32> to vector<2x256xf32>
    %24 = arith.mulf %22, %23 : vector<2x256xf32>
    %25 = vector.broadcast %1 : vector<1x256xf32> to vector<2x256xf32>
    %26 = arith.addf %24, %25 : vector<2x256xf32>
    %27 = math.tanh %26 : vector<2x256xf32>
    %28 = arith.maximumf %19, %27 : vector<2x256xf32>
    %c3 = arith.constant 3 : index
    %c0_14 = arith.constant 0 : index
    %c0_15 = arith.constant 0 : index
    %29 = vector.load %arg1[%c3, %c0_14, %c0_15] : memref<4x2x2048xf32, #tpu.memory_space<vmem>>, vector<1x2x2048xf32>
    %30 = vector.shape_cast %29 : vector<1x2x2048xf32> to vector<2x2048xf32>
    %cst_16 = arith.constant dense<0.000000e+00> : vector<2x256xf32>
    %31 = tpu.matmul %30, %2, %cst_16 {dimension_numbers = #tpu.dot_dimension_numbers<[1], [0], [0], [1], [0, 0, 1, 1], [], []>} : vector<2x2048xf32>, vector<2048x256xf32>, vector<2x256xf32> -> vector<2x256xf32>
    %32 = vector.broadcast %0 : vector<1x256xf32> to vector<2x256xf32>
    %33 = arith.mulf %31, %32 : vector<2x256xf32>
    %34 = vector.broadcast %1 : vector<1x256xf32> to vector<2x256xf32>
    %35 = arith.addf %33, %34 : vector<2x256xf32>
    %36 = math.tanh %35 : vector<2x256xf32>
    %37 = arith.maximumf %28, %36 : vector<2x256xf32>
    %c0_17 = arith.constant 0 : index
    %c0_18 = arith.constant 0 : index
    %38 = vector.load %arg5[%c0_17, %c0_18] : memref<256x512xf32, #tpu.memory_space<vmem>>, vector<256x512xf32>
    %cst_19 = arith.constant dense<0.000000e+00> : vector<2x512xf32>
    %39 = tpu.matmul %37, %38, %cst_19 {dimension_numbers = #tpu.dot_dimension_numbers<[1], [0], [0], [1], [0, 0, 1, 1], [], []>} : vector<2x256xf32>, vector<256x512xf32>, vector<2x512xf32> -> vector<2x512xf32>
    %c0_20 = arith.constant 0 : index
    %c0_21 = arith.constant 0 : index
    %40 = vector.load %arg6[%c0_20, %c0_21] : memref<1x512xf32, #tpu.memory_space<vmem>>, vector<1x512xf32>
    %41 = vector.broadcast %40 : vector<1x512xf32> to vector<2x512xf32>
    %42 = arith.mulf %39, %41 : vector<2x512xf32>
    %c0_22 = arith.constant 0 : index
    %c0_23 = arith.constant 0 : index
    %43 = vector.load %arg7[%c0_22, %c0_23] : memref<1x512xf32, #tpu.memory_space<vmem>>, vector<1x512xf32>
    %44 = vector.broadcast %43 : vector<1x512xf32> to vector<2x512xf32>
    %45 = arith.addf %42, %44 : vector<2x512xf32>
    %46 = math.tanh %45 : vector<2x512xf32>
    %c0_24 = arith.constant 0 : index
    %c0_25 = arith.constant 0 : index
    %47 = vector.load %arg8[%c0_24, %c0_25] : memref<2x512xf32, #tpu.memory_space<vmem>>, vector<2x512xf32>
    tpu.vector_store %arg8[%c0_24, %c0_25], %46 {strides = array<i32>} : memref<2x512xf32, #tpu.memory_space<vmem>>, vector<2x512xf32>,
    return
  }
  func.func @transform_0(%arg0: i32) -> (i32, i32, i32) {
    %c0_i32 = arith.constant 0 : i32
    %c0_i32_0 = arith.constant 0 : i32
    %c0_i32_1 = arith.constant 0 : i32
    %c0_i32_2 = arith.constant 0 : i32
    return %c0_i32, %c0_i32_0, %c0_i32_1 : i32, i32, i32
  }
  func.func @transform_1(%arg0: i32) -> (i32, i32) {
    %c0_i32 = arith.constant 0 : i32
    %c0_i32_0 = arith.constant 0 : i32
    %c0_i32_1 = arith.constant 0 : i32
    return %c0_i32, %c0_i32_0 : i32, i32
  }
  func.func @transform_2(%arg0: i32) -> (i32, i32) {
    %c0_i32 = arith.constant 0 : i32
    %c0_i32_0 = arith.constant 0 : i32
    %c0_i32_1 = arith.constant 0 : i32
    return %c0_i32, %c0_i32_0 : i32, i32
  }
  func.func @transform_3(%arg0: i32) -> (i32, i32) {
    %c0_i32 = arith.constant 0 : i32
    %c0_i32_0 = arith.constant 0 : i32
    %c0_i32_1 = arith.constant 0 : i32
    return %c0_i32, %c0_i32_0 : i32, i32
  }
  func.func @transform_4(%arg0: i32) -> (i32, i32) {
    %c0_i32 = arith.constant 0 : i32
    %c0_i32_0 = arith.constant 0 : i32
    %c0_i32_1 = arith.constant 0 : i32
    return %c0_i32, %c0_i32_0 : i32, i32
  }
  func.func @transform_5(%arg0: i32) -> (i32, i32) {
    %c0_i32 = arith.constant 0 : i32
    %c0_i32_0 = arith.constant 0 : i32
    %c0_i32_1 = arith.constant 0 : i32
    return %c0_i32, %c0_i32_0 : i32, i32
  }
  func.func @transform_6(%arg0: i32) -> (i32, i32) {
    %c0_i32 = arith.constant 0 : i32
    %c0_i32_0 = arith.constant 0 : i32
    %c0_i32_1 = arith.constant 0 : i32
    return %c0_i32, %c0_i32_0 : i32, i32
  }
  func.func @transform_7(%arg0: i32) -> (i32, i32) {
    %c0_i32 = arith.constant 0 : i32
    %c0_i32_0 = arith.constant 0 : i32
    %c0_i32_1 = arith.constant 0 : i32
    return %c0_i32, %c0_i32_0 : i32, i32
  }
}

</mosaic_0001>

<llo_original>
// kernel: model_forward.2
$region0: #{model_forward.2}
  #allocation0 [shape = 'u32[]', space=smem, size = 0x4, offset = 0x4, fixed_abs, tag = 'smem constant byte address 0x4 - core index']
  #allocation1 [shape = 'u32[144,128]{1,0:T(1,128)}', space=vmem, size = 0x12000, scoped, tag = 'internal scratch']
  %s0 = inlined_call_operand.vmem [shape: f32[4,98,128], index: 0, kind: input, shape index: {}]
  %s1 = inlined_call_operand.vmem [shape: f32[128,128], index: 1, kind: input, shape index: {}]
  %s2 = inlined_call_operand.vmem [shape: f32[1,128], index: 2, kind: input, shape index: {}]
  %s3 = inlined_call_operand.vmem [shape: f32[1,128], index: 3, kind: input, shape index: {}]
  %s4 = inlined_call_operand.vmem [shape: f32[98,128], index: 4, kind: output, shape index: {}]
  %s5 = sld [smem:[#allocation0]]
  $region26: #{model_forward.2} parent=0
    _
  %s7 = ssub.s32 1, %s5
  %s8 = scalar_select 0, %s7, %s5
  // Predicated region
  $region2: #{model_forward.2} parent=0 // pred_check
    _
  $region3: #{model_forward.2} parent=0 // pred_check_branch
    %10 = sbr.rel (0) target = $region5
  $region4: #{model_forward.2} parent=0 // pred_region
    _
  $region5: #{model_forward.2} parent=0 // pred_fallthru
    _
  // Predicated region
  $region6: #{model_forward.2} parent=0 // pred_check
    _
  $region7: #{model_forward.2} parent=0 // pred_check_branch
    %12 = sbr.rel (0) target = $region9
  $region8: #{model_forward.2} parent=0 // pred_region
    _
  $region9: #{model_forward.2} parent=0 // pred_fallthru
    _
  // Predicated region
  $region10: #{model_forward.2} parent=0 // pred_check
    _
  $region11: #{model_forward.2} parent=0 // pred_check_branch
    %14 = sbr.rel (0) target = $region13
  $region12: #{model_forward.2} parent=0 // pred_region
    _
  $region13: #{model_forward.2} parent=0 // pred_fallthru
    _
  // Predicated region
  $region14: #{model_forward.2} parent=0 // pred_check
    _
  $region15: #{model_forward.2} parent=0 // pred_check_branch
    %16 = sbr.rel (0) target = $region17
  $region16: #{model_forward.2} parent=0 // pred_region
    _
  $region17: #{model_forward.2} parent=0 // pred_fallthru
    _
  %v17 = vld [vmem:[%s2] sm:$0x1]
  %v18 = vld [vmem:[%s3] sm:$0x1]
  %v19 = vld [vmem:[%s1] sm:$0xff]
  %v20 = vld [vmem:[%s1 + $0x8] sm:$0xff]
  %v21 = vld [vmem:[%s1 + $0x10] sm:$0xff]
  %v22 = vld [vmem:[%s1 + $0x18] sm:$0xff]
  %v23 = vld [vmem:[%s1 + $0x20] sm:$0xff]
  %v24 = vld [vmem:[%s1 + $0x28] sm:$0xff]
  %v25 = vld [vmem:[%s1 + $0x30] sm:$0xff]
  %v26 = vld [vmem:[%s1 + $0x38] sm:$0xff]
  %v27 = vld [vmem:[%s1 + $0x40] sm:$0xff]
  %v28 = vld [vmem:[%s1 + $0x48] sm:$0xff]
  %v29 = vld [vmem:[%s1 + $0x50] sm:$0xff]
  %v30 = vld [vmem:[%s1 + $0x58] sm:$0xff]
  %v31 = vld [vmem:[%s1 + $0x60] sm:$0xff]
  %v32 = vld [vmem:[%s1 + $0x68] sm:$0xff]
  %v33 = vld [vmem:[%s1 + $0x70] sm:$0xff]
  %v34 = vld [vmem:[%s1 + $0x78] sm:$0xff]
  %v35 = vld [vmem:[%s0] sm:$0xff]
  %v36 = vld [vmem:[%s0 + $0x8] sm:$0xff]
  %v37 = vld [vmem:[%s0 + $0x10] sm:$0xff]
  %v38 = vld [vmem:[%s0 + $0x18] sm:$0xff]
  %v39 = vld [vmem:[%s0 + $0x20] sm:$0xff]
  %v40 = vld [vmem:[%s0 + $0x28] sm:$0xff]
  %v41 = vld [vmem:[%s0 + $0x30] sm:$0xff]
  %v42 = vld [vmem:[%s0 + $0x38] sm:$0xff]
  %v43 = vld [vmem:[%s0 + $0x40] sm:$0xff]
  %v44 = vld [vmem:[%s0 + $0x48] sm:$0xff]
  %v45 = vld [vmem:[%s0 + $0x50] sm:$0xff]
  %v46 = vld [vmem:[%s0 + $0x58] sm:$0xff]
  %v47 = vld [vmem:[%s0 + $0x60] sm:$0x3]
  %48 = vmatprep.subr.mxu0 0.0
  %49 = vmatpush1.msra.mxu0 %v34
  %50 = vmatprep.subr.mxu0 0.0
  %51 = vmatpush1.msra.mxu0 %v33
  %52 = vmatprep.subr.mxu0 0.0
  %53 = vmatpush1.msra.mxu0 %v32
  %54 = vmatprep.subr.mxu0 0.0
  %55 = vmatpush1.msra.mxu0 %v31
  %56 = vmatprep.subr.mxu0 0.0
  %57 = vmatpush1.msra.mxu0 %v30
  %58 = vmatprep.subr.mxu0 0.0
  %59 = vmatpush1.msra.mxu0 %v29
  %60 = vmatprep.subr.mxu0 0.0
  %61 = vmatpush1.msra.mxu0 %v28
  %62 = vmatprep.subr.mxu0 0.0
  %63 = vmatpush1.msra.mxu0 %v27
  %64 = vmatprep.subr.mxu0 0.0
  %65 = vmatpush1.msra.mxu0 %v26
  %66 = vmatprep.subr.mxu0 0.0
  %67 = vmatpush1.msra.mxu0 %v25
  %68 = vmatprep.subr.mxu0 0.0
  %69 = vmatpush1.msra.mxu0 %v24
  %70 = vmatprep.subr.mxu0 0.0
  %71 = vmatpush1.msra.mxu0 %v23
  %72 = vmatprep.subr.mxu0 0.0
  %73 = vmatpush1.msra.mxu0 %v22
  %74 = vmatprep.subr.mxu0 0.0
  %75 = vmatpush1.msra.mxu0 %v21
  %76 = vmatprep.subr.mxu0 0.0
  %77 = vmatpush1.msra.mxu0 %v20
  %78 = vmatprep.subr.mxu0 0.0
  %79 = vmatpush1.msra.mxu0 %v19
  %80 = vmatprep.subr.mxu0 0.0
  %81 = vmatpush2.msra.mxu0 0.0
  %82 = vmatprep.subr.mxu0 0.0
  %83 = vmatpush2.msra.mxu0 0.0
  %84 = vmatprep.subr.mxu0 0.0
  %85 = vmatpush2.msra.mxu0 0.0
  %86 = vmatprep.subr.mxu0 0.0
  %87 = vmatpush2.msra.mxu0 0.0
  %88 = vmatprep.subr.mxu0 0.0
  %89 = vmatpush2.msra.mxu0 0.0
  %90 = vmatprep.subr.mxu0 0.0
  %91 = vmatpush2.msra.mxu0 0.0
  %92 = vmatprep.subr.mxu0 0.0
  %93 = vmatpush2.msra.mxu0 0.0
  %94 = vmatprep.subr.mxu0 0.0
  %95 = vmatpush2.msra.mxu0 0.0
  %96 = vmatprep.subr.mxu0 0.0
  %97 = vmatpush2.msra.mxu0 0.0
  %98 = vmatprep.subr.mxu0 0.0
  %99 = vmatpush2.msra.mxu0 0.0
  %100 = vmatprep.subr.mxu0 0.0
  %101 = vmatpush2.msra.mxu0 0.0
  %102 = vmatprep.subr.mxu0 0.0
  %103 = vmatpush2.msra.mxu0 0.0
  %104 = vmatprep.subr.mxu0 0.0
  %105 = vmatpush2.msra.mxu0 0.0
  %106 = vmatprep.subr.mxu0 0.0
  %107 = vmatpush2.msra.mxu0 0.0
  %108 = vmatprep.subr.mxu0 0.0
  %109 = vmatpush2.msra.mxu0 0.0
  %110 = vmatprep.subr.mxu0 0.0
  %111 = vmatpush2.msra.mxu0 0.0
  %112 = vmatprep.mubr.f32.mxu0 0.0
  %113 = vmatmul.mubr.f32.gmra.mxu0 %v35
  %v114 = vpop.f32.mrf.mxu0
  %v115 = vadd.f32 0.0, %v114
  %v116 = vpop.f32.mrf.mxu0
  %117 = vmatprep.mubr.f32.mxu0 0.0
  %118 = vmatmul.mubr.f32.gmra.mxu0 %v36
  %v119 = vpop.f32.mrf.mxu0
  %v120 = vadd.f32 0.0, %v119
  %v121 = vpop.f32.mrf.mxu0
  %122 = vmatprep.mubr.f32.mxu0 0.0
  %123 = vmatmul.mubr.f32.gmra.mxu0 %v37
  %v124 = vpop.f32.mrf.mxu0
  %v125 = vadd.f32 0.0, %v124
  %v126 = vpop.f32.mrf.mxu0
  %127 = vmatprep.mubr.f32.mxu0 0.0
  %128 = vmatmul.mubr.f32.gmra.mxu0 %v38
  %v129 = vpop.f32.mrf.mxu0
  %v130 = vadd.f32 0.0, %v129
  %v131 = vpop.f32.mrf.mxu0
  %132 = vmatprep.mubr.f32.mxu0 0.0
  %133 = vmatmul.mubr.f32.gmra.mxu0 %v39
  %v134 = vpop.f32.mrf.mxu0
  %v135 = vadd.f32 0.0, %v134
  %v136 = vpop.f32.mrf.mxu0
  %137 = vmatprep.mubr.f32.mxu0 0.0
  %138 = vmatmul.mubr.f32.gmra.mxu0 %v40
  %v139 = vpop.f32.mrf.mxu0
  %v140 = vadd.f32 0.0, %v139
  %v141 = vpop.f32.mrf.mxu0
  %142 = vmatprep.mubr.f32.mxu0 0.0
  %143 = vmatmul.mubr.f32.gmra.mxu0 %v41
  %v144 = vpop.f32.mrf.mxu0
  %v145 = vadd.f32 0.0, %v144
  %v146 = vpop.f32.mrf.mxu0
  %147 = vmatprep.mubr.f32.mxu0 0.0
  %148 = vmatmul.mubr.f32.gmra.mxu0 %v42
  %v149 = vpop.f32.mrf.mxu0
  %v150 = vadd.f32 0.0, %v149
  %v151 = vpop.f32.mrf.mxu0
  %152 = vmatprep.mubr.f32.mxu0 0.0
  %153 = vmatmul.mubr.f32.gmra.mxu0 %v43
  %v154 = vpop.f32.mrf.mxu0
  %v155 = vadd.f32 0.0, %v154
  %v156 = vpop.f32.mrf.mxu0
  %157 = vmatprep.mubr.f32.mxu0 0.0
  %158 = vmatmul.mubr.f32.gmra.mxu0 %v44
  %v159 = vpop.f32.mrf.mxu0
  %v160 = vadd.f32 0.0, %v159
  %v161 = vpop.f32.mrf.mxu0
  %162 = vmatprep.mubr.f32.mxu0 0.0
  %163 = vmatmul.mubr.f32.gmra.mxu0 %v45
  %v164 = vpop.f32.mrf.mxu0
  %v165 = vadd.f32 0.0, %v164
  %v166 = vpop.f32.mrf.mxu0
  %167 = vmatprep.mubr.f32.mxu0 0.0
  %168 = vmatmul.mubr.f32.gmra.mxu0 %v46
  %v169 = vpop.f32.mrf.mxu0
  %v170 = vadd.f32 0.0, %v169
  %v171 = vpop.f32.mrf.mxu0
  %172 = vmatprep.mubr.f32.mxu0 0.0
  %173 = vmatmul.mubr.f32.gmra.mxu0 %v47
  %v174 = vpop.f32.mrf.mxu0
  %v175 = vadd.f32 0.0, %v174
  %v176 = vpop.f32.mrf.mxu0
  %177 = vdwg.mxu0
  %v179 = vlaneseq
  %v180 = vshrl.u32 %v179, 7
  %v181 = vsub.s32 0, %v180
  %v182 = vrot.slane %v17, %v181
  %v184 = vmul.f32 %v115, %v182
  %v185 = vmul.f32 %v120, %v182
  %v186 = vmul.f32 %v125, %v182
  %v187 = vmul.f32 %v130, %v182
  %v188 = vmul.f32 %v135, %v182
  %v189 = vmul.f32 %v140, %v182
  %v190 = vmul.f32 %v145, %v182
  %v191 = vmul.f32 %v150, %v182
  %v192 = vmul.f32 %v155, %v182
  %v193 = vmul.f32 %v160, %v182
  %v194 = vmul.f32 %v165, %v182
  %v195 = vmul.f32 %v170, %v182
  %v196 = vmul.f32 %v175, %v182
  %v198 = vlaneseq
  %v199 = vshrl.u32 %v198, 7
  %v200 = vsub.s32 0, %v199
  %v201 = vrot.slane %v18, %v200
  %v203 = vadd.f32 %v184, %v201
  %v204 = vadd.f32 %v185, %v201
  %v205 = vadd.f32 %v186, %v201
  %v206 = vadd.f32 %v187, %v201
  %v207 = vadd.f32 %v188, %v201
  %v208 = vadd.f32 %v189, %v201
  %v209 = vadd.f32 %v190, %v201
  %v210 = vadd.f32 %v191, %v201
  %v211 = vadd.f32 %v192, %v201
  %v212 = vadd.f32 %v193, %v201
  %v213 = vadd.f32 %v194, %v201
  %v214 = vadd.f32 %v195, %v201
  %v215 = vadd.f32 %v196, %v201
  %v216 = vtanh.pop %v203
  %v217 = vtanh.pop %v204
  %v218 = vtanh.pop %v205
  %v219 = vtanh.pop %v206
  %v220 = vtanh.pop %v207
  %v221 = vtanh.pop %v208
  %v222 = vtanh.pop %v209
  %v223 = vtanh.pop %v210
  %v224 = vtanh.pop %v211
  %v225 = vtanh.pop %v212
  %v226 = vtanh.pop %v213
  %v227 = vtanh.pop %v214
  %v228 = vtanh.pop %v215
  %s229 = scalar_lea.vmem %s0, 104
  %v230 = vld [vmem:[%s229] sm:$0xff]
  %v231 = vld [vmem:[%s229 + $0x8] sm:$0xff]
  %v232 = vld [vmem:[%s229 + $0x10] sm:$0xff]
  %v233 = vld [vmem:[%s229 + $0x18] sm:$0xff]
  %v234 = vld [vmem:[%s229 + $0x20] sm:$0xff]
  %v235 = vld [vmem:[%s229 + $0x28] sm:$0xff]
  %v236 = vld [vmem:[%s229 + $0x30] sm:$0xff]
  %v237 = vld [vmem:[%s229 + $0x38] sm:$0xff]
  %v238 = vld [vmem:[%s229 + $0x40] sm:$0xff]
  %v239 = vld [vmem:[%s229 + $0x48] sm:$0xff]
  %v240 = vld [vmem:[%s229 + $0x50] sm:$0xff]
  %v241 = vld [vmem:[%s229 + $0x58] sm:$0xff]
  %v242 = vld [vmem:[%s229 + $0x60] sm:$0x3]
  %243 = vmatprep.subr.mxu0 0.0
  %244 = vmatpush1.msra.mxu0 %v34
  %245 = vmatprep.subr.mxu0 0.0
  %246 = vmatpush1.msra.mxu0 %v33
  %247 = vmatprep.subr.mxu0 0.0
  %248 = vmatpush1.msra.mxu0 %v32
  %249 = vmatprep.subr.mxu0 0.0
  %250 = vmatpush1.msra.mxu0 %v31
  %251 = vmatprep.subr.mxu0 0.0
  %252 = vmatpush1.msra.mxu0 %v30
  %253 = vmatprep.subr.mxu0 0.0
  %254 = vmatpush1.msra.mxu0 %v29
  %255 = vmatprep.subr.mxu0 0.0
  %256 = vmatpush1.msra.mxu0 %v28
  %257 = vmatprep.subr.mxu0 0.0
  %258 = vmatpush1.msra.mxu0 %v27
  %259 = vmatprep.subr.mxu0 0.0
  %260 = vmatpush1.msra.mxu0 %v26
  %261 = vmatprep.subr.mxu0 0.0
  %262 = vmatpush1.msra.mxu0 %v25
  %263 = vmatprep.subr.mxu0 0.0
  %264 = vmatpush1.msra.mxu0 %v24
  %265 = vmatprep.subr.mxu0 0.0
  %266 = vmatpush1.msra.mxu0 %v23
  %267 = vmatprep.subr.mxu0 0.0
  %268 = vmatpush1.msra.mxu0 %v22
  %269 = vmatprep.subr.mxu0 0.0
  %270 = vmatpush1.msra.mxu0 %v21
  %271 = vmatprep.subr.mxu0 0.0
  %272 = vmatpush1.msra.mxu0 %v20
  %273 = vmatprep.subr.mxu0 0.0
  %274 = vmatpush1.msra.mxu0 %v19
  %275 = vmatprep.subr.mxu0 0.0
  %276 = vmatpush2.msra.mxu0 0.0
  %277 = vmatprep.subr.mxu0 0.0
  %278 = vmatpush2.msra.mxu0 0.0
  %279 = vmatprep.subr.mxu0 0.0
  %280 = vmatpush2.msra.mxu0 0.0
  %281 = vmatprep.subr.mxu0 0.0
  %282 = vmatpush2.msra.mxu0 0.0
  %283 = vmatprep.subr.mxu0 0.0
  %284 = vmatpush2.msra.mxu0 0.0
  %285 = vmatprep.subr.mxu0 0.0
  %286 = vmatpush2.msra.mxu0 0.0
  %287 = vmatprep.subr.mxu0 0.0
  %288 = vmatpush2.msra.mxu0 0.0
  %289 = vmatprep.subr.mxu0 0.0
  %290 = vmatpush2.msra.mxu0 0.0
  %291 = vmatprep.subr.mxu0 0.0
  %292 = vmatpush2.msra.mxu0 0.0
  %293 = vmatprep.subr.mxu0 0.0
  %294 = vmatpush2.msra.mxu0 0.0
  %295 = vmatprep.subr.mxu0 0.0
  %296 = vmatpush2.msra.mxu0 0.0
  %297 = vmatprep.subr.mxu0 0.0
  %298 = vmatpush2.msra.mxu0 0.0
  %299 = vmatprep.subr.mxu0 0.0
  %300 = vmatpush2.msra.mxu0 0.0
  %301 = vmatprep.subr.mxu0 0.0
  %302 = vmatpush2.msra.mxu0 0.0
  %303 = vmatprep.subr.mxu0 0.0
  %304 = vmatpush2.msra.mxu0 0.0
  %305 = vmatprep.subr.mxu0 0.0
  %306 = vmatpush2.msra.mxu0 0.0
  %307 = vmatprep.mubr.f32.mxu0 0.0
  %308 = vmatmul.mubr.f32.gmra.mxu0 %v230
  %v309 = vpop.f32.mrf.mxu0
  %v310 = vadd.f32 0.0, %v309
  %v311 = vpop.f32.mrf.mxu0
  %312 = vmatprep.mubr.f32.mxu0 0.0
  %313 = vmatmul.mubr.f32.gmra.mxu0 %v231
  %v314 = vpop.f32.mrf.mxu0
  %v315 = vadd.f32 0.0, %v314
  %v316 = vpop.f32.mrf.mxu0
  %317 = vmatprep.mubr.f32.mxu0 0.0
  %318 = vmatmul.mubr.f32.gmra.mxu0 %v232
  %v319 = vpop.f32.mrf.mxu0
  %v320 = vadd.f32 0.0, %v319
  %v321 = vpop.f32.mrf.mxu0
  %322 = vmatprep.mubr.f32.mxu0 0.0
  %323 = vmatmul.mubr.f32.gmra.mxu0 %v233
  %v324 = vpop.f32.mrf.mxu0
  %v325 = vadd.f32 0.0, %v324
  %v326 = vpop.f32.mrf.mxu0
  %327 = vmatprep.mubr.f32.mxu0 0.0
  %328 = vmatmul.mubr.f32.gmra.mxu0 %v234
  %v329 = vpop.f32.mrf.mxu0
  %v330 = vadd.f32 0.0, %v329
  %v331 = vpop.f32.mrf.mxu0
  %332 = vmatprep.mubr.f32.mxu0 0.0
  %333 = vmatmul.mubr.f32.gmra.mxu0 %v235
  %v334 = vpop.f32.mrf.mxu0
  %v335 = vadd.f32 0.0, %v334
  %v336 = vpop.f32.mrf.mxu0
  %337 = vmatprep.mubr.f32.mxu0 0.0
  %338 = vmatmul.mubr.f32.gmra.mxu0 %v236
  %v339 = vpop.f32.mrf.mxu0
  %v340 = vadd.f32 0.0, %v339
  %v341 = vpop.f32.mrf.mxu0
  %342 = vmatprep.mubr.f32.mxu0 0.0
  %343 = vmatmul.mubr.f32.gmra.mxu0 %v237
  %v344 = vpop.f32.mrf.mxu0
  %v345 = vadd.f32 0.0, %v344
  %v346 = vpop.f32.mrf.mxu0
  %347 = vmatprep.mubr.f32.mxu0 0.0
  %348 = vmatmul.mubr.f32.gmra.mxu0 %v238
  %v349 = vpop.f32.mrf.mxu0
  %v350 = vadd.f32 0.0, %v349
  %v351 = vpop.f32.mrf.mxu0
  %352 = vmatprep.mubr.f32.mxu0 0.0
  %353 = vmatmul.mubr.f32.gmra.mxu0 %v239
  %v354 = vpop.f32.mrf.mxu0
  %v355 = vadd.f32 0.0, %v354
  %v356 = vpop.f32.mrf.mxu0
  %357 = vmatprep.mubr.f32.mxu0 0.0
  %358 = vmatmul.mubr.f32.gmra.mxu0 %v240
  %v359 = vpop.f32.mrf.mxu0
  %v360 = vadd.f32 0.0, %v359
  %v361 = vpop.f32.mrf.mxu0
  %362 = vmatprep.mubr.f32.mxu0 0.0
  %363 = vmatmul.mubr.f32.gmra.mxu0 %v241
  %v364 = vpop.f32.mrf.mxu0
  %v365 = vadd.f32 0.0, %v364
  %v366 = vpop.f32.mrf.mxu0
  %367 = vmatprep.mubr.f32.mxu0 0.0
  %368 = vmatmul.mubr.f32.gmra.mxu0 %v242
  %v369 = vpop.f32.mrf.mxu0
  %v370 = vadd.f32 0.0, %v369
  %v371 = vpop.f32.mrf.mxu0
  %372 = vdwg.mxu0
  %v373 = vmul.f32 %v310, %v182
  %v374 = vmul.f32 %v315, %v182
  %v375 = vmul.f32 %v320, %v182
  %v376 = vmul.f32 %v325, %v182
  %v377 = vmul.f32 %v330, %v182
  %v378 = vmul.f32 %v335, %v182
  %v379 = vmul.f32 %v340, %v182
  %v380 = vmul.f32 %v345, %v182
  %v381 = vmul.f32 %v350, %v182
  %v382 = vmul.f32 %v355, %v182
  %v383 = vmul.f32 %v360, %v182
  %v384 = vmul.f32 %v365, %v182
  %v385 = vmul.f32 %v370, %v182
  %v386 = vadd.f32 %v373, %v201
  %v387 = vadd.f32 %v374, %v201
  %v388 = vadd.f32 %v375, %v201
  %v389 = vadd.f32 %v376, %v201
  %v390 = vadd.f32 %v377, %v201
  %v391 = vadd.f32 %v378, %v201
  %v392 = vadd.f32 %v379, %v201
  %v393 = vadd.f32 %v380, %v201
  %v394 = vadd.f32 %v381, %v201
  %v395 = vadd.f32 %v382, %v201
  %v396 = vadd.f32 %v383, %v201
  %v397 = vadd.f32 %v384, %v201
  %v398 = vadd.f32 %v385, %v201
  %v399 = vtanh.pop %v386
  %v400 = vtanh.pop %v387
  %v401 = vtanh.pop %v388
  %v402 = vtanh.pop %v389
  %v403 = vtanh.pop %v390
  %v404 = vtanh.pop %v391
  %v405 = vtanh.pop %v392
  %v406 = vtanh.pop %v393
  %v407 = vtanh.pop %v394
  %v408 = vtanh.pop %v395
  %v409 = vtanh.pop %v396
  %v410 = vtanh.pop %v397
  %v411 = vtanh.pop %v398
  %v412 = vmax.f32 %v216, %v399
  %v413 = vmax.f32 %v217, %v400
  %v414 = vmax.f32 %v218, %v401
  %v415 = vmax.f32 %v219, %v402
  %v416 = vmax.f32 %v220, %v403
  %v417 = vmax.f32 %v221, %v404
  %v418 = vmax.f32 %v222, %v405
  %v419 = vmax.f32 %v223, %v406
  %v420 = vmax.f32 %v224, %v407
  %v421 = vmax.f32 %v225, %v408
  %v422 = vmax.f32 %v226, %v409
  %v423 = vmax.f32 %v227, %v410
  %v424 = vmax.f32 %v228, %v411
  %s425 = scalar_lea.vmem %s0, 208
  %v426 = vld [vmem:[%s425] sm:$0xff]
  %v427 = vld [vmem:[%s425 + $0x8] sm:$0xff]
  %v428 = vld [vmem:[%s425 + $0x10] sm:$0xff]
  %v429 = vld [vmem:[%s425 + $0x18] sm:$0xff]
  %v430 = vld [vmem:[%s425 + $0x20] sm:$0xff]
  %v431 = vld [vmem:[%s425 + $0x28] sm:$0xff]
  %v432 = vld [vmem:[%s425 + $0x30] sm:$0xff]
  %v433 = vld [vmem:[%s425 + $0x38] sm:$0xff]
  %v434 = vld [vmem:[%s425 + $0x40] sm:$0xff]
  %v435 = vld [vmem:[%s425 + $0x48] sm:$0xff]
  %v436 = vld [vmem:[%s425 + $0x50] sm:$0xff]
  %v437 = vld [vmem:[%s425 + $0x58] sm:$0xff]
  %v438 = vld [vmem:[%s425 + $0x60] sm:$0x3]
  %439 = vmatprep.subr.mxu0 0.0
  %440 = vmatpush1.msra.mxu0 %v34
  %441 = vmatprep.subr.mxu0 0.0
  %442 = vmatpush1.msra.mxu0 %v33
  %443 = vmatprep.subr.mxu0 0.0
  %444 = vmatpush1.msra.mxu0 %v32
  %445 = vmatprep.subr.mxu0 0.0
  %446 = vmatpush1.msra.mxu0 %v31
  %447 = vmatprep.subr.mxu0 0.0
  %448 = vmatpush1.msra.mxu0 %v30
  %449 = vmatprep.subr.mxu0 0.0
  %450 = vmatpush1.msra.mxu0 %v29
  %451 = vmatprep.subr.mxu0 0.0
  %452 = vmatpush1.msra.mxu0 %v28
  %453 = vmatprep.subr.mxu0 0.0
  %454 = vmatpush1.msra.mxu0 %v27
  %455 = vmatprep.subr.mxu0 0.0
  %456 = vmatpush1.msra.mxu0 %v26
  %457 = vmatprep.subr.mxu0 0.0
  %458 = vmatpush1.msra.mxu0 %v25
  %459 = vmatprep.subr.mxu0 0.0
  %460 = vmatpush1.msra.mxu0 %v24
  %461 = vmatprep.subr.mxu0 0.0
  %462 = vmatpush1.msra.mxu0 %v23
  %463 = vmatprep.subr.mxu0 0.0
  %464 = vmatpush1.msra.mxu0 %v22
  %465 = vmatprep.subr.mxu0 0.0
  %466 = vmatpush1.msra.mxu0 %v21
  %467 = vmatprep.subr.mxu0 0.0
  %468 = vmatpush1.msra.mxu0 %v20
  %469 = vmatprep.subr.mxu0 0.0
  %470 = vmatpush1.msra.mxu0 %v19
  %471 = vmatprep.subr.mxu0 0.0
  %472 = vmatpush2.msra.mxu0 0.0
  %473 = vmatprep.subr.mxu0 0.0
  %474 = vmatpush2.msra.mxu0 0.0
  %475 = vmatprep.subr.mxu0 0.0
  %476 = vmatpush2.msra.mxu0 0.0
  %477 = vmatprep.subr.mxu0 0.0
  %478 = vmatpush2.msra.mxu0 0.0
  %479 = vmatprep.subr.mxu0 0.0
  %480 = vmatpush2.msra.mxu0 0.0
  %481 = vmatprep.subr.mxu0 0.0
  %482 = vmatpush2.msra.mxu0 0.0
  %483 = vmatprep.subr.mxu0 0.0
  %484 = vmatpush2.msra.mxu0 0.0
  %485 = vmatprep.subr.mxu0 0.0
  %486 = vmatpush2.msra.mxu0 0.0
  %487 = vmatprep.subr.mxu0 0.0
  %488 = vmatpush2.msra.mxu0 0.0
  %489 = vmatprep.subr.mxu0 0.0
  %490 = vmatpush2.msra.mxu0 0.0
  %491 = vmatprep.subr.mxu0 0.0
  %492 = vmatpush2.msra.mxu0 0.0
  %493 = vmatprep.subr.mxu0 0.0
  %494 = vmatpush2.msra.mxu0 0.0
  %495 = vmatprep.subr.mxu0 0.0
  %496 = vmatpush2.msra.mxu0 0.0
  %497 = vmatprep.subr.mxu0 0.0
  %498 = vmatpush2.msra.mxu0 0.0
  %499 = vmatprep.subr.mxu0 0.0
  %500 = vmatpush2.msra.mxu0 0.0
  %501 = vmatprep.subr.mxu0 0.0
  %502 = vmatpush2.msra.mxu0 0.0
  %503 = vmatprep.mubr.f32.mxu0 0.0
  %504 = vmatmul.mubr.f32.gmra.mxu0 %v426
  %v505 = vpop.f32.mrf.mxu0
  %v506 = vadd.f32 0.0, %v505
  %v507 = vpop.f32.mrf.mxu0
  %508 = vmatprep.mubr.f32.mxu0 0.0
  %509 = vmatmul.mubr.f32.gmra.mxu0 %v427
  %v510 = vpop.f32.mrf.mxu0
  %v511 = vadd.f32 0.0, %v510
  %v512 = vpop.f32.mrf.mxu0
  %513 = vmatprep.mubr.f32.mxu0 0.0
  %514 = vmatmul.mubr.f32.gmra.mxu0 %v428
  %v515 = vpop.f32.mrf.mxu0
  %v516 = vadd.f32 0.0, %v515
  %v517 = vpop.f32.mrf.mxu0
  %518 = vmatprep.mubr.f32.mxu0 0.0
  %519 = vmatmul.mubr.f32.gmra.mxu0 %v429
  %v520 = vpop.f32.mrf.mxu0
  %v521 = vadd.f32 0.0, %v520
  %v522 = vpop.f32.mrf.mxu0
  %523 = vmatprep.mubr.f32.mxu0 0.0
  %524 = vmatmul.mubr.f32.gmra.mxu0 %v430
  %v525 = vpop.f32.mrf.mxu0
  %v526 = vadd.f32 0.0, %v525
  %v527 = vpop.f32.mrf.mxu0
  %528 = vmatprep.mubr.f32.mxu0 0.0
  %529 = vmatmul.mubr.f32.gmra.mxu0 %v431
  %v530 = vpop.f32.mrf.mxu0
  %v531 = vadd.f32 0.0, %v530
  %v532 = vpop.f32.mrf.mxu0
  %533 = vmatprep.mubr.f32.mxu0 0.0
  %534 = vmatmul.mubr.f32.gmra.mxu0 %v432
  %v535 = vpop.f32.mrf.mxu0
  %v536 = vadd.f32 0.0, %v535
  %v537 = vpop.f32.mrf.mxu0
  %538 = vmatprep.mubr.f32.mxu0 0.0
  %539 = vmatmul.mubr.f32.gmra.mxu0 %v433
  %v540 = vpop.f32.mrf.mxu0
  %v541 = vadd.f32 0.0, %v540
  %v542 = vpop.f32.mrf.mxu0
  %543 = vmatprep.mubr.f32.mxu0 0.0
  %544 = vmatmul.mubr.f32.gmra.mxu0 %v434
  %v545 = vpop.f32.mrf.mxu0
  %v546 = vadd.f32 0.0, %v545
  %v547 = vpop.f32.mrf.mxu0
  %548 = vmatprep.mubr.f32.mxu0 0.0
  %549 = vmatmul.mubr.f32.gmra.mxu0 %v435
  %v550 = vpop.f32.mrf.mxu0
  %v551 = vadd.f32 0.0, %v550
  %v552 = vpop.f32.mrf.mxu0
  %553 = vmatprep.mubr.f32.mxu0 0.0
  %554 = vmatmul.mubr.f32.gmra.mxu0 %v436
  %v555 = vpop.f32.mrf.mxu0
  %v556 = vadd.f32 0.0, %v555
  %v557 = vpop.f32.mrf.mxu0
  %558 = vmatprep.mubr.f32.mxu0 0.0
  %559 = vmatmul.mubr.f32.gmra.mxu0 %v437
  %v560 = vpop.f32.mrf.mxu0
  %v561 = vadd.f32 0.0, %v560
  %v562 = vpop.f32.mrf.mxu0
  %563 = vmatprep.mubr.f32.mxu0 0.0
  %564 = vmatmul.mubr.f32.gmra.mxu0 %v438
  %v565 = vpop.f32.mrf.mxu0
  %v566 = vadd.f32 0.0, %v565
  %v567 = vpop.f32.mrf.mxu0
  %568 = vdwg.mxu0
  %v569 = vmul.f32 %v506, %v182
  %v570 = vmul.f32 %v511, %v182
  %v571 = vmul.f32 %v516, %v182
  %v572 = vmul.f32 %v521, %v182
  %v573 = vmul.f32 %v526, %v182
  %v574 = vmul.f32 %v531, %v182
  %v575 = vmul.f32 %v536, %v182
  %v576 = vmul.f32 %v541, %v182
  %v577 = vmul.f32 %v546, %v182
  %v578 = vmul.f32 %v551, %v182
  %v579 = vmul.f32 %v556, %v182
  %v580 = vmul.f32 %v561, %v182
  %v581 = vmul.f32 %v566, %v182
  %v582 = vadd.f32 %v569, %v201
  %v583 = vadd.f32 %v570, %v201
  %v584 = vadd.f32 %v571, %v201
  %v585 = vadd.f32 %v572, %v201
  %v586 = vadd.f32 %v573, %v201
  %v587 = vadd.f32 %v574, %v201
  %v588 = vadd.f32 %v575, %v201
  %v589 = vadd.f32 %v576, %v201
  %v590 = vadd.f32 %v577, %v201
  %v591 = vadd.f32 %v578, %v201
  %v592 = vadd.f32 %v579, %v201
  %v593 = vadd.f32 %v580, %v201
  %v594 = vadd.f32 %v581, %v201
  %v595 = vtanh.pop %v582
  %v596 = vtanh.pop %v583
  %v597 = vtanh.pop %v584
  %v598 = vtanh.pop %v585
  %v599 = vtanh.pop %v586
  %v600 = vtanh.pop %v587
  %v601 = vtanh.pop %v588
  %v602 = vtanh.pop %v589
  %v603 = vtanh.pop %v590
  %v604 = vtanh.pop %v591
  %v605 = vtanh.pop %v592
  %v606 = vtanh.pop %v593
  %v607 = vtanh.pop %v594
  %v608 = vmax.f32 %v412, %v595
  %v609 = vmax.f32 %v413, %v596
  %v610 = vmax.f32 %v414, %v597
  %v611 = vmax.f32 %v415, %v598
  %v612 = vmax.f32 %v416, %v599
  %v613 = vmax.f32 %v417, %v600
  %v614 = vmax.f32 %v418, %v601
  %v615 = vmax.f32 %v419, %v602
  %v616 = vmax.f32 %v420, %v603
  %v617 = vmax.f32 %v421, %v604
  %v618 = vmax.f32 %v422, %v605
  %v619 = vmax.f32 %v423, %v606
  %v620 = vmax.f32 %v424, %v607
  %s621 = scalar_lea.vmem %s0, 312
  %v622 = vld [vmem:[%s621] sm:$0xff]
  %v623 = vld [vmem:[%s621 + $0x8] sm:$0xff]
  %v624 = vld [vmem:[%s621 + $0x10] sm:$0xff]
  %v625 = vld [vmem:[%s621 + $0x18] sm:$0xff]
  %v626 = vld [vmem:[%s621 + $0x20] sm:$0xff]
  %v627 = vld [vmem:[%s621 + $0x28] sm:$0xff]
  %v628 = vld [vmem:[%s621 + $0x30] sm:$0xff]
  %v629 = vld [vmem:[%s621 + $0x38] sm:$0xff]
  %v630 = vld [vmem:[%s621 + $0x40] sm:$0xff]
  %v631 = vld [vmem:[%s621 + $0x48] sm:$0xff]
  %v632 = vld [vmem:[%s621 + $0x50] sm:$0xff]
  %v633 = vld [vmem:[%s621 + $0x58] sm:$0xff]
  %v634 = vld [vmem:[%s621 + $0x60] sm:$0x3]
  %635 = vmatprep.subr.mxu0 0.0
  %636 = vmatpush1.msra.mxu0 %v34
  %637 = vmatprep.subr.mxu0 0.0
  %638 = vmatpush1.msra.mxu0 %v33
  %639 = vmatprep.subr.mxu0 0.0
  %640 = vmatpush1.msra.mxu0 %v32
  %641 = vmatprep.subr.mxu0 0.0
  %642 = vmatpush1.msra.mxu0 %v31
  %643 = vmatprep.subr.mxu0 0.0
  %644 = vmatpush1.msra.mxu0 %v30
  %645 = vmatprep.subr.mxu0 0.0
  %646 = vmatpush1.msra.mxu0 %v29
  %647 = vmatprep.subr.mxu0 0.0
  %648 = vmatpush1.msra.mxu0 %v28
  %649 = vmatprep.subr.mxu0 0.0
  %650 = vmatpush1.msra.mxu0 %v27
  %651 = vmatprep.subr.mxu0 0.0
  %652 = vmatpush1.msra.mxu0 %v26
  %653 = vmatprep.subr.mxu0 0.0
  %654 = vmatpush1.msra.mxu0 %v25
  %655 = vmatprep.subr.mxu0 0.0
  %656 = vmatpush1.msra.mxu0 %v24
  %657 = vmatprep.subr.mxu0 0.0
  %658 = vmatpush1.msra.mxu0 %v23
  %659 = vmatprep.subr.mxu0 0.0
  %660 = vmatpush1.msra.mxu0 %v22
  %661 = vmatprep.subr.mxu0 0.0
  %662 = vmatpush1.msra.mxu0 %v21
  %663 = vmatprep.subr.mxu0 0.0
  %664 = vmatpush1.msra.mxu0 %v20
  %665 = vmatprep.subr.mxu0 0.0
  %666 = vmatpush1.msra.mxu0 %v19
  %667 = vmatprep.subr.mxu0 0.0
  %668 = vmatpush2.msra.mxu0 0.0
  %669 = vmatprep.subr.mxu0 0.0
  %670 = vmatpush2.msra.mxu0 0.0
  %671 = vmatprep.subr.mxu0 0.0
  %672 = vmatpush2.msra.mxu0 0.0
  %673 = vmatprep.subr.mxu0 0.0
  %674 = vmatpush2.msra.mxu0 0.0
  %675 = vmatprep.subr.mxu0 0.0
  %676 = vmatpush2.msra.mxu0 0.0
  %677 = vmatprep.subr.mxu0 0.0
  %678 = vmatpush2.msra.mxu0 0.0
  %679 = vmatprep.subr.mxu0 0.0
  %680 = vmatpush2.msra.mxu0 0.0
  %681 = vmatprep.subr.mxu0 0.0
  %682 = vmatpush2.msra.mxu0 0.0
  %683 = vmatprep.subr.mxu0 0.0
  %684 = vmatpush2.msra.mxu0 0.0
  %685 = vmatprep.subr.mxu0 0.0
  %686 = vmatpush2.msra.mxu0 0.0
  %687 = vmatprep.subr.mxu0 0.0
  %688 = vmatpush2.msra.mxu0 0.0
  %689 = vmatprep.subr.mxu0 0.0
  %690 = vmatpush2.msra.mxu0 0.0
  %691 = vmatprep.subr.mxu0 0.0
  %692 = vmatpush2.msra.mxu0 0.0
  %693 = vmatprep.subr.mxu0 0.0
  %694 = vmatpush2.msra.mxu0 0.0
  %695 = vmatprep.subr.mxu0 0.0
  %696 = vmatpush2.msra.mxu0 0.0
  %697 = vmatprep.subr.mxu0 0.0
  %698 = vmatpush2.msra.mxu0 0.0
  %699 = vmatprep.mubr.f32.mxu0 0.0
  %700 = vmatmul.mubr.f32.gmra.mxu0 %v622
  %v701 = vpop.f32.mrf.mxu0
  %v702 = vadd.f32 0.0, %v701
  %v703 = vpop.f32.mrf.mxu0
  %704 = vmatprep.mubr.f32.mxu0 0.0
  %705 = vmatmul.mubr.f32.gmra.mxu0 %v623
  %v706 = vpop.f32.mrf.mxu0
  %v707 = vadd.f32 0.0, %v706
  %v708 = vpop.f32.mrf.mxu0
  %709 = vmatprep.mubr.f32.mxu0 0.0
  %710 = vmatmul.mubr.f32.gmra.mxu0 %v624
  %v711 = vpop.f32.mrf.mxu0
  %v712 = vadd.f32 0.0, %v711
  %v713 = vpop.f32.mrf.mxu0
  %714 = vmatprep.mubr.f32.mxu0 0.0
  %715 = vmatmul.mubr.f32.gmra.mxu0 %v625
  %v716 = vpop.f32.mrf.mxu0
  %v717 = vadd.f32 0.0, %v716
  %v718 = vpop.f32.mrf.mxu0
  %719 = vmatprep.mubr.f32.mxu0 0.0
  %720 = vmatmul.mubr.f32.gmra.mxu0 %v626
  %v721 = vpop.f32.mrf.mxu0
  %v722 = vadd.f32 0.0, %v721
  %v723 = vpop.f32.mrf.mxu0
  %724 = vmatprep.mubr.f32.mxu0 0.0
  %725 = vmatmul.mubr.f32.gmra.mxu0 %v627
  %v726 = vpop.f32.mrf.mxu0
  %v727 = vadd.f32 0.0, %v726
  %v728 = vpop.f32.mrf.mxu0
  %729 = vmatprep.mubr.f32.mxu0 0.0
  %730 = vmatmul.mubr.f32.gmra.mxu0 %v628
  %v731 = vpop.f32.mrf.mxu0
  %v732 = vadd.f32 0.0, %v731
  %v733 = vpop.f32.mrf.mxu0
  %734 = vmatprep.mubr.f32.mxu0 0.0
  %735 = vmatmul.mubr.f32.gmra.mxu0 %v629
  %v736 = vpop.f32.mrf.mxu0
  %v737 = vadd.f32 0.0, %v736
  %v738 = vpop.f32.mrf.mxu0
  %739 = vmatprep.mubr.f32.mxu0 0.0
  %740 = vmatmul.mubr.f32.gmra.mxu0 %v630
  %v741 = vpop.f32.mrf.mxu0
  %v742 = vadd.f32 0.0, %v741
  %v743 = vpop.f32.mrf.mxu0
  %744 = vmatprep.mubr.f32.mxu0 0.0
  %745 = vmatmul.mubr.f32.gmra.mxu0 %v631
  %v746 = vpop.f32.mrf.mxu0
  %v747 = vadd.f32 0.0, %v746
  %v748 = vpop.f32.mrf.mxu0
  %749 = vmatprep.mubr.f32.mxu0 0.0
  %750 = vmatmul.mubr.f32.gmra.mxu0 %v632
  %v751 = vpop.f32.mrf.mxu0
  %v752 = vadd.f32 0.0, %v751
  %v753 = vpop.f32.mrf.mxu0
  %754 = vmatprep.mubr.f32.mxu0 0.0
  %755 = vmatmul.mubr.f32.gmra.mxu0 %v633
  %v756 = vpop.f32.mrf.mxu0
  %v757 = vadd.f32 0.0, %v756
  %v758 = vpop.f32.mrf.mxu0
  %759 = vmatprep.mubr.f32.mxu0 0.0
  %760 = vmatmul.mubr.f32.gmra.mxu0 %v634
  %v761 = vpop.f32.mrf.mxu0
  %v762 = vadd.f32 0.0, %v761
  %v763 = vpop.f32.mrf.mxu0
  %764 = vdwg.mxu0
  %v765 = vmul.f32 %v702, %v182
  %v766 = vmul.f32 %v707, %v182
  %v767 = vmul.f32 %v712, %v182
  %v768 = vmul.f32 %v717, %v182
  %v769 = vmul.f32 %v722, %v182
  %v770 = vmul.f32 %v727, %v182
  %v771 = vmul.f32 %v732, %v182
  %v772 = vmul.f32 %v737, %v182
  %v773 = vmul.f32 %v742, %v182
  %v774 = vmul.f32 %v747, %v182
  %v775 = vmul.f32 %v752, %v182
  %v776 = vmul.f32 %v757, %v182
  %v777 = vmul.f32 %v762, %v182
  %v778 = vadd.f32 %v765, %v201
  %v779 = vadd.f32 %v766, %v201
  %v780 = vadd.f32 %v767, %v201
  %v781 = vadd.f32 %v768, %v201
  %v782 = vadd.f32 %v769, %v201
  %v783 = vadd.f32 %v770, %v201
  %v784 = vadd.f32 %v771, %v201
  %v785 = vadd.f32 %v772, %v201
  %v786 = vadd.f32 %v773, %v201
  %v787 = vadd.f32 %v774, %v201
  %v788 = vadd.f32 %v775, %v201
  %v789 = vadd.f32 %v776, %v201
  %v790 = vadd.f32 %v777, %v201
  %v791 = vtanh.pop %v778
  %v792 = vtanh.pop %v779
  %v793 = vtanh.pop %v780
  %v794 = vtanh.pop %v781
  %v795 = vtanh.pop %v782
  %v796 = vtanh.pop %v783
  %v797 = vtanh.pop %v784
  %v798 = vtanh.pop %v785
  %v799 = vtanh.pop %v786
  %v800 = vtanh.pop %v787
  %v801 = vtanh.pop %v788
  %v802 = vtanh.pop %v789
  %v803 = vtanh.pop %v790
  %v804 = vmax.f32 %v608, %v791
  %v805 = vmax.f32 %v609, %v792
  %v806 = vmax.f32 %v610, %v793
  %v807 = vmax.f32 %v611, %v794
  %v808 = vmax.f32 %v612, %v795
  %v809 = vmax.f32 %v613, %v796
  %v810 = vmax.f32 %v614, %v797
  %v811 = vmax.f32 %v615, %v798
  %v812 = vmax.f32 %v616, %v799
  %v813 = vmax.f32 %v617, %v800
  %v814 = vmax.f32 %v618, %v801
  %v815 = vmax.f32 %v619, %v802
  %v816 = vmax.f32 %v620, %v803
  %817 = vst [vmem:[%s4] sm:$0xff] %v804
  %818 = vst [vmem:[%s4 + $0x8] sm:$0xff] %v805
  %819 = vst [vmem:[%s4 + $0x10] sm:$0xff] %v806
  %820 = vst [vmem:[%s4 + $0x18] sm:$0xff] %v807
  %821 = vst [vmem:[%s4 + $0x20] sm:$0xff] %v808
  %822 = vst [vmem:[%s4 + $0x28] sm:$0xff] %v809
  %823 = vst [vmem:[%s4 + $0x30] sm:$0xff] %v810
  %824 = vst [vmem:[%s4 + $0x38] sm:$0xff] %v811
  %825 = vst [vmem:[%s4 + $0x40] sm:$0xff] %v812
  %826 = vst [vmem:[%s4 + $0x48] sm:$0xff] %v813
  %827 = vst [vmem:[%s4 + $0x50] sm:$0xff] %v814
  %828 = vst [vmem:[%s4 + $0x58] sm:$0xff] %v815
  %829 = vst [vmem:[%s4 + $0x60] sm:$0x3] %v816
  // Predicated region
  $region18: #{model_forward.2} parent=0 // pred_check
    _
  $region19: #{model_forward.2} parent=0 // pred_check_branch
    %831 = sbr.rel (0) target = $region21
  $region20: #{model_forward.2} parent=0 // pred_region
    _
  $region21: #{model_forward.2} parent=0 // pred_fallthru
    _
  // Predicated region
  $region22: #{model_forward.2} parent=0 // pred_check
    _
  $region23: #{model_forward.2} parent=0 // pred_check_branch
    %833 = sbr.rel (0) target = $region25
  $region24: #{model_forward.2} parent=0 // pred_region
    _
  $region25: #{model_forward.2} parent=0 // pred_fallthru
    _

// kernel: model_forward.3
$region0: #{model_forward.3}
  #allocation0 [shape = 'u32[]', space=smem, size = 0x4, offset = 0x4, fixed_abs, tag = 'smem constant byte address 0x4 - core index']
  #allocation1 [shape = 'u32[144,128]{1,0:T(1,128)}', space=vmem, size = 0x12000, scoped, tag = 'internal scratch']
  %s0 = inlined_call_operand.vmem [shape: f32[4,2,2048], index: 0, kind: input, shape index: {}]
  %s1 = inlined_call_operand.vmem [shape: f32[2048,256], index: 1, kind: input, shape index: {}]
  %s2 = inlined_call_operand.vmem [shape: f32[1,256], index: 2, kind: input, shape index: {}]
  %s3 = inlined_call_operand.vmem [shape: f32[1,256], index: 3, kind: input, shape index: {}]
  %s4 = inlined_call_operand.vmem [shape: f32[256,512], index: 4, kind: input, shape index: {}]
  %s5 = inlined_call_operand.vmem [shape: f32[1,512], index: 5, kind: input, shape index: {}]
  %s6 = inlined_call_operand.vmem [shape: f32[1,512], index: 6, kind: input, shape index: {}]
  %s7 = inlined_call_operand.vmem [shape: f32[2,512], index: 7, kind: output, shape index: {}]
  %s8 = sld [smem:[#allocation0]]
  $region38: #{model_forward.3} parent=0
    _
  %s10 = ssub.s32 1, %s8
  %s11 = scalar_select 0, %s10, %s8
  // Predicated region
  $region2: #{model_forward.3} parent=0 // pred_check
    _
  $region3: #{model_forward.3} parent=0 // pred_check_branch
    %13 = sbr.rel (0) target = $region5
  $region4: #{model_forward.3} parent=0 // pred_region
    _
  $region5: #{model_forward.3} parent=0 // pred_fallthru
    _
  // Predicated region
  $region6: #{model_forward.3} parent=0 // pred_check
    _
  $region7: #{model_forward.3} parent=0 // pred_check_branch
    %15 = sbr.rel (0) target = $region9
  $region8: #{model_forward.3} parent=0 // pred_region
    _
  $region9: #{model_forward.3} parent=0 // pred_fallthru
    _
  // Predicated region
  $region10: #{model_forward.3} parent=0 // pred_check
    _
  $region11: #{model_forward.3} parent=0 // pred_check_branch
    %17 = sbr.rel (0) target = $region13
  $region12: #{model_forward.3} parent=0 // pred_region
    _
  $region13: #{model_forward.3} parent=0 // pred_fallthru
    _
  // Predicated region
  $region14: #{model_forward.3} parent=0 // pred_check
    _
  $region15: #{model_forward.3} parent=0 // pred_check_branch
    %19 = sbr.rel (0) target = $region17
  $region16: #{model_forward.3} parent=0 // pred_region
    _
  $region17: #{model_forward.3} parent=0 // pred_fallthru
    _
  // Predicated region
  $region18: #{model_forward.3} parent=0 // pred_check
    _
  $region19: #{model_forward.3} parent=0 // pred_check_branch
    %21 = sbr.rel (0) target = $region21
  $region20: #{model_forward.3} parent=0 // pred_region
    _
  $region21: #{model_forward.3} parent=0 // pred_fallthru
    _
  // Predicated region
  $region22: #{model_forward.3} parent=0 // pred_check
    _
  $region23: #{model_forward.3} parent=0 // pred_check_branch
    %23 = sbr.rel (0) target = $region25
  $region24: #{model_forward.3} parent=0 // pred_region
    _
  $region25: #{model_forward.3} parent=0 // pred_fallthru
    _
  // Predicated region
  $region26: #{model_forward.3} parent=0 // pred_check
    _
  $region27: #{model_forward.3} parent=0 // pred_check_branch
    %25 = sbr.rel (0) target = $region29
  $region28: #{model_forward.3} parent=0 // pred_region
    _
  $region29: #{model_forward.3} parent=0 // pred_fallthru
    _
  %v26 = vld [vmem:[%s2] sm:$0x3]
  %v27 = vld [vmem:[%s3] sm:$0x3]
  %v28 = vld [vmem:[%s1] sm:$0xff]
  %v29 = vld [vmem:[%s1 + $0x8] sm:$0xff]
  %v30 = vld [vmem:[%s1 + $0x10] sm:$0xff]
  %v31 = vld [vmem:[%s1 + $0x18] sm:$0xff]
  %v32 = vld [vmem:[%s1 + $0x20] sm:$0xff]
  %v33 = vld [vmem:[%s1 + $0x28] sm:$0xff]
  %v34 = vld [vmem:[%s1 + $0x30] sm:$0xff]
  %v35 = vld [vmem:[%s1 + $0x38] sm:$0xff]
  %v36 = vld [vmem:[%s1 + $0x40] sm:$0xff]
  %v37 = vld [vmem:[%s1 + $0x48] sm:$0xff]
  %v38 = vld [vmem:[%s1 + $0x50] sm:$0xff]
  %v39 = vld [vmem:[%s1 + $0x58] sm:$0xff]
  %v40 = vld [vmem:[%s1 + $0x60] sm:$0xff]
  %v41 = vld [vmem:[%s1 + $0x68] sm:$0xff]
  %v42 = vld [vmem:[%s1 + $0x70] sm:$0xff]
  %v43 = vld [vmem:[%s1 + $0x78] sm:$0xff]
  %v44 = vld [vmem:[%s1 + $0x80] sm:$0xff]
  %v45 = vld [vmem:[%s1 + $0x88] sm:$0xff]
  %v46 = vld [vmem:[%s1 + $0x90] sm:$0xff]
  %v47 = vld [vmem:[%s1 + $0x98] sm:$0xff]
  %v48 = vld [vmem:[%s1 + $0xa0] sm:$0xff]
  %v49 = vld [vmem:[%s1 + $0xa8] sm:$0xff]
  %v50 = vld [vmem:[%s1 + $0xb0] sm:$0xff]
  %v51 = vld [vmem:[%s1 + $0xb8] sm:$0xff]
  %v52 = vld [vmem:[%s1 + $0xc0] sm:$0xff]
  %v53 = vld [vmem:[%s1 + $0xc8] sm:$0xff]
  %v54 = vld [vmem:[%s1 + $0xd0] sm:$0xff]
  %v55 = vld [vmem:[%s1 + $0xd8] sm:$0xff]
  %v56 = vld [vmem:[%s1 + $0xe0] sm:$0xff]
  %v57 = vld [vmem:[%s1 + $0xe8] sm:$0xff]
  %v58 = vld [vmem:[%s1 + $0xf0] sm:$0xff]
  %v59 = vld [vmem:[%s1 + $0xf8] sm:$0xff]
  %v60 = vld [vmem:[%s1 + $0x100] sm:$0xff]
  %v61 = vld [vmem:[%s1 + $0x108] sm:$0xff]
  %v62 = vld [vmem:[%s1 + $0x110] sm:$0xff]
  %v63 = vld [vmem:[%s1 + $0x118] sm:$0xff]
  %v64 = vld [vmem:[%s1 + $0x120] sm:$0xff]
  %v65 = vld [vmem:[%s1 + $0x128] sm:$0xff]
  %v66 = vld [vmem:[%s1 + $0x130] sm:$0xff]
  %v67 = vld [vmem:[%s1 + $0x138] sm:$0xff]
  %v68 = vld [vmem:[%s1 + $0x140] sm:$0xff]
  %v69 = vld [vmem:[%s1 + $0x148] sm:$0xff]
  %v70 = vld [vmem:[%s1 + $0x150] sm:$0xff]
  %v71 = vld [vmem:[%s1 + $0x158] sm:$0xff]
  %v72 = vld [vmem:[%s1 + $0x160] sm:$0xff]
  %v73 = vld [vmem:[%s1 + $0x168] sm:$0xff]
  %v74 = vld [vmem:[%s1 + $0x170] sm:$0xff]
  %v75 = vld [vmem:[%s1 + $0x178] sm:$0xff]
  %v76 = vld [vmem:[%s1 + $0x180] sm:$0xff]
  %v77 = vld [vmem:[%s1 + $0x188] sm:$0xff]
  %v78 = vld [vmem:[%s1 + $0x190] sm:$0xff]
  %v79 = vld [vmem:[%s1 + $0x198] sm:$0xff]
  %v80 = vld [vmem:[%s1 + $0x1a0] sm:$0xff]
  %v81 = vld [vmem:[%s1 + $0x1a8] sm:$0xff]
  %v82 = vld [vmem:[%s1 + $0x1b0] sm:$0xff]
  %v83 = vld [vmem:[%s1 + $0x1b8] sm:$0xff]
  %v84 = vld [vmem:[%s1 + $0x1c0] sm:$0xff]
  %v85 = vld [vmem:[%s1 + $0x1c8] sm:$0xff]
  %v86 = vld [vmem:[%s1 + $0x1d0] sm:$0xff]
  %v87 = vld [vmem:[%s1 + $0x1d8] sm:$0xff]
  %v88 = vld [vmem:[%s1 + $0x1e0] sm:$0xff]
  %v89 = vld [vmem:[%s1 + $0x1e8] sm:$0xff]
  %v90 = vld [vmem:[%s1 + $0x1f0] sm:$0xff]
  %v91 = vld [vmem:[%s1 + $0x1f8] sm:$0xff]
  %v92 = vld [vmem:[%s1 + $0x200] sm:$0xff]
  %v93 = vld [vmem:[%s1 + $0x208] sm:$0xff]
  %v94 = vld [vmem:[%s1 + $0x210] sm:$0xff]
  %v95 = vld [vmem:[%s1 + $0x218] sm:$0xff]
  %v96 = vld [vmem:[%s1 + $0x220] sm:$0xff]
  %v97 = vld [vmem:[%s1 + $0x228] sm:$0xff]
  %v98 = vld [vmem:[%s1 + $0x230] sm:$0xff]
  %v99 = vld [vmem:[%s1 + $0x238] sm:$0xff]
  %v100 = vld [vmem:[%s1 + $0x240] sm:$0xff]
  %v101 = vld [vmem:[%s1 + $0x248] sm:$0xff]
  %v102 = vld [vmem:[%s1 + $0x250] sm:$0xff]
  %v103 = vld [vmem:[%s1 + $0x258] sm:$0xff]
  %v104 = vld [vmem:[%s1 + $0x260] sm:$0xff]
  %v105 = vld [vmem:[%s1 + $0x268] sm:$0xff]
  %v106 = vld [vmem:[%s1 + $0x270] sm:$0xff]
  %v107 = vld [vmem:[%s1 + $0x278] sm:$0xff]
  %v108 = vld [vmem:[%s1 + $0x280] sm:$0xff]
  %v109 = vld [vmem:[%s1 + $0x288] sm:$0xff]
  %v110 = vld [vmem:[%s1 + $0x290] sm:$0xff]
  %v111 = vld [vmem:[%s1 + $0x298] sm:$0xff]
  %v112 = vld [vmem:[%s1 + $0x2a0] sm:$0xff]
  %v113 = vld [vmem:[%s1 + $0x2a8] sm:$0xff]
  %v114 = vld [vmem:[%s1 + $0x2b0] sm:$0xff]
  %v115 = vld [vmem:[%s1 + $0x2b8] sm:$0xff]
  %v116 = vld [vmem:[%s1 + $0x2c0] sm:$0xff]
  %v117 = vld [vmem:[%s1 + $0x2c8] sm:$0xff]
  %v118 = vld [vmem:[%s1 + $0x2d0] sm:$0xff]
  %v119 = vld [vmem:[%s1 + $0x2d8] sm:$0xff]
  %v120 = vld [vmem:[%s1 + $0x2e0] sm:$0xff]
  %v121 = vld [vmem:[%s1 + $0x2e8] sm:$0xff]
  %v122 = vld [vmem:[%s1 + $0x2f0] sm:$0xff]
  %v123 = vld [vmem:[%s1 + $0x2f8] sm:$0xff]
  %v124 = vld [vmem:[%s1 + $0x300] sm:$0xff]
  %v125 = vld [vmem:[%s1 + $0x308] sm:$0xff]
  %v126 = vld [vmem:[%s1 + $0x310] sm:$0xff]
  %v127 = vld [vmem:[%s1 + $0x318] sm:$0xff]
  %v128 = vld [vmem:[%s1 + $0x320] sm:$0xff]
  %v129 = vld [vmem:[%s1 + $0x328] sm:$0xff]
  %v130 = vld [vmem:[%s1 + $0x330] sm:$0xff]
  %v131 = vld [vmem:[%s1 + $0x338] sm:$0xff]
  %v132 = vld [vmem:[%s1 + $0x340] sm:$0xff]
  %v133 = vld [vmem:[%s1 + $0x348] sm:$0xff]
  %v134 = vld [vmem:[%s1 + $0x350] sm:$0xff]
  %v135 = vld [vmem:[%s1 + $0x358] sm:$0xff]
  %v136 = vld [vmem:[%s1 + $0x360] sm:$0xff]
  %v137 = vld [vmem:[%s1 + $0x368] sm:$0xff]
  %v138 = vld [vmem:[%s1 + $0x370] sm:$0xff]
  %v139 = vld [vmem:[%s1 + $0x378] sm:$0xff]
  %v140 = vld [vmem:[%s1 + $0x380] sm:$0xff]
  %v141 = vld [vmem:[%s1 + $0x388] sm:$0xff]
  %v142 = vld [vmem:[%s1 + $0x390] sm:$0xff]
  %v143 = vld [vmem:[%s1 + $0x398] sm:$0xff]
  %v144 = vld [vmem:[%s1 + $0x3a0] sm:$0xff]
  %v145 = vld [vmem:[%s1 + $0x3a8] sm:$0xff]
  %v146 = vld [vmem:[%s1 + $0x3b0] sm:$0xff]
  %v147 = vld [vmem:[%s1 + $0x3b8] sm:$0xff]
  %v148 = vld [vmem:[%s1 + $0x3c0] sm:$0xff]
  %v149 = vld [vmem:[%s1 + $0x3c8] sm:$0xff]
  %v150 = vld [vmem:[%s1 + $0x3d0] sm:$0xff]
  %v151 = vld [vmem:[%s1 + $0x3d8] sm:$0xff]
  %v152 = vld [vmem:[%s1 + $0x3e0] sm:$0xff]
  %v153 = vld [vmem:[%s1 + $0x3e8] sm:$0xff]
  %v154 = vld [vmem:[%s1 + $0x3f0] sm:$0xff]
  %v155 = vld [vmem:[%s1 + $0x3f8] sm:$0xff]
  %v156 = vld [vmem:[%s1 + $0x400] sm:$0xff]
  %v157 = vld [vmem:[%s1 + $0x408] sm:$0xff]
  %v158 = vld [vmem:[%s1 + $0x410] sm:$0xff]
  %v159 = vld [vmem:[%s1 + $0x418] sm:$0xff]
  %v160 = vld [vmem:[%s1 + $0x420] sm:$0xff]
  %v161 = vld [vmem:[%s1 + $0x428] sm:$0xff]
  %v162 = vld [vmem:[%s1 + $0x430] sm:$0xff]
  %v163 = vld [vmem:[%s1 + $0x438] sm:$0xff]
  %v164 = vld [vmem:[%s1 + $0x440] sm:$0xff]
  %v165 = vld [vmem:[%s1 + $0x448] sm:$0xff]
  %v166 = vld [vmem:[%s1 + $0x450] sm:$0xff]
  %v167 = vld [vmem:[%s1 + $0x458] sm:$0xff]
  %v168 = vld [vmem:[%s1 + $0x460] sm:$0xff]
  %v169 = vld [vmem:[%s1 + $0x468] sm:$0xff]
  %v170 = vld [vmem:[%s1 + $0x470] sm:$0xff]
  %v171 = vld [vmem:[%s1 + $0x478] sm:$0xff]
  %v172 = vld [vmem:[%s1 + $0x480] sm:$0xff]
  %v173 = vld [vmem:[%s1 + $0x488] sm:$0xff]
  %v174 = vld [vmem:[%s1 + $0x490] sm:$0xff]
  %v175 = vld [vmem:[%s1 + $0x498] sm:$0xff]
  %v176 = vld [vmem:[%s1 + $0x4a0] sm:$0xff]
  %v177 = vld [vmem:[%s1 + $0x4a8] sm:$0xff]
  %v178 = vld [vmem:[%s1 + $0x4b0] sm:$0xff]
  %v179 = vld [vmem:[%s1 + $0x4b8] sm:$0xff]
  %v180 = vld [vmem:[%s1 + $0x4c0] sm:$0xff]
  %v181 = vld [vmem:[%s1 + $0x4c8] sm:$0xff]
  %v182 = vld [vmem:[%s1 + $0x4d0] sm:$0xff]
  %v183 = vld [vmem:[%s1 + $0x4d8] sm:$0xff]
  %v184 = vld [vmem:[%s1 + $0x4e0] sm:$0xff]
  %v185 = vld [vmem:[%s1 + $0x4e8] sm:$0xff]
  %v186 = vld [vmem:[%s1 + $0x4f0] sm:$0xff]
  %v187 = vld [vmem:[%s1 + $0x4f8] sm:$0xff]
  %v188 = vld [vmem:[%s1 + $0x500] sm:$0xff]
  %v189 = vld [vmem:[%s1 + $0x508] sm:$0xff]
  %v190 = vld [vmem:[%s1 + $0x510] sm:$0xff]
  %v191 = vld [vmem:[%s1 + $0x518] sm:$0xff]
  %v192 = vld [vmem:[%s1 + $0x520] sm:$0xff]
  %v193 = vld [vmem:[%s1 + $0x528] sm:$0xff]
  %v194 = vld [vmem:[%s1 + $0x530] sm:$0xff]
  %v195 = vld [vmem:[%s1 + $0x538] sm:$0xff]
  %v196 = vld [vmem:[%s1 + $0x540] sm:$0xff]
  %v197 = vld [vmem:[%s1 + $0x548] sm:$0xff]
  %v198 = vld [vmem:[%s1 + $0x550] sm:$0xff]
  %v199 = vld [vmem:[%s1 + $0x558] sm:$0xff]
  %v200 = vld [vmem:[%s1 + $0x560] sm:$0xff]
  %v201 = vld [vmem:[%s1 + $0x568] sm:$0xff]
  %v202 = vld [vmem:[%s1 + $0x570] sm:$0xff]
  %v203 = vld [vmem:[%s1 + $0x578] sm:$0xff]
  %v204 = vld [vmem:[%s1 + $0x580] sm:$0xff]
  %v205 = vld [vmem:[%s1 + $0x588] sm:$0xff]
  %v206 = vld [vmem:[%s1 + $0x590] sm:$0xff]
  %v207 = vld [vmem:[%s1 + $0x598] sm:$0xff]
  %v208 = vld [vmem:[%s1 + $0x5a0] sm:$0xff]
  %v209 = vld [vmem:[%s1 + $0x5a8] sm:$0xff]
  %v210 = vld [vmem:[%s1 + $0x5b0] sm:$0xff]
  %v211 = vld [vmem:[%s1 + $0x5b8] sm:$0xff]
  %v212 = vld [vmem:[%s1 + $0x5c0] sm:$0xff]
  %v213 = vld [vmem:[%s1 + $0x5c8] sm:$0xff]
  %v214 = vld [vmem:[%s1 + $0x5d0] sm:$0xff]
  %v215 = vld [vmem:[%s1 + $0x5d8] sm:$0xff]
  %v216 = vld [vmem:[%s1 + $0x5e0] sm:$0xff]
  %v217 = vld [vmem:[%s1 + $0x5e8] sm:$0xff]
  %v218 = vld [vmem:[%s1 + $0x5f0] sm:$0xff]
  %v219 = vld [vmem:[%s1 + $0x5f8] sm:$0xff]
  %v220 = vld [vmem:[%s1 + $0x600] sm:$0xff]
  %v221 = vld [vmem:[%s1 + $0x608] sm:$0xff]
  %v222 = vld [vmem:[%s1 + $0x610] sm:$0xff]
  %v223 = vld [vmem:[%s1 + $0x618] sm:$0xff]
  %v224 = vld [vmem:[%s1 + $0x620] sm:$0xff]
  %v225 = vld [vmem:[%s1 + $0x628] sm:$0xff]
  %v226 = vld [vmem:[%s1 + $0x630] sm:$0xff]
  %v227 = vld [vmem:[%s1 + $0x638] sm:$0xff]
  %v228 = vld [vmem:[%s1 + $0x640] sm:$0xff]
  %v229 = vld [vmem:[%s1 + $0x648] sm:$0xff]
  %v230 = vld [vmem:[%s1 + $0x650] sm:$0xff]
  %v231 = vld [vmem:[%s1 + $0x658] sm:$0xff]
  %v232 = vld [vmem:[%s1 + $0x660] sm:$0xff]
  %v233 = vld [vmem:[%s1 + $0x668] sm:$0xff]
  %v234 = vld [vmem:[%s1 + $0x670] sm:$0xff]
  %v235 = vld [vmem:[%s1 + $0x678] sm:$0xff]
  %v236 = vld [vmem:[%s1 + $0x680] sm:$0xff]
  %v237 = vld [vmem:[%s1 + $0x688] sm:$0xff]
  %v238 = vld [vmem:[%s1 + $0x690] sm:$0xff]
  %v239 = vld [vmem:[%s1 + $0x698] sm:$0xff]
  %v240 = vld [vmem:[%s1 + $0x6a0] sm:$0xff]
  %v241 = vld [vmem:[%s1 + $0x6a8] sm:$0xff]
  %v242 = vld [vmem:[%s1 + $0x6b0] sm:$0xff]
  %v243 = vld [vmem:[%s1 + $0x6b8] sm:$0xff]
  %v244 = vld [vmem:[%s1 + $0x6c0] sm:$0xff]
  %v245 = vld [vmem:[%s1 + $0x6c8] sm:$0xff]
  %v246 = vld [vmem:[%s1 + $0x6d0] sm:$0xff]
  %v247 = vld [vmem:[%s1 + $0x6d8] sm:$0xff]
  %v248 = vld [vmem:[%s1 + $0x6e0] sm:$0xff]
  %v249 = vld [vmem:[%s1 + $0x6e8] sm:$0xff]
  %v250 = vld [vmem:[%s1 + $0x6f0] sm:$0xff]
  %v251 = vld [vmem:[%s1 + $0x6f8] sm:$0xff]
  %v252 = vld [vmem:[%s1 + $0x700] sm:$0xff]
  %v253 = vld [vmem:[%s1 + $0x708] sm:$0xff]
  %v254 = vld [vmem:[%s1 + $0x710] sm:$0xff]
  %v255 = vld [vmem:[%s1 + $0x718] sm:$0xff]
  %v256 = vld [vmem:[%s1 + $0x720] sm:$0xff]
  %v257 = vld [vmem:[%s1 + $0x728] sm:$0xff]
  %v258 = vld [vmem:[%s1 + $0x730] sm:$0xff]
  %v259 = vld [vmem:[%s1 + $0x738] sm:$0xff]
  %v260 = vld [vmem:[%s1 + $0x740] sm:$0xff]
  %v261 = vld [vmem:[%s1 + $0x748] sm:$0xff]
  %v262 = vld [vmem:[%s1 + $0x750] sm:$0xff]
  %v263 = vld [vmem:[%s1 + $0x758] sm:$0xff]
  %v264 = vld [vmem:[%s1 + $0x760] sm:$0xff]
  %v265 = vld [vmem:[%s1 + $0x768] sm:$0xff]
  %v266 = vld [vmem:[%s1 + $0x770] sm:$0xff]
  %v267 = vld [vmem:[%s1 + $0x778] sm:$0xff]
  %v268 = vld [vmem:[%s1 + $0x780] sm:$0xff]
  %v269 = vld [vmem:[%s1 + $0x788] sm:$0xff]
  %v270 = vld [vmem:[%s1 + $0x790] sm:$0xff]
  %v271 = vld [vmem:[%s1 + $0x798] sm:$0xff]
  %v272 = vld [vmem:[%s1 + $0x7a0] sm:$0xff]
  %v273 = vld [vmem:[%s1 + $0x7a8] sm:$0xff]
  %v274 = vld [vmem:[%s1 + $0x7b0] sm:$0xff]
  %v275 = vld [vmem:[%s1 + $0x7b8] sm:$0xff]
  %v276 = vld [vmem:[%s1 + $0x7c0] sm:$0xff]
  %v277 = vld [vmem:[%s1 + $0x7c8] sm:$0xff]
  %v278 = vld [vmem:[%s1 + $0x7d0] sm:$0xff]
  %v279 = vld [vmem:[%s1 + $0x7d8] sm:$0xff]
  %v280 = vld [vmem:[%s1 + $0x7e0] sm:$0xff]
  %v281 = vld [vmem:[%s1 + $0x7e8] sm:$0xff]
  %v282 = vld [vmem:[%s1 + $0x7f0] sm:$0xff]
  %v283 = vld [vmem:[%s1 + $0x7f8] sm:$0xff]
  %v284 = vld [vmem:[%s1 + $0x800] sm:$0xff]
  %v285 = vld [vmem:[%s1 + $0x808] sm:$0xff]
  %v286 = vld [vmem:[%s1 + $0x810] sm:$0xff]
  %v287 = vld [vmem:[%s1 + $0x818] sm:$0xff]
  %v288 = vld [vmem:[%s1 + $0x820] sm:$0xff]
  %v289 = vld [vmem:[%s1 + $0x828] sm:$0xff]
  %v290 = vld [vmem:[%s1 + $0x830] sm:$0xff]
  %v291 = vld [vmem:[%s1 + $0x838] sm:$0xff]
  %v292 = vld [vmem:[%s1 + $0x840] sm:$0xff]
  %v293 = vld [vmem:[%s1 + $0x848] sm:$0xff]
  %v294 = vld [vmem:[%s1 + $0x850] sm:$0xff]
  %v295 = vld [vmem:[%s1 + $0x858] sm:$0xff]
  %v296 = vld [vmem:[%s1 + $0x860] sm:$0xff]
  %v297 = vld [vmem:[%s1 + $0x868] sm:$0xff]
  %v298 = vld [vmem:[%s1 + $0x870] sm:$0xff]
  %v299 = vld [vmem:[%s1 + $0x878] sm:$0xff]
  %v300 = vld [vmem:[%s1 + $0x880] sm:$0xff]
  %v301 = vld [vmem:[%s1 + $0x888] sm:$0xff]
  %v302 = vld [vmem:[%s1 + $0x890] sm:$0xff]
  %v303 = vld [vmem:[%s1 + $0x898] sm:$0xff]
  %v304 = vld [vmem:[%s1 + $0x8a0] sm:$0xff]
  %v305 = vld [vmem:[%s1 + $0x8a8] sm:$0xff]
  %v306 = vld [vmem:[%s1 + $0x8b0] sm:$0xff]
  %v307 = vld [vmem:[%s1 + $0x8b8] sm:$0xff]
  %v308 = vld [vmem:[%s1 + $0x8c0] sm:$0xff]
  %v309 = vld [vmem:[%s1 + $0x8c8] sm:$0xff]
  %v310 = vld [vmem:[%s1 + $0x8d0] sm:$0xff]
  %v311 = vld [vmem:[%s1 + $0x8d8] sm:$0xff]
  %v312 = vld [vmem:[%s1 + $0x8e0] sm:$0xff]
  %v313 = vld [vmem:[%s1 + $0x8e8] sm:$0xff]
  %v314 = vld [vmem:[%s1 + $0x8f0] sm:$0xff]
  %v315 = vld [vmem:[%s1 + $0x8f8] sm:$0xff]
  %v316 = vld [vmem:[%s1 + $0x900] sm:$0xff]
  %v317 = vld [vmem:[%s1 + $0x908] sm:$0xff]
  %v318 = vld [vmem:[%s1 + $0x910] sm:$0xff]
  %v319 = vld [vmem:[%s1 + $0x918] sm:$0xff]
  %v320 = vld [vmem:[%s1 + $0x920] sm:$0xff]
  %v321 = vld [vmem:[%s1 + $0x928] sm:$0xff]
  %v322 = vld [vmem:[%s1 + $0x930] sm:$0xff]
  %v323 = vld [vmem:[%s1 + $0x938] sm:$0xff]
  %v324 = vld [vmem:[%s1 + $0x940] sm:$0xff]
  %v325 = vld [vmem:[%s1 + $0x948] sm:$0xff]
  %v326 = vld [vmem:[%s1 + $0x950] sm:$0xff]
  %v327 = vld [vmem:[%s1 + $0x958] sm:$0xff]
  %v328 = vld [vmem:[%s1 + $0x960] sm:$0xff]
  %v329 = vld [vmem:[%s1 + $0x968] sm:$0xff]
  %v330 = vld [vmem:[%s1 + $0x970] sm:$0xff]
  %v331 = vld [vmem:[%s1 + $0x978] sm:$0xff]
  %v332 = vld [vmem:[%s1 + $0x980] sm:$0xff]
  %v333 = vld [vmem:[%s1 + $0x988] sm:$0xff]
  %v334 = vld [vmem:[%s1 + $0x990] sm:$0xff]
  %v335 = vld [vmem:[%s1 + $0x998] sm:$0xff]
  %v336 = vld [vmem:[%s1 + $0x9a0] sm:$0xff]
  %v337 = vld [vmem:[%s1 + $0x9a8] sm:$0xff]
  %v338 = vld [vmem:[%s1 + $0x9b0] sm:$0xff]
  %v339 = vld [vmem:[%s1 + $0x9b8] sm:$0xff]
  %v340 = vld [vmem:[%s1 + $0x9c0] sm:$0xff]
  %v341 = vld [vmem:[%s1 + $0x9c8] sm:$0xff]
  %v342 = vld [vmem:[%s1 + $0x9d0] sm:$0xff]
  %v343 = vld [vmem:[%s1 + $0x9d8] sm:$0xff]
  %v344 = vld [vmem:[%s1 + $0x9e0] sm:$0xff]
  %v345 = vld [vmem:[%s1 + $0x9e8] sm:$0xff]
  %v346 = vld [vmem:[%s1 + $0x9f0] sm:$0xff]
  %v347 = vld [vmem:[%s1 + $0x9f8] sm:$0xff]
  %v348 = vld [vmem:[%s1 + $0xa00] sm:$0xff]
  %v349 = vld [vmem:[%s1 + $0xa08] sm:$0xff]
  %v350 = vld [vmem:[%s1 + $0xa10] sm:$0xff]
  %v351 = vld [vmem:[%s1 + $0xa18] sm:$0xff]
  %v352 = vld [vmem:[%s1 + $0xa20] sm:$0xff]
  %v353 = vld [vmem:[%s1 + $0xa28] sm:$0xff]
  %v354 = vld [vmem:[%s1 + $0xa30] sm:$0xff]
  %v355 = vld [vmem:[%s1 + $0xa38] sm:$0xff]
  %v356 = vld [vmem:[%s1 + $0xa40] sm:$0xff]
  %v357 = vld [vmem:[%s1 + $0xa48] sm:$0xff]
  %v358 = vld [vmem:[%s1 + $0xa50] sm:$0xff]
  %v359 = vld [vmem:[%s1 + $0xa58] sm:$0xff]
  %v360 = vld [vmem:[%s1 + $0xa60] sm:$0xff]
  %v361 = vld [vmem:[%s1 + $0xa68] sm:$0xff]
  %v362 = vld [vmem:[%s1 + $0xa70] sm:$0xff]
  %v363 = vld [vmem:[%s1 + $0xa78] sm:$0xff]
  %v364 = vld [vmem:[%s1 + $0xa80] sm:$0xff]
  %v365 = vld [vmem:[%s1 + $0xa88] sm:$0xff]
  %v366 = vld [vmem:[%s1 + $0xa90] sm:$0xff]
  %v367 = vld [vmem:[%s1 + $0xa98] sm:$0xff]
  %v368 = vld [vmem:[%s1 + $0xaa0] sm:$0xff]
  %v369 = vld [vmem:[%s1 + $0xaa8] sm:$0xff]
  %v370 = vld [vmem:[%s1 + $0xab0] sm:$0xff]
  %v371 = vld [vmem:[%s1 + $0xab8] sm:$0xff]
  %v372 = vld [vmem:[%s1 + $0xac0] sm:$0xff]
  %v373 = vld [vmem:[%s1 + $0xac8] sm:$0xff]
  %v374 = vld [vmem:[%s1 + $0xad0] sm:$0xff]
  %v375 = vld [vmem:[%s1 + $0xad8] sm:$0xff]
  %v376 = vld [vmem:[%s1 + $0xae0] sm:$0xff]
  %v377 = vld [vmem:[%s1 + $0xae8] sm:$0xff]
  %v378 = vld [vmem:[%s1 + $0xaf0] sm:$0xff]
  %v379 = vld [vmem:[%s1 + $0xaf8] sm:$0xff]
  %v380 = vld [vmem:[%s1 + $0xb00] sm:$0xff]
  %v381 = vld [vmem:[%s1 + $0xb08] sm:$0xff]
  %v382 = vld [vmem:[%s1 + $0xb10] sm:$0xff]
  %v383 = vld [vmem:[%s1 + $0xb18] sm:$0xff]
  %v384 = vld [vmem:[%s1 + $0xb20] sm:$0xff]
  %v385 = vld [vmem:[%s1 + $0xb28] sm:$0xff]
  %v386 = vld [vmem:[%s1 + $0xb30] sm:$0xff]
  %v387 = vld [vmem:[%s1 + $0xb38] sm:$0xff]
  %v388 = vld [vmem:[%s1 + $0xb40] sm:$0xff]
  %v389 = vld [vmem:[%s1 + $0xb48] sm:$0xff]
  %v390 = vld [vmem:[%s1 + $0xb50] sm:$0xff]
  %v391 = vld [vmem:[%s1 + $0xb58] sm:$0xff]
  %v392 = vld [vmem:[%s1 + $0xb60] sm:$0xff]
  %v393 = vld [vmem:[%s1 + $0xb68] sm:$0xff]
  %v394 = vld [vmem:[%s1 + $0xb70] sm:$0xff]
  %v395 = vld [vmem:[%s1 + $0xb78] sm:$0xff]
  %v396 = vld [vmem:[%s1 + $0xb80] sm:$0xff]
  %v397 = vld [vmem:[%s1 + $0xb88] sm:$0xff]
  %v398 = vld [vmem:[%s1 + $0xb90] sm:$0xff]
  %v399 = vld [vmem:[%s1 + $0xb98] sm:$0xff]
  %v400 = vld [vmem:[%s1 + $0xba0] sm:$0xff]
  %v401 = vld [vmem:[%s1 + $0xba8] sm:$0xff]
  %v402 = vld [vmem:[%s1 + $0xbb0] sm:$0xff]
  %v403 = vld [vmem:[%s1 + $0xbb8] sm:$0xff]
  %v404 = vld [vmem:[%s1 + $0xbc0] sm:$0xff]
  %v405 = vld [vmem:[%s1 + $0xbc8] sm:$0xff]
  %v406 = vld [vmem:[%s1 + $0xbd0] sm:$0xff]
  %v407 = vld [vmem:[%s1 + $0xbd8] sm:$0xff]
  %v408 = vld [vmem:[%s1 + $0xbe0] sm:$0xff]
  %v409 = vld [vmem:[%s1 + $0xbe8] sm:$0xff]
  %v410 = vld [vmem:[%s1 + $0xbf0] sm:$0xff]
  %v411 = vld [vmem:[%s1 + $0xbf8] sm:$0xff]
  %v412 = vld [vmem:[%s1 + $0xc00] sm:$0xff]
  %v413 = vld [vmem:[%s1 + $0xc08] sm:$0xff]
  %v414 = vld [vmem:[%s1 + $0xc10] sm:$0xff]
  %v415 = vld [vmem:[%s1 + $0xc18] sm:$0xff]
  %v416 = vld [vmem:[%s1 + $0xc20] sm:$0xff]
  %v417 = vld [vmem:[%s1 + $0xc28] sm:$0xff]
  %v418 = vld [vmem:[%s1 + $0xc30] sm:$0xff]
  %v419 = vld [vmem:[%s1 + $0xc38] sm:$0xff]
  %v420 = vld [vmem:[%s1 + $0xc40] sm:$0xff]
  %v421 = vld [vmem:[%s1 + $0xc48] sm:$0xff]
  %v422 = vld [vmem:[%s1 + $0xc50] sm:$0xff]
  %v423 = vld [vmem:[%s1 + $0xc58] sm:$0xff]
  %v424 = vld [vmem:[%s1 + $0xc60] sm:$0xff]
  %v425 = vld [vmem:[%s1 + $0xc68] sm:$0xff]
  %v426 = vld [vmem:[%s1 + $0xc70] sm:$0xff]
  %v427 = vld [vmem:[%s1 + $0xc78] sm:$0xff]
  %v428 = vld [vmem:[%s1 + $0xc80] sm:$0xff]
  %v429 = vld [vmem:[%s1 + $0xc88] sm:$0xff]
  %v430 = vld [vmem:[%s1 + $0xc90] sm:$0xff]
  %v431 = vld [vmem:[%s1 + $0xc98] sm:$0xff]
  %v432 = vld [vmem:[%s1 + $0xca0] sm:$0xff]
  %v433 = vld [vmem:[%s1 + $0xca8] sm:$0xff]
  %v434 = vld [vmem:[%s1 + $0xcb0] sm:$0xff]
  %v435 = vld [vmem:[%s1 + $0xcb8] sm:$0xff]
  %v436 = vld [vmem:[%s1 + $0xcc0] sm:$0xff]
  %v437 = vld [vmem:[%s1 + $0xcc8] sm:$0xff]
  %v438 = vld [vmem:[%s1 + $0xcd0] sm:$0xff]
  %v439 = vld [vmem:[%s1 + $0xcd8] sm:$0xff]
  %v440 = vld [vmem:[%s1 + $0xce0] sm:$0xff]
  %v441 = vld [vmem:[%s1 + $0xce8] sm:$0xff]
  %v442 = vld [vmem:[%s1 + $0xcf0] sm:$0xff]
  %v443 = vld [vmem:[%s1 + $0xcf8] sm:$0xff]
  %v444 = vld [vmem:[%s1 + $0xd00] sm:$0xff]
  %v445 = vld [vmem:[%s1 + $0xd08] sm:$0xff]
  %v446 = vld [vmem:[%s1 + $0xd10] sm:$0xff]
  %v447 = vld [vmem:[%s1 + $0xd18] sm:$0xff]
  %v448 = vld [vmem:[%s1 + $0xd20] sm:$0xff]
  %v449 = vld [vmem:[%s1 + $0xd28] sm:$0xff]
  %v450 = vld [vmem:[%s1 + $0xd30] sm:$0xff]
  %v451 = vld [vmem:[%s1 + $0xd38] sm:$0xff]
  %v452 = vld [vmem:[%s1 + $0xd40] sm:$0xff]
  %v453 = vld [vmem:[%s1 + $0xd48] sm:$0xff]
  %v454 = vld [vmem:[%s1 + $0xd50] sm:$0xff]
  %v455 = vld [vmem:[%s1 + $0xd58] sm:$0xff]
  %v456 = vld [vmem:[%s1 + $0xd60] sm:$0xff]
  %v457 = vld [vmem:[%s1 + $0xd68] sm:$0xff]
  %v458 = vld [vmem:[%s1 + $0xd70] sm:$0xff]
  %v459 = vld [vmem:[%s1 + $0xd78] sm:$0xff]
  %v460 = vld [vmem:[%s1 + $0xd80] sm:$0xff]
  %v461 = vld [vmem:[%s1 + $0xd88] sm:$0xff]
  %v462 = vld [vmem:[%s1 + $0xd90] sm:$0xff]
  %v463 = vld [vmem:[%s1 + $0xd98] sm:$0xff]
  %v464 = vld [vmem:[%s1 + $0xda0] sm:$0xff]
  %v465 = vld [vmem:[%s1 + $0xda8] sm:$0xff]
  %v466 = vld [vmem:[%s1 + $0xdb0] sm:$0xff]
  %v467 = vld [vmem:[%s1 + $0xdb8] sm:$0xff]
  %v468 = vld [vmem:[%s1 + $0xdc0] sm:$0xff]
  %v469 = vld [vmem:[%s1 + $0xdc8] sm:$0xff]
  %v470 = vld [vmem:[%s1 + $0xdd0] sm:$0xff]
  %v471 = vld [vmem:[%s1 + $0xdd8] sm:$0xff]
  %v472 = vld [vmem:[%s1 + $0xde0] sm:$0xff]
  %v473 = vld [vmem:[%s1 + $0xde8] sm:$0xff]
  %v474 = vld [vmem:[%s1 + $0xdf0] sm:$0xff]
  %v475 = vld [vmem:[%s1 + $0xdf8] sm:$0xff]
  %v476 = vld [vmem:[%s1 + $0xe00] sm:$0xff]
  %v477 = vld [vmem:[%s1 + $0xe08] sm:$0xff]
  %v478 = vld [vmem:[%s1 + $0xe10] sm:$0xff]
  %v479 = vld [vmem:[%s1 + $0xe18] sm:$0xff]
  %v480 = vld [vmem:[%s1 + $0xe20] sm:$0xff]
  %v481 = vld [vmem:[%s1 + $0xe28] sm:$0xff]
  %v482 = vld [vmem:[%s1 + $0xe30] sm:$0xff]
  %v483 = vld [vmem:[%s1 + $0xe38] sm:$0xff]
  %v484 = vld [vmem:[%s1 + $0xe40] sm:$0xff]
  %v485 = vld [vmem:[%s1 + $0xe48] sm:$0xff]
  %v486 = vld [vmem:[%s1 + $0xe50] sm:$0xff]
  %v487 = vld [vmem:[%s1 + $0xe58] sm:$0xff]
  %v488 = vld [vmem:[%s1 + $0xe60] sm:$0xff]
  %v489 = vld [vmem:[%s1 + $0xe68] sm:$0xff]
  %v490 = vld [vmem:[%s1 + $0xe70] sm:$0xff]
  %v491 = vld [vmem:[%s1 + $0xe78] sm:$0xff]
  %v492 = vld [vmem:[%s1 + $0xe80] sm:$0xff]
  %v493 = vld [vmem:[%s1 + $0xe88] sm:$0xff]
  %v494 = vld [vmem:[%s1 + $0xe90] sm:$0xff]
  %v495 = vld [vmem:[%s1 + $0xe98] sm:$0xff]
  %v496 = vld [vmem:[%s1 + $0xea0] sm:$0xff]
  %v497 = vld [vmem:[%s1 + $0xea8] sm:$0xff]
  %v498 = vld [vmem:[%s1 + $0xeb0] sm:$0xff]
  %v499 = vld [vmem:[%s1 + $0xeb8] sm:$0xff]
  %v500 = vld [vmem:[%s1 + $0xec0] sm:$0xff]
  %v501 = vld [vmem:[%s1 + $0xec8] sm:$0xff]
  %v502 = vld [vmem:[%s1 + $0xed0] sm:$0xff]
  %v503 = vld [vmem:[%s1 + $0xed8] sm:$0xff]
  %v504 = vld [vmem:[%s1 + $0xee0] sm:$0xff]
  %v505 = vld [vmem:[%s1 + $0xee8] sm:$0xff]
  %v506 = vld [vmem:[%s1 + $0xef0] sm:$0xff]
  %v507 = vld [vmem:[%s1 + $0xef8] sm:$0xff]
  %v508 = vld [vmem:[%s1 + $0xf00] sm:$0xff]
  %v509 = vld [vmem:[%s1 + $0xf08] sm:$0xff]
  %v510 = vld [vmem:[%s1 + $0xf10] sm:$0xff]
  %v511 = vld [vmem:[%s1 + $0xf18] sm:$0xff]
  %v512 = vld [vmem:[%s1 + $0xf20] sm:$0xff]
  %v513 = vld [vmem:[%s1 + $0xf28] sm:$0xff]
  %v514 = vld [vmem:[%s1 + $0xf30] sm:$0xff]
  %v515 = vld [vmem:[%s1 + $0xf38] sm:$0xff]
  %v516 = vld [vmem:[%s1 + $0xf40] sm:$0xff]
  %v517 = vld [vmem:[%s1 + $0xf48] sm:$0xff]
  %v518 = vld [vmem:[%s1 + $0xf50] sm:$0xff]
  %v519 = vld [vmem:[%s1 + $0xf58] sm:$0xff]
  %v520 = vld [vmem:[%s1 + $0xf60] sm:$0xff]
  %v521 = vld [vmem:[%s1 + $0xf68] sm:$0xff]
  %v522 = vld [vmem:[%s1 + $0xf70] sm:$0xff]
  %v523 = vld [vmem:[%s1 + $0xf78] sm:$0xff]
  %v524 = vld [vmem:[%s1 + $0xf80] sm:$0xff]
  %v525 = vld [vmem:[%s1 + $0xf88] sm:$0xff]
  %v526 = vld [vmem:[%s1 + $0xf90] sm:$0xff]
  %v527 = vld [vmem:[%s1 + $0xf98] sm:$0xff]
  %v528 = vld [vmem:[%s1 + $0xfa0] sm:$0xff]
  %v529 = vld [vmem:[%s1 + $0xfa8] sm:$0xff]
  %v530 = vld [vmem:[%s1 + $0xfb0] sm:$0xff]
  %v531 = vld [vmem:[%s1 + $0xfb8] sm:$0xff]
  %v532 = vld [vmem:[%s1 + $0xfc0] sm:$0xff]
  %v533 = vld [vmem:[%s1 + $0xfc8] sm:$0xff]
  %v534 = vld [vmem:[%s1 + $0xfd0] sm:$0xff]
  %v535 = vld [vmem:[%s1 + $0xfd8] sm:$0xff]
  %v536 = vld [vmem:[%s1 + $0xfe0] sm:$0xff]
  %v537 = vld [vmem:[%s1 + $0xfe8] sm:$0xff]
  %v538 = vld [vmem:[%s1 + $0xff0] sm:$0xff]
  %v539 = vld [vmem:[%s1 + $0xff8] sm:$0xff]
  %v540 = vld [vmem:[%s0] sm:$0xff]
  %v541 = vld [vmem:[%s0 + $0x8] sm:$0xff]
  %v542 = vld [vmem:[%s0 + $0x10] sm:$0xff]
  %v543 = vld [vmem:[%s0 + $0x18] sm:$0xff]
  %v548 = vcombine.high %v540, %v540
  %v550 = vunpack.c.l.s4 1983009808
  %v551 = vunpack.c.0.s8 %v550
  %v552 = vlaneseq
  %v553 = vshrl.u32 %v552, 7
  %v554 = vsub.s32 %v551, %v553
  %v555 = vrot.slane %v540, %v554
  %v557 = vunpack.c.l.s4 1983009808
  %v558 = vunpack.c.0.s8 %v557
  %v559 = vlaneseq
  %v560 = vshrl.u32 %v559, 7
  %v561 = vsub.s32 %v558, %v560
  %v562 = vrot.slane %v548, %v561
  %v563 = vcombine.high %v555, %v555
  %v564 = vcombine.high %v562, %v562
  %v565 = vcombine.high %v541, %v541
  %v567 = vunpack.c.l.s4 1983009808
  %v568 = vunpack.c.0.s8 %v567
  %v569 = vlaneseq
  %v570 = vshrl.u32 %v569, 7
  %v571 = vsub.s32 %v568, %v570
  %v572 = vrot.slane %v541, %v571
  %v574 = vunpack.c.l.s4 1983009808
  %v575 = vunpack.c.0.s8 %v574
  %v576 = vlaneseq
  %v577 = vshrl.u32 %v576, 7
  %v578 = vsub.s32 %v575, %v577
  %v579 = vrot.slane %v565, %v578
  %v580 = vcombine.high %v572, %v572
  %v581 = vcombine.high %v579, %v579
  %v582 = vcombine.high %v542, %v542
  %v584 = vunpack.c.l.s4 1983009808
  %v585 = vunpack.c.0.s8 %v584
  %v586 = vlaneseq
  %v587 = vshrl.u32 %v586, 7
  %v588 = vsub.s32 %v585, %v587
  %v589 = vrot.slane %v542, %v588
  %v591 = vunpack.c.l.s4 1983009808
  %v592 = vunpack.c.0.s8 %v591
  %v593 = vlaneseq
  %v594 = vshrl.u32 %v593, 7
  %v595 = vsub.s32 %v592, %v594
  %v596 = vrot.slane %v582, %v595
  %v597 = vcombine.high %v589, %v589
  %v598 = vcombine.high %v596, %v596
  %v599 = vcombine.high %v543, %v543
  %v601 = vunpack.c.l.s4 1983009808
  %v602 = vunpack.c.0.s8 %v601
  %v603 = vlaneseq
  %v604 = vshrl.u32 %v603, 7
  %v605 = vsub.s32 %v602, %v604
  %v606 = vrot.slane %v543, %v605
  %v608 = vunpack.c.l.s4 1983009808
  %v609 = vunpack.c.0.s8 %v608
  %v610 = vlaneseq
  %v611 = vshrl.u32 %v610, 7
  %v612 = vsub.s32 %v609, %v611
  %v613 = vrot.slane %v599, %v612
  %v614 = vcombine.high %v606, %v606
  %v615 = vcombine.high %v613, %v613
  %632 = vmatprep.subr.mxu0 %v59
  %633 = vmatpush1.msra.mxu0 %v58
  %634 = vmatprep.subr.mxu0 %v57
  %635 = vmatpush1.msra.mxu0 %v56
  %636 = vmatprep.subr.mxu0 %v55
  %637 = vmatpush1.msra.mxu0 %v54
  %638 = vmatprep.subr.mxu0 %v53
  %639 = vmatpush1.msra.mxu0 %v52
  %640 = vmatprep.subr.mxu0 %v51
  %641 = vmatpush1.msra.mxu0 %v50
  %642 = vmatprep.subr.mxu0 %v49
  %643 = vmatpush1.msra.mxu0 %v48
  %644 = vmatprep.subr.mxu0 %v47
  %645 = vmatpush1.msra.mxu0 %v46
  %646 = vmatprep.subr.mxu0 %v45
  %647 = vmatpush1.msra.mxu0 %v44
  %648 = vmatprep.subr.mxu0 %v43
  %649 = vmatpush1.msra.mxu0 %v42
  %650 = vmatprep.subr.mxu0 %v41
  %651 = vmatpush1.msra.mxu0 %v40
  %652 = vmatprep.subr.mxu0 %v39
  %653 = vmatpush1.msra.mxu0 %v38
  %654 = vmatprep.subr.mxu0 %v37
  %655 = vmatpush1.msra.mxu0 %v36
  %656 = vmatprep.subr.mxu0 %v35
  %657 = vmatpush1.msra.mxu0 %v34
  %658 = vmatprep.subr.mxu0 %v33
  %659 = vmatpush1.msra.mxu0 %v32
  %660 = vmatprep.subr.mxu0 %v31
  %661 = vmatpush1.msra.mxu0 %v30
  %662 = vmatprep.subr.mxu0 %v29
  %663 = vmatpush1.msra.mxu0 %v28
  %664 = vmatprep.subr.mxu0 %v91
  %665 = vmatpush2.msra.mxu0 %v90
  %666 = vmatprep.subr.mxu0 %v89
  %667 = vmatpush2.msra.mxu0 %v88
  %668 = vmatprep.subr.mxu0 %v87
  %669 = vmatpush2.msra.mxu0 %v86
  %670 = vmatprep.subr.mxu0 %v85
  %671 = vmatpush2.msra.mxu0 %v84
  %672 = vmatprep.subr.mxu0 %v83
  %673 = vmatpush2.msra.mxu0 %v82
  %674 = vmatprep.subr.mxu0 %v81
  %675 = vmatpush2.msra.mxu0 %v80
  %676 = vmatprep.subr.mxu0 %v79
  %677 = vmatpush2.msra.mxu0 %v78
  %678 = vmatprep.subr.mxu0 %v77
  %679 = vmatpush2.msra.mxu0 %v76
  %680 = vmatprep.subr.mxu0 %v75
  %681 = vmatpush2.msra.mxu0 %v74
  %682 = vmatprep.subr.mxu0 %v73
  %683 = vmatpush2.msra.mxu0 %v72
  %684 = vmatprep.subr.mxu0 %v71
  %685 = vmatpush2.msra.mxu0 %v70
  %686 = vmatprep.subr.mxu0 %v69
  %687 = vmatpush2.msra.mxu0 %v68
  %688 = vmatprep.subr.mxu0 %v67
  %689 = vmatpush2.msra.mxu0 %v66
  %690 = vmatprep.subr.mxu0 %v65
  %691 = vmatpush2.msra.mxu0 %v64
  %692 = vmatprep.subr.mxu0 %v63
  %693 = vmatpush2.msra.mxu0 %v62
  %694 = vmatprep.subr.mxu0 %v61
  %695 = vmatpush2.msra.mxu0 %v60
  %696 = vmatprep.mubr.f32.mxu0 %v563
  %697 = vmatmul.mubr.f32.gmra.mxu0 %v555
  %v698 = vpop.f32.mrf.mxu0
  %v699 = vadd.f32 0.0, %v698
  %v700 = vpop.f32.mrf.mxu0
  %v701 = vadd.f32 0.0, %v700
  %702 = vdwg.mxu0
  %703 = vmatprep.subr.mxu0 %v123
  %704 = vmatpush1.msra.mxu0 %v122
  %705 = vmatprep.subr.mxu0 %v121
  %706 = vmatpush1.msra.mxu0 %v120
  %707 = vmatprep.subr.mxu0 %v119
  %708 = vmatpush1.msra.mxu0 %v118
  %709 = vmatprep.subr.mxu0 %v117
  %710 = vmatpush1.msra.mxu0 %v116
  %711 = vmatprep.subr.mxu0 %v115
  %712 = vmatpush1.msra.mxu0 %v114
  %713 = vmatprep.subr.mxu0 %v113
  %714 = vmatpush1.msra.mxu0 %v112
  %715 = vmatprep.subr.mxu0 %v111
  %716 = vmatpush1.msra.mxu0 %v110
  %717 = vmatprep.subr.mxu0 %v109
  %718 = vmatpush1.msra.mxu0 %v108
  %719 = vmatprep.subr.mxu0 %v107
  %720 = vmatpush1.msra.mxu0 %v106
  %721 = vmatprep.subr.mxu0 %v105
  %722 = vmatpush1.msra.mxu0 %v104
  %723 = vmatprep.subr.mxu0 %v103
  %724 = vmatpush1.msra.mxu0 %v102
  %725 = vmatprep.subr.mxu0 %v101
  %726 = vmatpush1.msra.mxu0 %v100
  %727 = vmatprep.subr.mxu0 %v99
  %728 = vmatpush1.msra.mxu0 %v98
  %729 = vmatprep.subr.mxu0 %v97
  %730 = vmatpush1.msra.mxu0 %v96
  %731 = vmatprep.subr.mxu0 %v95
  %732 = vmatpush1.msra.mxu0 %v94
  %733 = vmatprep.subr.mxu0 %v93
  %734 = vmatpush1.msra.mxu0 %v92
  %735 = vmatprep.subr.mxu0 %v155
  %736 = vmatpush2.msra.mxu0 %v154
  %737 = vmatprep.subr.mxu0 %v153
  %738 = vmatpush2.msra.mxu0 %v152
  %739 = vmatprep.subr.mxu0 %v151
  %740 = vmatpush2.msra.mxu0 %v150
  %741 = vmatprep.subr.mxu0 %v149
  %742 = vmatpush2.msra.mxu0 %v148
  %743 = vmatprep.subr.mxu0 %v147
  %744 = vmatpush2.msra.mxu0 %v146
  %745 = vmatprep.subr.mxu0 %v145
  %746 = vmatpush2.msra.mxu0 %v144
  %747 = vmatprep.subr.mxu0 %v143
  %748 = vmatpush2.msra.mxu0 %v142
  %749 = vmatprep.subr.mxu0 %v141
  %750 = vmatpush2.msra.mxu0 %v140
  %751 = vmatprep.subr.mxu0 %v139
  %752 = vmatpush2.msra.mxu0 %v138
  %753 = vmatprep.subr.mxu0 %v137
  %754 = vmatpush2.msra.mxu0 %v136
  %755 = vmatprep.subr.mxu0 %v135
  %756 = vmatpush2.msra.mxu0 %v134
  %757 = vmatprep.subr.mxu0 %v133
  %758 = vmatpush2.msra.mxu0 %v132
  %759 = vmatprep.subr.mxu0 %v131
  %760 = vmatpush2.msra.mxu0 %v130
  %761 = vmatprep.subr.mxu0 %v129
  %762 = vmatpush2.msra.mxu0 %v128
  %763 = vmatprep.subr.mxu0 %v127
  %764 = vmatpush2.msra.mxu0 %v126
  %765 = vmatprep.subr.mxu0 %v125
  %766 = vmatpush2.msra.mxu0 %v124
  %767 = vmatprep.mubr.f32.mxu0 %v564
  %768 = vmatmul.mubr.f32.gmra.mxu0 %v562
  %v769 = vpop.f32.mrf.mxu0
  %v770 = vadd.f32 %v699, %v769
  %v771 = vpop.f32.mrf.mxu0
  %v772 = vadd.f32 %v701, %v771
  %773 = vdwg.mxu0
  %774 = vmatprep.subr.mxu0 %v187
  %775 = vmatpush1.msra.mxu0 %v186
  %776 = vmatprep.subr.mxu0 %v185
  %777 = vmatpush1.msra.mxu0 %v184
  %778 = vmatprep.subr.mxu0 %v183
  %779 = vmatpush1.msra.mxu0 %v182
  %780 = vmatprep.subr.mxu0 %v181
  %781 = vmatpush1.msra.mxu0 %v180
  %782 = vmatprep.subr.mxu0 %v179
  %783 = vmatpush1.msra.mxu0 %v178
  %784 = vmatprep.subr.mxu0 %v177
  %785 = vmatpush1.msra.mxu0 %v176
  %786 = vmatprep.subr.mxu0 %v175
  %787 = vmatpush1.msra.mxu0 %v174
  %788 = vmatprep.subr.mxu0 %v173
  %789 = vmatpush1.msra.mxu0 %v172
  %790 = vmatprep.subr.mxu0 %v171
  %791 = vmatpush1.msra.mxu0 %v170
  %792 = vmatprep.subr.mxu0 %v169
  %793 = vmatpush1.msra.mxu0 %v168
  %794 = vmatprep.subr.mxu0 %v167
  %795 = vmatpush1.msra.mxu0 %v166
  %796 = vmatprep.subr.mxu0 %v165
  %797 = vmatpush1.msra.mxu0 %v164
  %798 = vmatprep.subr.mxu0 %v163
  %799 = vmatpush1.msra.mxu0 %v162
  %800 = vmatprep.subr.mxu0 %v161
  %801 = vmatpush1.msra.mxu0 %v160
  %802 = vmatprep.subr.mxu0 %v159
  %803 = vmatpush1.msra.mxu0 %v158
  %804 = vmatprep.subr.mxu0 %v157
  %805 = vmatpush1.msra.mxu0 %v156
  %806 = vmatprep.subr.mxu0 %v219
  %807 = vmatpush2.msra.mxu0 %v218
  %808 = vmatprep.subr.mxu0 %v217
  %809 = vmatpush2.msra.mxu0 %v216
  %810 = vmatprep.subr.mxu0 %v215
  %811 = vmatpush2.msra.mxu0 %v214
  %812 = vmatprep.subr.mxu0 %v213
  %813 = vmatpush2.msra.mxu0 %v212
  %814 = vmatprep.subr.mxu0 %v211
  %815 = vmatpush2.msra.mxu0 %v210
  %816 = vmatprep.subr.mxu0 %v209
  %817 = vmatpush2.msra.mxu0 %v208
  %818 = vmatprep.subr.mxu0 %v207
  %819 = vmatpush2.msra.mxu0 %v206
  %820 = vmatprep.subr.mxu0 %v205
  %821 = vmatpush2.msra.mxu0 %v204
  %822 = vmatprep.subr.mxu0 %v203
  %823 = vmatpush2.msra.mxu0 %v202
  %824 = vmatprep.subr.mxu0 %v201
  %825 = vmatpush2.msra.mxu0 %v200
  %826 = vmatprep.subr.mxu0 %v199
  %827 = vmatpush2.msra.mxu0 %v198
  %828 = vmatprep.subr.mxu0 %v197
  %829 = vmatpush2.msra.mxu0 %v196
  %830 = vmatprep.subr.mxu0 %v195
  %831 = vmatpush2.msra.mxu0 %v194
  %832 = vmatprep.subr.mxu0 %v193
  %833 = vmatpush2.msra.mxu0 %v192
  %834 = vmatprep.subr.mxu0 %v191
  %835 = vmatpush2.msra.mxu0 %v190
  %836 = vmatprep.subr.mxu0 %v189
  %837 = vmatpush2.msra.mxu0 %v188
  %838 = vmatprep.mubr.f32.mxu0 %v580
  %839 = vmatmul.mubr.f32.gmra.mxu0 %v572
  %v840 = vpop.f32.mrf.mxu0
  %v841 = vadd.f32 %v770, %v840
  %v842 = vpop.f32.mrf.mxu0
  %v843 = vadd.f32 %v772, %v842
  %844 = vdwg.mxu0
  %845 = vmatprep.subr.mxu0 %v251
  %846 = vmatpush1.msra.mxu0 %v250
  %847 = vmatprep.subr.mxu0 %v249
  %848 = vmatpush1.msra.mxu0 %v248
  %849 = vmatprep.subr.mxu0 %v247
  %850 = vmatpush1.msra.mxu0 %v246
  %851 = vmatprep.subr.mxu0 %v245
  %852 = vmatpush1.msra.mxu0 %v244
  %853 = vmatprep.subr.mxu0 %v243
  %854 = vmatpush1.msra.mxu0 %v242
  %855 = vmatprep.subr.mxu0 %v241
  %856 = vmatpush1.msra.mxu0 %v240
  %857 = vmatprep.subr.mxu0 %v239
  %858 = vmatpush1.msra.mxu0 %v238
  %859 = vmatprep.subr.mxu0 %v237
  %860 = vmatpush1.msra.mxu0 %v236
  %861 = vmatprep.subr.mxu0 %v235
  %862 = vmatpush1.msra.mxu0 %v234
  %863 = vmatprep.subr.mxu0 %v233
  %864 = vmatpush1.msra.mxu0 %v232
  %865 = vmatprep.subr.mxu0 %v231
  %866 = vmatpush1.msra.mxu0 %v230
  %867 = vmatprep.subr.mxu0 %v229
  %868 = vmatpush1.msra.mxu0 %v228
  %869 = vmatprep.subr.mxu0 %v227
  %870 = vmatpush1.msra.mxu0 %v226
  %871 = vmatprep.subr.mxu0 %v225
  %872 = vmatpush1.msra.mxu0 %v224
  %873 = vmatprep.subr.mxu0 %v223
  %874 = vmatpush1.msra.mxu0 %v222
  %875 = vmatprep.subr.mxu0 %v221
  %876 = vmatpush1.msra.mxu0 %v220
  %877 = vmatprep.subr.mxu0 %v283
  %878 = vmatpush2.msra.mxu0 %v282
  %879 = vmatprep.subr.mxu0 %v281
  %880 = vmatpush2.msra.mxu0 %v280
  %881 = vmatprep.subr.mxu0 %v279
  %882 = vmatpush2.msra.mxu0 %v278
  %883 = vmatprep.subr.mxu0 %v277
  %884 = vmatpush2.msra.mxu0 %v276
  %885 = vmatprep.subr.mxu0 %v275
  %886 = vmatpush2.msra.mxu0 %v274
  %887 = vmatprep.subr.mxu0 %v273
  %888 = vmatpush2.msra.mxu0 %v272
  %889 = vmatprep.subr.mxu0 %v271
  %890 = vmatpush2.msra.mxu0 %v270
  %891 = vmatprep.subr.mxu0 %v269
  %892 = vmatpush2.msra.mxu0 %v268
  %893 = vmatprep.subr.mxu0 %v267
  %894 = vmatpush2.msra.mxu0 %v266
  %895 = vmatprep.subr.mxu0 %v265
  %896 = vmatpush2.msra.mxu0 %v264
  %897 = vmatprep.subr.mxu0 %v263
  %898 = vmatpush2.msra.mxu0 %v262
  %899 = vmatprep.subr.mxu0 %v261
  %900 = vmatpush2.msra.mxu0 %v260
  %901 = vmatprep.subr.mxu0 %v259
  %902 = vmatpush2.msra.mxu0 %v258
  %903 = vmatprep.subr.mxu0 %v257
  %904 = vmatpush2.msra.mxu0 %v256
  %905 = vmatprep.subr.mxu0 %v255
  %906 = vmatpush2.msra.mxu0 %v254
  %907 = vmatprep.subr.mxu0 %v253
  %908 = vmatpush2.msra.mxu0 %v252
  %909 = vmatprep.mubr.f32.mxu0 %v581
  %910 = vmatmul.mubr.f32.gmra.mxu0 %v579
  %v911 = vpop.f32.mrf.mxu0
  %v912 = vadd.f32 %v841, %v911
  %v913 = vpop.f32.mrf.mxu0
  %v914 = vadd.f32 %v843, %v913
  %915 = vdwg.mxu0
  %916 = vmatprep.subr.mxu0 %v315
  %917 = vmatpush1.msra.mxu0 %v314
  %918 = vmatprep.subr.mxu0 %v313
  %919 = vmatpush1.msra.mxu0 %v312
  %920 = vmatprep.subr.mxu0 %v311
  %921 = vmatpush1.msra.mxu0 %v310
  %922 = vmatprep.subr.mxu0 %v309
  %923 = vmatpush1.msra.mxu0 %v308
  %924 = vmatprep.subr.mxu0 %v307
  %925 = vmatpush1.msra.mxu0 %v306
  %926 = vmatprep.subr.mxu0 %v305
  %927 = vmatpush1.msra.mxu0 %v304
  %928 = vmatprep.subr.mxu0 %v303
  %929 = vmatpush1.msra.mxu0 %v302
  %930 = vmatprep.subr.mxu0 %v301
  %931 = vmatpush1.msra.mxu0 %v300
  %932 = vmatprep.subr.mxu0 %v299
  %933 = vmatpush1.msra.mxu0 %v298
  %934 = vmatprep.subr.mxu0 %v297
  %935 = vmatpush1.msra.mxu0 %v296
  %936 = vmatprep.subr.mxu0 %v295
  %937 = vmatpush1.msra.mxu0 %v294
  %938 = vmatprep.subr.mxu0 %v293
  %939 = vmatpush1.msra.mxu0 %v292
  %940 = vmatprep.subr.mxu0 %v291
  %941 = vmatpush1.msra.mxu0 %v290
  %942 = vmatprep.subr.mxu0 %v289
  %943 = vmatpush1.msra.mxu0 %v288
  %944 = vmatprep.subr.mxu0 %v287
  %945 = vmatpush1.msra.mxu0 %v286
  %946 = vmatprep.subr.mxu0 %v285
  %947 = vmatpush1.msra.mxu0 %v284
  %948 = vmatprep.subr.mxu0 %v347
  %949 = vmatpush2.msra.mxu0 %v346
  %950 = vmatprep.subr.mxu0 %v345
  %951 = vmatpush2.msra.mxu0 %v344
  %952 = vmatprep.subr.mxu0 %v343
  %953 = vmatpush2.msra.mxu0 %v342
  %954 = vmatprep.subr.mxu0 %v341
  %955 = vmatpush2.msra.mxu0 %v340
  %956 = vmatprep.subr.mxu0 %v339
  %957 = vmatpush2.msra.mxu0 %v338
  %958 = vmatprep.subr.mxu0 %v337
  %959 = vmatpush2.msra.mxu0 %v336
  %960 = vmatprep.subr.mxu0 %v335
  %961 = vmatpush2.msra.mxu0 %v334
  %962 = vmatprep.subr.mxu0 %v333
  %963 = vmatpush2.msra.mxu0 %v332
  %964 = vmatprep.subr.mxu0 %v331
  %965 = vmatpush2.msra.mxu0 %v330
  %966 = vmatprep.subr.mxu0 %v329
  %967 = vmatpush2.msra.mxu0 %v328
  %968 = vmatprep.subr.mxu0 %v327
  %969 = vmatpush2.msra.mxu0 %v326
  %970 = vmatprep.subr.mxu0 %v325
  %971 = vmatpush2.msra.mxu0 %v324
  %972 = vmatprep.subr.mxu0 %v323
  %973 = vmatpush2.msra.mxu0 %v322
  %974 = vmatprep.subr.mxu0 %v321
  %975 = vmatpush2.msra.mxu0 %v320
  %976 = vmatprep.subr.mxu0 %v319
  %977 = vmatpush2.msra.mxu0 %v318
  %978 = vmatprep.subr.mxu0 %v317
  %979 = vmatpush2.msra.mxu0 %v316
  %980 = vmatprep.mubr.f32.mxu0 %v597
  %981 = vmatmul.mubr.f32.gmra.mxu0 %v589
  %v982 = vpop.f32.mrf.mxu0
  %v983 = vadd.f32 %v912, %v982
  %v984 = vpop.f32.mrf.mxu0
  %v985 = vadd.f32 %v914, %v984
  %986 = vdwg.mxu0
  %987 = vmatprep.subr.mxu0 %v379
  %988 = vmatpush1.msra.mxu0 %v378
  %989 = vmatprep.subr.mxu0 %v377
  %990 = vmatpush1.msra.mxu0 %v376
  %991 = vmatprep.subr.mxu0 %v375
  %992 = vmatpush1.msra.mxu0 %v374
  %993 = vmatprep.subr.mxu0 %v373
  %994 = vmatpush1.msra.mxu0 %v372
  %995 = vmatprep.subr.mxu0 %v371
  %996 = vmatpush1.msra.mxu0 %v370
  %997 = vmatprep.subr.mxu0 %v369
  %998 = vmatpush1.msra.mxu0 %v368
  %999 = vmatprep.subr.mxu0 %v367
  %1000 = vmatpush1.msra.mxu0 %v366
  %1001 = vmatprep.subr.mxu0 %v365
  %1002 = vmatpush1.msra.mxu0 %v364
  %1003 = vmatprep.subr.mxu0 %v363
  %1004 = vmatpush1.msra.mxu0 %v362
  %1005 = vmatprep.subr.mxu0 %v361
  %1006 = vmatpush1.msra.mxu0 %v360
  %1007 = vmatprep.subr.mxu0 %v359
  %1008 = vmatpush1.msra.mxu0 %v358
  %1009 = vmatprep.subr.mxu0 %v357
  %1010 = vmatpush1.msra.mxu0 %v356
  %1011 = vmatprep.subr.mxu0 %v355
  %1012 = vmatpush1.msra.mxu0 %v354
  %1013 = vmatprep.subr.mxu0 %v353
  %1014 = vmatpush1.msra.mxu0 %v352
  %1015 = vmatprep.subr.mxu0 %v351
  %1016 = vmatpush1.msra.mxu0 %v350
  %1017 = vmatprep.subr.mxu0 %v349
  %1018 = vmatpush1.msra.mxu0 %v348
  %1019 = vmatprep.subr.mxu0 %v411
  %1020 = vmatpush2.msra.mxu0 %v410
  %1021 = vmatprep.subr.mxu0 %v409
  %1022 = vmatpush2.msra.mxu0 %v408
  %1023 = vmatprep.subr.mxu0 %v407
  %1024 = vmatpush2.msra.mxu0 %v406
  %1025 = vmatprep.subr.mxu0 %v405
  %1026 = vmatpush2.msra.mxu0 %v404
  %1027 = vmatprep.subr.mxu0 %v403
  %1028 = vmatpush2.msra.mxu0 %v402
  %1029 = vmatprep.subr.mxu0 %v401
  %1030 = vmatpush2.msra.mxu0 %v400
  %1031 = vmatprep.subr.mxu0 %v399
  %1032 = vmatpush2.msra.mxu0 %v398
  %1033 = vmatprep.subr.mxu0 %v397
  %1034 = vmatpush2.msra.mxu0 %v396
  %1035 = vmatprep.subr.mxu0 %v395
  %1036 = vmatpush2.msra.mxu0 %v394
  %1037 = vmatprep.subr.mxu0 %v393
  %1038 = vmatpush2.msra.mxu0 %v392
  %1039 = vmatprep.subr.mxu0 %v391
  %1040 = vmatpush2.msra.mxu0 %v390
  %1041 = vmatprep.subr.mxu0 %v389
  %1042 = vmatpush2.msra.mxu0 %v388
  %1043 = vmatprep.subr.mxu0 %v387
  %1044 = vmatpush2.msra.mxu0 %v386
  %1045 = vmatprep.subr.mxu0 %v385
  %1046 = vmatpush2.msra.mxu0 %v384
  %1047 = vmatprep.subr.mxu0 %v383
  %1048 = vmatpush2.msra.mxu0 %v382
  %1049 = vmatprep.subr.mxu0 %v381
  %1050 = vmatpush2.msra.mxu0 %v380
  %1051 = vmatprep.mubr.f32.mxu0 %v598
  %1052 = vmatmul.mubr.f32.gmra.mxu0 %v596
  %v1053 = vpop.f32.mrf.mxu0
  %v1054 = vadd.f32 %v983, %v1053
  %v1055 = vpop.f32.mrf.mxu0
  %v1056 = vadd.f32 %v985, %v1055
  %1057 = vdwg.mxu0
  %1058 = vmatprep.subr.mxu0 %v443
  %1059 = vmatpush1.msra.mxu0 %v442
  %1060 = vmatprep.subr.mxu0 %v441
  %1061 = vmatpush1.msra.mxu0 %v440
  %1062 = vmatprep.subr.mxu0 %v439
  %1063 = vmatpush1.msra.mxu0 %v438
  %1064 = vmatprep.subr.mxu0 %v437
  %1065 = vmatpush1.msra.mxu0 %v436
  %1066 = vmatprep.subr.mxu0 %v435
  %1067 = vmatpush1.msra.mxu0 %v434
  %1068 = vmatprep.subr.mxu0 %v433
  %1069 = vmatpush1.msra.mxu0 %v432
  %1070 = vmatprep.subr.mxu0 %v431
  %1071 = vmatpush1.msra.mxu0 %v430
  %1072 = vmatprep.subr.mxu0 %v429
  %1073 = vmatpush1.msra.mxu0 %v428
  %1074 = vmatprep.subr.mxu0 %v427
  %1075 = vmatpush1.msra.mxu0 %v426
  %1076 = vmatprep.subr.mxu0 %v425
  %1077 = vmatpush1.msra.mxu0 %v424
  %1078 = vmatprep.subr.mxu0 %v423
  %1079 = vmatpush1.msra.mxu0 %v422
  %1080 = vmatprep.subr.mxu0 %v421
  %1081 = vmatpush1.msra.mxu0 %v420
  %1082 = vmatprep.subr.mxu0 %v419
  %1083 = vmatpush1.msra.mxu0 %v418
  %1084 = vmatprep.subr.mxu0 %v417
  %1085 = vmatpush1.msra.mxu0 %v416
  %1086 = vmatprep.subr.mxu0 %v415
  %1087 = vmatpush1.msra.mxu0 %v414
  %1088 = vmatprep.subr.mxu0 %v413
  %1089 = vmatpush1.msra.mxu0 %v412
  %1090 = vmatprep.subr.mxu0 %v475
  %1091 = vmatpush2.msra.mxu0 %v474
  %1092 = vmatprep.subr.mxu0 %v473
  %1093 = vmatpush2.msra.mxu0 %v472
  %1094 = vmatprep.subr.mxu0 %v471
  %1095 = vmatpush2.msra.mxu0 %v470
  %1096 = vmatprep.subr.mxu0 %v469
  %1097 = vmatpush2.msra.mxu0 %v468
  %1098 = vmatprep.subr.mxu0 %v467
  %1099 = vmatpush2.msra.mxu0 %v466
  %1100 = vmatprep.subr.mxu0 %v465
  %1101 = vmatpush2.msra.mxu0 %v464
  %1102 = vmatprep.subr.mxu0 %v463
  %1103 = vmatpush2.msra.mxu0 %v462
  %1104 = vmatprep.subr.mxu0 %v461
  %1105 = vmatpush2.msra.mxu0 %v460
  %1106 = vmatprep.subr.mxu0 %v459
  %1107 = vmatpush2.msra.mxu0 %v458
  %1108 = vmatprep.subr.mxu0 %v457
  %1109 = vmatpush2.msra.mxu0 %v456
  %1110 = vmatprep.subr.mxu0 %v455
  %1111 = vmatpush2.msra.mxu0 %v454
  %1112 = vmatprep.subr.mxu0 %v453
  %1113 = vmatpush2.msra.mxu0 %v452
  %1114 = vmatprep.subr.mxu0 %v451
  %1115 = vmatpush2.msra.mxu0 %v450
  %1116 = vmatprep.subr.mxu0 %v449
  %1117 = vmatpush2.msra.mxu0 %v448
  %1118 = vmatprep.subr.mxu0 %v447
  %1119 = vmatpush2.msra.mxu0 %v446
  %1120 = vmatprep.subr.mxu0 %v445
  %1121 = vmatpush2.msra.mxu0 %v444
  %1122 = vmatprep.mubr.f32.mxu0 %v614
  %1123 = vmatmul.mubr.f32.gmra.mxu0 %v606
  %v1124 = vpop.f32.mrf.mxu0
  %v1125 = vadd.f32 %v1054, %v1124
  %v1126 = vpop.f32.mrf.mxu0
  %v1127 = vadd.f32 %v1056, %v1126
  %1128 = vdwg.mxu0
  %1129 = vmatprep.subr.mxu0 %v507
  %1130 = vmatpush1.msra.mxu0 %v506
  %1131 = vmatprep.subr.mxu0 %v505
  %1132 = vmatpush1.msra.mxu0 %v504
  %1133 = vmatprep.subr.mxu0 %v503
  %1134 = vmatpush1.msra.mxu0 %v502
  %1135 = vmatprep.subr.mxu0 %v501
  %1136 = vmatpush1.msra.mxu0 %v500
  %1137 = vmatprep.subr.mxu0 %v499
  %1138 = vmatpush1.msra.mxu0 %v498
  %1139 = vmatprep.subr.mxu0 %v497
  %1140 = vmatpush1.msra.mxu0 %v496
  %1141 = vmatprep.subr.mxu0 %v495
  %1142 = vmatpush1.msra.mxu0 %v494
  %1143 = vmatprep.subr.mxu0 %v493
  %1144 = vmatpush1.msra.mxu0 %v492
  %1145 = vmatprep.subr.mxu0 %v491
  %1146 = vmatpush1.msra.mxu0 %v490
  %1147 = vmatprep.subr.mxu0 %v489
  %1148 = vmatpush1.msra.mxu0 %v488
  %1149 = vmatprep.subr.mxu0 %v487
  %1150 = vmatpush1.msra.mxu0 %v486
  %1151 = vmatprep.subr.mxu0 %v485
  %1152 = vmatpush1.msra.mxu0 %v484
  %1153 = vmatprep.subr.mxu0 %v483
  %1154 = vmatpush1.msra.mxu0 %v482
  %1155 = vmatprep.subr.mxu0 %v481
  %1156 = vmatpush1.msra.mxu0 %v480
  %1157 = vmatprep.subr.mxu0 %v479
  %1158 = vmatpush1.msra.mxu0 %v478
  %1159 = vmatprep.subr.mxu0 %v477
  %1160 = vmatpush1.msra.mxu0 %v476
  %1161 = vmatprep.subr.mxu0 %v539
  %1162 = vmatpush2.msra.mxu0 %v538
  %1163 = vmatprep.subr.mxu0 %v537
  %1164 = vmatpush2.msra.mxu0 %v536
  %1165 = vmatprep.subr.mxu0 %v535
  %1166 = vmatpush2.msra.mxu0 %v534
  %1167 = vmatprep.subr.mxu0 %v533
  %1168 = vmatpush2.msra.mxu0 %v532
  %1169 = vmatprep.subr.mxu0 %v531
  %1170 = vmatpush2.msra.mxu0 %v530
  %1171 = vmatprep.subr.mxu0 %v529
  %1172 = vmatpush2.msra.mxu0 %v528
  %1173 = vmatprep.subr.mxu0 %v527
  %1174 = vmatpush2.msra.mxu0 %v526
  %1175 = vmatprep.subr.mxu0 %v525
  %1176 = vmatpush2.msra.mxu0 %v524
  %1177 = vmatprep.subr.mxu0 %v523
  %1178 = vmatpush2.msra.mxu0 %v522
  %1179 = vmatprep.subr.mxu0 %v521
  %1180 = vmatpush2.msra.mxu0 %v520
  %1181 = vmatprep.subr.mxu0 %v519
  %1182 = vmatpush2.msra.mxu0 %v518
  %1183 = vmatprep.subr.mxu0 %v517
  %1184 = vmatpush2.msra.mxu0 %v516
  %1185 = vmatprep.subr.mxu0 %v515
  %1186 = vmatpush2.msra.mxu0 %v514
  %1187 = vmatprep.subr.mxu0 %v513
  %1188 = vmatpush2.msra.mxu0 %v512
  %1189 = vmatprep.subr.mxu0 %v511
  %1190 = vmatpush2.msra.mxu0 %v510
  %1191 = vmatprep.subr.mxu0 %v509
  %1192 = vmatpush2.msra.mxu0 %v508
  %1193 = vmatprep.mubr.f32.mxu0 %v615
  %1194 = vmatmul.mubr.f32.gmra.mxu0 %v613
  %v1195 = vpop.f32.mrf.mxu0
  %v1196 = vadd.f32 %v1125, %v1195
  %v1197 = vpop.f32.mrf.mxu0
  %v1198 = vadd.f32 %v1127, %v1197
  %1199 = vdwg.mxu0
  %v1201 = vlaneseq
  %v1202 = vshrl.u32 %v1201, 7
  %v1203 = vsub.s32 0, %v1202
  %v1204 = vrot.slane %v26, %v1203
  %v1205 = vlaneseq
  %v1206 = vshrl.u32 %v1205, 7
  %v1207 = vsub.s32 1, %v1206
  %v1208 = vrot.slane %v26, %v1207
  %v1211 = vmul.f32 %v1196, %v1204
  %v1212 = vmul.f32 %v1198, %v1208
  %v1214 = vlaneseq
  %v1215 = vshrl.u32 %v1214, 7
  %v1216 = vsub.s32 0, %v1215
  %v1217 = vrot.slane %v27, %v1216
  %v1218 = vlaneseq
  %v1219 = vshrl.u32 %v1218, 7
  %v1220 = vsub.s32 1, %v1219
  %v1221 = vrot.slane %v27, %v1220
  %v1224 = vadd.f32 %v1211, %v1217
  %v1225 = vadd.f32 %v1212, %v1221
  %v1226 = vtanh.pop %v1224
  %v1227 = vtanh.pop %v1225
  %s1228 = scalar_lea.vmem %s0, 32
  %v1229 = vld [vmem:[%s1228] sm:$0xff]
  %v1230 = vld [vmem:[%s1228 + $0x8] sm:$0xff]
  %v1231 = vld [vmem:[%s1228 + $0x10] sm:$0xff]
  %v1232 = vld [vmem:[%s1228 + $0x18] sm:$0xff]
  %v1237 = vcombine.high %v1229, %v1229
  %v1239 = vunpack.c.l.s4 1983009808
  %v1240 = vunpack.c.0.s8 %v1239
  %v1241 = vlaneseq
  %v1242 = vshrl.u32 %v1241, 7
  %v1243 = vsub.s32 %v1240, %v1242
  %v1244 = vrot.slane %v1229, %v1243
  %v1246 = vunpack.c.l.s4 1983009808
  %v1247 = vunpack.c.0.s8 %v1246
  %v1248 = vlaneseq
  %v1249 = vshrl.u32 %v1248, 7
  %v1250 = vsub.s32 %v1247, %v1249
  %v1251 = vrot.slane %v1237, %v1250
  %v1252 = vcombine.high %v1244, %v1244
  %v1253 = vcombine.high %v1251, %v1251
  %v1254 = vcombine.high %v1230, %v1230
  %v1256 = vunpack.c.l.s4 1983009808
  %v1257 = vunpack.c.0.s8 %v1256
  %v1258 = vlaneseq
  %v1259 = vshrl.u32 %v1258, 7
  %v1260 = vsub.s32 %v1257, %v1259
  %v1261 = vrot.slane %v1230, %v1260
  %v1263 = vunpack.c.l.s4 1983009808
  %v1264 = vunpack.c.0.s8 %v1263
  %v1265 = vlaneseq
  %v1266 = vshrl.u32 %v1265, 7
  %v1267 = vsub.s32 %v1264, %v1266
  %v1268 = vrot.slane %v1254, %v1267
  %v1269 = vcombine.high %v1261, %v1261
  %v1270 = vcombine.high %v1268, %v1268
  %v1271 = vcombine.high %v1231, %v1231
  %v1273 = vunpack.c.l.s4 1983009808
  %v1274 = vunpack.c.0.s8 %v1273
  %v1275 = vlaneseq
  %v1276 = vshrl.u32 %v1275, 7
  %v1277 = vsub.s32 %v1274, %v1276
  %v1278 = vrot.slane %v1231, %v1277
  %v1280 = vunpack.c.l.s4 1983009808
  %v1281 = vunpack.c.0.s8 %v1280
  %v1282 = vlaneseq
  %v1283 = vshrl.u32 %v1282, 7
  %v1284 = vsub.s32 %v1281, %v1283
  %v1285 = vrot.slane %v1271, %v1284
  %v1286 = vcombine.high %v1278, %v1278
  %v1287 = vcombine.high %v1285, %v1285
  %v1288 = vcombine.high %v1232, %v1232
  %v1290 = vunpack.c.l.s4 1983009808
  %v1291 = vunpack.c.0.s8 %v1290
  %v1292 = vlaneseq
  %v1293 = vshrl.u32 %v1292, 7
  %v1294 = vsub.s32 %v1291, %v1293
  %v1295 = vrot.slane %v1232, %v1294
  %v1297 = vunpack.c.l.s4 1983009808
  %v1298 = vunpack.c.0.s8 %v1297
  %v1299 = vlaneseq
  %v1300 = vshrl.u32 %v1299, 7
  %v1301 = vsub.s32 %v1298, %v1300
  %v1302 = vrot.slane %v1288, %v1301
  %v1303 = vcombine.high %v1295, %v1295
  %v1304 = vcombine.high %v1302, %v1302
  %1321 = vmatprep.subr.mxu0 %v59
  %1322 = vmatpush1.msra.mxu0 %v58
  %1323 = vmatprep.subr.mxu0 %v57
  %1324 = vmatpush1.msra.mxu0 %v56
  %1325 = vmatprep.subr.mxu0 %v55
  %1326 = vmatpush1.msra.mxu0 %v54
  %1327 = vmatprep.subr.mxu0 %v53
  %1328 = vmatpush1.msra.mxu0 %v52
  %1329 = vmatprep.subr.mxu0 %v51
  %1330 = vmatpush1.msra.mxu0 %v50
  %1331 = vmatprep.subr.mxu0 %v49
  %1332 = vmatpush1.msra.mxu0 %v48
  %1333 = vmatprep.subr.mxu0 %v47
  %1334 = vmatpush1.msra.mxu0 %v46
  %1335 = vmatprep.subr.mxu0 %v45
  %1336 = vmatpush1.msra.mxu0 %v44
  %1337 = vmatprep.subr.mxu0 %v43
  %1338 = vmatpush1.msra.mxu0 %v42
  %1339 = vmatprep.subr.mxu0 %v41
  %1340 = vmatpush1.msra.mxu0 %v40
  %1341 = vmatprep.subr.mxu0 %v39
  %1342 = vmatpush1.msra.mxu0 %v38
  %1343 = vmatprep.subr.mxu0 %v37
  %1344 = vmatpush1.msra.mxu0 %v36
  %1345 = vmatprep.subr.mxu0 %v35
  %1346 = vmatpush1.msra.mxu0 %v34
  %1347 = vmatprep.subr.mxu0 %v33
  %1348 = vmatpush1.msra.mxu0 %v32
  %1349 = vmatprep.subr.mxu0 %v31
  %1350 = vmatpush1.msra.mxu0 %v30
  %1351 = vmatprep.subr.mxu0 %v29
  %1352 = vmatpush1.msra.mxu0 %v28
  %1353 = vmatprep.subr.mxu0 %v91
  %1354 = vmatpush2.msra.mxu0 %v90
  %1355 = vmatprep.subr.mxu0 %v89
  %1356 = vmatpush2.msra.mxu0 %v88
  %1357 = vmatprep.subr.mxu0 %v87
  %1358 = vmatpush2.msra.mxu0 %v86
  %1359 = vmatprep.subr.mxu0 %v85
  %1360 = vmatpush2.msra.mxu0 %v84
  %1361 = vmatprep.subr.mxu0 %v83
  %1362 = vmatpush2.msra.mxu0 %v82
  %1363 = vmatprep.subr.mxu0 %v81
  %1364 = vmatpush2.msra.mxu0 %v80
  %1365 = vmatprep.subr.mxu0 %v79
  %1366 = vmatpush2.msra.mxu0 %v78
  %1367 = vmatprep.subr.mxu0 %v77
  %1368 = vmatpush2.msra.mxu0 %v76
  %1369 = vmatprep.subr.mxu0 %v75
  %1370 = vmatpush2.msra.mxu0 %v74
  %1371 = vmatprep.subr.mxu0 %v73
  %1372 = vmatpush2.msra.mxu0 %v72
  %1373 = vmatprep.subr.mxu0 %v71
  %1374 = vmatpush2.msra.mxu0 %v70
  %1375 = vmatprep.subr.mxu0 %v69
  %1376 = vmatpush2.msra.mxu0 %v68
  %1377 = vmatprep.subr.mxu0 %v67
  %1378 = vmatpush2.msra.mxu0 %v66
  %1379 = vmatprep.subr.mxu0 %v65
  %1380 = vmatpush2.msra.mxu0 %v64
  %1381 = vmatprep.subr.mxu0 %v63
  %1382 = vmatpush2.msra.mxu0 %v62
  %1383 = vmatprep.subr.mxu0 %v61
  %1384 = vmatpush2.msra.mxu0 %v60
  %1385 = vmatprep.mubr.f32.mxu0 %v1252
  %1386 = vmatmul.mubr.f32.gmra.mxu0 %v1244
  %v1387 = vpop.f32.mrf.mxu0
  %v1388 = vadd.f32 0.0, %v1387
  %v1389 = vpop.f32.mrf.mxu0
  %v1390 = vadd.f32 0.0, %v1389
  %1391 = vdwg.mxu0
  %1392 = vmatprep.subr.mxu0 %v123
  %1393 = vmatpush1.msra.mxu0 %v122
  %1394 = vmatprep.subr.mxu0 %v121
  %1395 = vmatpush1.msra.mxu0 %v120
  %1396 = vmatprep.subr.mxu0 %v119
  %1397 = vmatpush1.msra.mxu0 %v118
  %1398 = vmatprep.subr.mxu0 %v117
  %1399 = vmatpush1.msra.mxu0 %v116
  %1400 = vmatprep.subr.mxu0 %v115
  %1401 = vmatpush1.msra.mxu0 %v114
  %1402 = vmatprep.subr.mxu0 %v113
  %1403 = vmatpush1.msra.mxu0 %v112
  %1404 = vmatprep.subr.mxu0 %v111
  %1405 = vmatpush1.msra.mxu0 %v110
  %1406 = vmatprep.subr.mxu0 %v109
  %1407 = vmatpush1.msra.mxu0 %v108
  %1408 = vmatprep.subr.mxu0 %v107
  %1409 = vmatpush1.msra.mxu0 %v106
  %1410 = vmatprep.subr.mxu0 %v105
  %1411 = vmatpush1.msra.mxu0 %v104
  %1412 = vmatprep.subr.mxu0 %v103
  %1413 = vmatpush1.msra.mxu0 %v102
  %1414 = vmatprep.subr.mxu0 %v101
  %1415 = vmatpush1.msra.mxu0 %v100
  %1416 = vmatprep.subr.mxu0 %v99
  %1417 = vmatpush1.msra.mxu0 %v98
  %1418 = vmatprep.subr.mxu0 %v97
  %1419 = vmatpush1.msra.mxu0 %v96
  %1420 = vmatprep.subr.mxu0 %v95
  %1421 = vmatpush1.msra.mxu0 %v94
  %1422 = vmatprep.subr.mxu0 %v93
  %1423 = vmatpush1.msra.mxu0 %v92
  %1424 = vmatprep.subr.mxu0 %v155
  %1425 = vmatpush2.msra.mxu0 %v154
  %1426 = vmatprep.subr.mxu0 %v153
  %1427 = vmatpush2.msra.mxu0 %v152
  %1428 = vmatprep.subr.mxu0 %v151
  %1429 = vmatpush2.msra.mxu0 %v150
  %1430 = vmatprep.subr.mxu0 %v149
  %1431 = vmatpush2.msra.mxu0 %v148
  %1432 = vmatprep.subr.mxu0 %v147
  %1433 = vmatpush2.msra.mxu0 %v146
  %1434 = vmatprep.subr.mxu0 %v145
  %1435 = vmatpush2.msra.mxu0 %v144
  %1436 = vmatprep.subr.mxu0 %v143
  %1437 = vmatpush2.msra.mxu0 %v142
  %1438 = vmatprep.subr.mxu0 %v141
  %1439 = vmatpush2.msra.mxu0 %v140
  %1440 = vmatprep.subr.mxu0 %v139
  %1441 = vmatpush2.msra.mxu0 %v138
  %1442 = vmatprep.subr.mxu0 %v137
  %1443 = vmatpush2.msra.mxu0 %v136
  %1444 = vmatprep.subr.mxu0 %v135
  %1445 = vmatpush2.msra.mxu0 %v134
  %1446 = vmatprep.subr.mxu0 %v133
  %1447 = vmatpush2.msra.mxu0 %v132
  %1448 = vmatprep.subr.mxu0 %v131
  %1449 = vmatpush2.msra.mxu0 %v130
  %1450 = vmatprep.subr.mxu0 %v129
  %1451 = vmatpush2.msra.mxu0 %v128
  %1452 = vmatprep.subr.mxu0 %v127
  %1453 = vmatpush2.msra.mxu0 %v126
  %1454 = vmatprep.subr.mxu0 %v125
  %1455 = vmatpush2.msra.mxu0 %v124
  %1456 = vmatprep.mubr.f32.mxu0 %v1253
  %1457 = vmatmul.mubr.f32.gmra.mxu0 %v1251
  %v1458 = vpop.f32.mrf.mxu0
  %v1459 = vadd.f32 %v1388, %v1458
  %v1460 = vpop.f32.mrf.mxu0
  %v1461 = vadd.f32 %v1390, %v1460
  %1462 = vdwg.mxu0
  %1463 = vmatprep.subr.mxu0 %v187
  %1464 = vmatpush1.msra.mxu0 %v186
  %1465 = vmatprep.subr.mxu0 %v185
  %1466 = vmatpush1.msra.mxu0 %v184
  %1467 = vmatprep.subr.mxu0 %v183
  %1468 = vmatpush1.msra.mxu0 %v182
  %1469 = vmatprep.subr.mxu0 %v181
  %1470 = vmatpush1.msra.mxu0 %v180
  %1471 = vmatprep.subr.mxu0 %v179
  %1472 = vmatpush1.msra.mxu0 %v178
  %1473 = vmatprep.subr.mxu0 %v177
  %1474 = vmatpush1.msra.mxu0 %v176
  %1475 = vmatprep.subr.mxu0 %v175
  %1476 = vmatpush1.msra.mxu0 %v174
  %1477 = vmatprep.subr.mxu0 %v173
  %1478 = vmatpush1.msra.mxu0 %v172
  %1479 = vmatprep.subr.mxu0 %v171
  %1480 = vmatpush1.msra.mxu0 %v170
  %1481 = vmatprep.subr.mxu0 %v169
  %1482 = vmatpush1.msra.mxu0 %v168
  %1483 = vmatprep.subr.mxu0 %v167
  %1484 = vmatpush1.msra.mxu0 %v166
  %1485 = vmatprep.subr.mxu0 %v165
  %1486 = vmatpush1.msra.mxu0 %v164
  %1487 = vmatprep.subr.mxu0 %v163
  %1488 = vmatpush1.msra.mxu0 %v162
  %1489 = vmatprep.subr.mxu0 %v161
  %1490 = vmatpush1.msra.mxu0 %v160
  %1491 = vmatprep.subr.mxu0 %v159
  %1492 = vmatpush1.msra.mxu0 %v158
  %1493 = vmatprep.subr.mxu0 %v157
  %1494 = vmatpush1.msra.mxu0 %v156
  %1495 = vmatprep.subr.mxu0 %v219
  %1496 = vmatpush2.msra.mxu0 %v218
  %1497 = vmatprep.subr.mxu0 %v217
  %1498 = vmatpush2.msra.mxu0 %v216
  %1499 = vmatprep.subr.mxu0 %v215
  %1500 = vmatpush2.msra.mxu0 %v214
  %1501 = vmatprep.subr.mxu0 %v213
  %1502 = vmatpush2.msra.mxu0 %v212
  %1503 = vmatprep.subr.mxu0 %v211
  %1504 = vmatpush2.msra.mxu0 %v210
  %1505 = vmatprep.subr.mxu0 %v209
  %1506 = vmatpush2.msra.mxu0 %v208
  %1507 = vmatprep.subr.mxu0 %v207
  %1508 = vmatpush2.msra.mxu0 %v206
  %1509 = vmatprep.subr.mxu0 %v205
  %1510 = vmatpush2.msra.mxu0 %v204
  %1511 = vmatprep.subr.mxu0 %v203
  %1512 = vmatpush2.msra.mxu0 %v202
  %1513 = vmatprep.subr.mxu0 %v201
  %1514 = vmatpush2.msra.mxu0 %v200
  %1515 = vmatprep.subr.mxu0 %v199
  %1516 = vmatpush2.msra.mxu0 %v198
  %1517 = vmatprep.subr.mxu0 %v197
  %1518 = vmatpush2.msra.mxu0 %v196
  %1519 = vmatprep.subr.mxu0 %v195
  %1520 = vmatpush2.msra.mxu0 %v194
  %1521 = vmatprep.subr.mxu0 %v193
  %1522 = vmatpush2.msra.mxu0 %v192
  %1523 = vmatprep.subr.mxu0 %v191
  %1524 = vmatpush2.msra.mxu0 %v190
  %1525 = vmatprep.subr.mxu0 %v189
  %1526 = vmatpush2.msra.mxu0 %v188
  %1527 = vmatprep.mubr.f32.mxu0 %v1269
  %1528 = vmatmul.mubr.f32.gmra.mxu0 %v1261
  %v1529 = vpop.f32.mrf.mxu0
  %v1530 = vadd.f32 %v1459, %v1529
  %v1531 = vpop.f32.mrf.mxu0
  %v1532 = vadd.f32 %v1461, %v1531
  %1533 = vdwg.mxu0
  %1534 = vmatprep.subr.mxu0 %v251
  %1535 = vmatpush1.msra.mxu0 %v250
  %1536 = vmatprep.subr.mxu0 %v249
  %1537 = vmatpush1.msra.mxu0 %v248
  %1538 = vmatprep.subr.mxu0 %v247
  %1539 = vmatpush1.msra.mxu0 %v246
  %1540 = vmatprep.subr.mxu0 %v245
  %1541 = vmatpush1.msra.mxu0 %v244
  %1542 = vmatprep.subr.mxu0 %v243
  %1543 = vmatpush1.msra.mxu0 %v242
  %1544 = vmatprep.subr.mxu0 %v241
  %1545 = vmatpush1.msra.mxu0 %v240
  %1546 = vmatprep.subr.mxu0 %v239
  %1547 = vmatpush1.msra.mxu0 %v238
  %1548 = vmatprep.subr.mxu0 %v237
  %1549 = vmatpush1.msra.mxu0 %v236
  %1550 = vmatprep.subr.mxu0 %v235
  %1551 = vmatpush1.msra.mxu0 %v234
  %1552 = vmatprep.subr.mxu0 %v233
  %1553 = vmatpush1.msra.mxu0 %v232
  %1554 = vmatprep.subr.mxu0 %v231
  %1555 = vmatpush1.msra.mxu0 %v230
  %1556 = vmatprep.subr.mxu0 %v229
  %1557 = vmatpush1.msra.mxu0 %v228
  %1558 = vmatprep.subr.mxu0 %v227
  %1559 = vmatpush1.msra.mxu0 %v226
  %1560 = vmatprep.subr.mxu0 %v225
  %1561 = vmatpush1.msra.mxu0 %v224
  %1562 = vmatprep.subr.mxu0 %v223
  %1563 = vmatpush1.msra.mxu0 %v222
  %1564 = vmatprep.subr.mxu0 %v221
  %1565 = vmatpush1.msra.mxu0 %v220
  %1566 = vmatprep.subr.mxu0 %v283
  %1567 = vmatpush2.msra.mxu0 %v282
  %1568 = vmatprep.subr.mxu0 %v281
  %1569 = vmatpush2.msra.mxu0 %v280
  %1570 = vmatprep.subr.mxu0 %v279
  %1571 = vmatpush2.msra.mxu0 %v278
  %1572 = vmatprep.subr.mxu0 %v277
  %1573 = vmatpush2.msra.mxu0 %v276
  %1574 = vmatprep.subr.mxu0 %v275
  %1575 = vmatpush2.msra.mxu0 %v274
  %1576 = vmatprep.subr.mxu0 %v273
  %1577 = vmatpush2.msra.mxu0 %v272
  %1578 = vmatprep.subr.mxu0 %v271
  %1579 = vmatpush2.msra.mxu0 %v270
  %1580 = vmatprep.subr.mxu0 %v269
  %1581 = vmatpush2.msra.mxu0 %v268
  %1582 = vmatprep.subr.mxu0 %v267
  %1583 = vmatpush2.msra.mxu0 %v266
  %1584 = vmatprep.subr.mxu0 %v265
  %1585 = vmatpush2.msra.mxu0 %v264
  %1586 = vmatprep.subr.mxu0 %v263
  %1587 = vmatpush2.msra.mxu0 %v262
  %1588 = vmatprep.subr.mxu0 %v261
  %1589 = vmatpush2.msra.mxu0 %v260
  %1590 = vmatprep.subr.mxu0 %v259
  %1591 = vmatpush2.msra.mxu0 %v258
  %1592 = vmatprep.subr.mxu0 %v257
  %1593 = vmatpush2.msra.mxu0 %v256
  %1594 = vmatprep.subr.mxu0 %v255
  %1595 = vmatpush2.msra.mxu0 %v254
  %1596 = vmatprep.subr.mxu0 %v253
  %1597 = vmatpush2.msra.mxu0 %v252
  %1598 = vmatprep.mubr.f32.mxu0 %v1270
  %1599 = vmatmul.mubr.f32.gmra.mxu0 %v1268
  %v1600 = vpop.f32.mrf.mxu0
  %v1601 = vadd.f32 %v1530, %v1600
  %v1602 = vpop.f32.mrf.mxu0
  %v1603 = vadd.f32 %v1532, %v1602
  %1604 = vdwg.mxu0
  %1605 = vmatprep.subr.mxu0 %v315
  %1606 = vmatpush1.msra.mxu0 %v314
  %1607 = vmatprep.subr.mxu0 %v313
  %1608 = vmatpush1.msra.mxu0 %v312
  %1609 = vmatprep.subr.mxu0 %v311
  %1610 = vmatpush1.msra.mxu0 %v310
  %1611 = vmatprep.subr.mxu0 %v309
  %1612 = vmatpush1.msra.mxu0 %v308
  %1613 = vmatprep.subr.mxu0 %v307
  %1614 = vmatpush1.msra.mxu0 %v306
  %1615 = vmatprep.subr.mxu0 %v305
  %1616 = vmatpush1.msra.mxu0 %v304
  %1617 = vmatprep.subr.mxu0 %v303
  %1618 = vmatpush1.msra.mxu0 %v302
  %1619 = vmatprep.subr.mxu0 %v301
  %1620 = vmatpush1.msra.mxu0 %v300
  %1621 = vmatprep.subr.mxu0 %v299
  %1622 = vmatpush1.msra.mxu0 %v298
  %1623 = vmatprep.subr.mxu0 %v297
  %1624 = vmatpush1.msra.mxu0 %v296
  %1625 = vmatprep.subr.mxu0 %v295
  %1626 = vmatpush1.msra.mxu0 %v294
  %1627 = vmatprep.subr.mxu0 %v293
  %1628 = vmatpush1.msra.mxu0 %v292
  %1629 = vmatprep.subr.mxu0 %v291
  %1630 = vmatpush1.msra.mxu0 %v290
  %1631 = vmatprep.subr.mxu0 %v289
  %1632 = vmatpush1.msra.mxu0 %v288
  %1633 = vmatprep.subr.mxu0 %v287
  %1634 = vmatpush1.msra.mxu0 %v286
  %1635 = vmatprep.subr.mxu0 %v285
  %1636 = vmatpush1.msra.mxu0 %v284
  %1637 = vmatprep.subr.mxu0 %v347
  %1638 = vmatpush2.msra.mxu0 %v346
  %1639 = vmatprep.subr.mxu0 %v345
  %1640 = vmatpush2.msra.mxu0 %v344
  %1641 = vmatprep.subr.mxu0 %v343
  %1642 = vmatpush2.msra.mxu0 %v342
  %1643 = vmatprep.subr.mxu0 %v341
  %1644 = vmatpush2.msra.mxu0 %v340
  %1645 = vmatprep.subr.mxu0 %v339
  %1646 = vmatpush2.msra.mxu0 %v338
  %1647 = vmatprep.subr.mxu0 %v337
  %1648 = vmatpush2.msra.mxu0 %v336
  %1649 = vmatprep.subr.mxu0 %v335
  %1650 = vmatpush2.msra.mxu0 %v334
  %1651 = vmatprep.subr.mxu0 %v333
  %1652 = vmatpush2.msra.mxu0 %v332
  %1653 = vmatprep.subr.mxu0 %v331
  %1654 = vmatpush2.msra.mxu0 %v330
  %1655 = vmatprep.subr.mxu0 %v329
  %1656 = vmatpush2.msra.mxu0 %v328
  %1657 = vmatprep.subr.mxu0 %v327
  %1658 = vmatpush2.msra.mxu0 %v326
  %1659 = vmatprep.subr.mxu0 %v325
  %1660 = vmatpush2.msra.mxu0 %v324
  %1661 = vmatprep.subr.mxu0 %v323
  %1662 = vmatpush2.msra.mxu0 %v322
  %1663 = vmatprep.subr.mxu0 %v321
  %1664 = vmatpush2.msra.mxu0 %v320
  %1665 = vmatprep.subr.mxu0 %v319
  %1666 = vmatpush2.msra.mxu0 %v318
  %1667 = vmatprep.subr.mxu0 %v317
  %1668 = vmatpush2.msra.mxu0 %v316
  %1669 = vmatprep.mubr.f32.mxu0 %v1286
  %1670 = vmatmul.mubr.f32.gmra.mxu0 %v1278
  %v1671 = vpop.f32.mrf.mxu0
  %v1672 = vadd.f32 %v1601, %v1671
  %v1673 = vpop.f32.mrf.mxu0
  %v1674 = vadd.f32 %v1603, %v1673
  %1675 = vdwg.mxu0
  %1676 = vmatprep.subr.mxu0 %v379
  %1677 = vmatpush1.msra.mxu0 %v378
  %1678 = vmatprep.subr.mxu0 %v377
  %1679 = vmatpush1.msra.mxu0 %v376
  %1680 = vmatprep.subr.mxu0 %v375
  %1681 = vmatpush1.msra.mxu0 %v374
  %1682 = vmatprep.subr.mxu0 %v373
  %1683 = vmatpush1.msra.mxu0 %v372
  %1684 = vmatprep.subr.mxu0 %v371
  %1685 = vmatpush1.msra.mxu0 %v370
  %1686 = vmatprep.subr.mxu0 %v369
  %1687 = vmatpush1.msra.mxu0 %v368
  %1688 = vmatprep.subr.mxu0 %v367
  %1689 = vmatpush1.msra.mxu0 %v366
  %1690 = vmatprep.subr.mxu0 %v365
  %1691 = vmatpush1.msra.mxu0 %v364
  %1692 = vmatprep.subr.mxu0 %v363
  %1693 = vmatpush1.msra.mxu0 %v362
  %1694 = vmatprep.subr.mxu0 %v361
  %1695 = vmatpush1.msra.mxu0 %v360
  %1696 = vmatprep.subr.mxu0 %v359
  %1697 = vmatpush1.msra.mxu0 %v358
  %1698 = vmatprep.subr.mxu0 %v357
  %1699 = vmatpush1.msra.mxu0 %v356
  %1700 = vmatprep.subr.mxu0 %v355
  %1701 = vmatpush1.msra.mxu0 %v354
  %1702 = vmatprep.subr.mxu0 %v353
  %1703 = vmatpush1.msra.mxu0 %v352
  %1704 = vmatprep.subr.mxu0 %v351
  %1705 = vmatpush1.msra.mxu0 %v350
  %1706 = vmatprep.subr.mxu0 %v349
  %1707 = vmatpush1.msra.mxu0 %v348
  %1708 = vmatprep.subr.mxu0 %v411
  %1709 = vmatpush2.msra.mxu0 %v410
  %1710 = vmatprep.subr.mxu0 %v409
  %1711 = vmatpush2.msra.mxu0 %v408
  %1712 = vmatprep.subr.mxu0 %v407
  %1713 = vmatpush2.msra.mxu0 %v406
  %1714 = vmatprep.subr.mxu0 %v405
  %1715 = vmatpush2.msra.mxu0 %v404
  %1716 = vmatprep.subr.mxu0 %v403
  %1717 = vmatpush2.msra.mxu0 %v402
  %1718 = vmatprep.subr.mxu0 %v401
  %1719 = vmatpush2.msra.mxu0 %v400
  %1720 = vmatprep.subr.mxu0 %v399
  %1721 = vmatpush2.msra.mxu0 %v398
  %1722 = vmatprep.subr.mxu0 %v397
  %1723 = vmatpush2.msra.mxu0 %v396
  %1724 = vmatprep.subr.mxu0 %v395
  %1725 = vmatpush2.msra.mxu0 %v394
  %1726 = vmatprep.subr.mxu0 %v393
  %1727 = vmatpush2.msra.mxu0 %v392
  %1728 = vmatprep.subr.mxu0 %v391
  %1729 = vmatpush2.msra.mxu0 %v390
  %1730 = vmatprep.subr.mxu0 %v389
  %1731 = vmatpush2.msra.mxu0 %v388
  %1732 = vmatprep.subr.mxu0 %v387
  %1733 = vmatpush2.msra.mxu0 %v386
  %1734 = vmatprep.subr.mxu0 %v385
  %1735 = vmatpush2.msra.mxu0 %v384
  %1736 = vmatprep.subr.mxu0 %v383
  %1737 = vmatpush2.msra.mxu0 %v382
  %1738 = vmatprep.subr.mxu0 %v381
  %1739 = vmatpush2.msra.mxu0 %v380
  %1740 = vmatprep.mubr.f32.mxu0 %v1287
  %1741 = vmatmul.mubr.f32.gmra.mxu0 %v1285
  %v1742 = vpop.f32.mrf.mxu0
  %v1743 = vadd.f32 %v1672, %v1742
  %v1744 = vpop.f32.mrf.mxu0
  %v1745 = vadd.f32 %v1674, %v1744
  %1746 = vdwg.mxu0
  %1747 = vmatprep.subr.mxu0 %v443
  %1748 = vmatpush1.msra.mxu0 %v442
  %1749 = vmatprep.subr.mxu0 %v441
  %1750 = vmatpush1.msra.mxu0 %v440
  %1751 = vmatprep.subr.mxu0 %v439
  %1752 = vmatpush1.msra.mxu0 %v438
  %1753 = vmatprep.subr.mxu0 %v437
  %1754 = vmatpush1.msra.mxu0 %v436
  %1755 = vmatprep.subr.mxu0 %v435
  %1756 = vmatpush1.msra.mxu0 %v434
  %1757 = vmatprep.subr.mxu0 %v433
  %1758 = vmatpush1.msra.mxu0 %v432
  %1759 = vmatprep.subr.mxu0 %v431
  %1760 = vmatpush1.msra.mxu0 %v430
  %1761 = vmatprep.subr.mxu0 %v429
  %1762 = vmatpush1.msra.mxu0 %v428
  %1763 = vmatprep.subr.mxu0 %v427
  %1764 = vmatpush1.msra.mxu0 %v426
  %1765 = vmatprep.subr.mxu0 %v425
  %1766 = vmatpush1.msra.mxu0 %v424
  %1767 = vmatprep.subr.mxu0 %v423
  %1768 = vmatpush1.msra.mxu0 %v422
  %1769 = vmatprep.subr.mxu0 %v421
  %1770 = vmatpush1.msra.mxu0 %v420
  %1771 = vmatprep.subr.mxu0 %v419
  %1772 = vmatpush1.msra.mxu0 %v418
  %1773 = vmatprep.subr.mxu0 %v417
  %1774 = vmatpush1.msra.mxu0 %v416
  %1775 = vmatprep.subr.mxu0 %v415
  %1776 = vmatpush1.msra.mxu0 %v414
  %1777 = vmatprep.subr.mxu0 %v413
  %1778 = vmatpush1.msra.mxu0 %v412
  %1779 = vmatprep.subr.mxu0 %v475
  %1780 = vmatpush2.msra.mxu0 %v474
  %1781 = vmatprep.subr.mxu0 %v473
  %1782 = vmatpush2.msra.mxu0 %v472
  %1783 = vmatprep.subr.mxu0 %v471
  %1784 = vmatpush2.msra.mxu0 %v470
  %1785 = vmatprep.subr.mxu0 %v469
  %1786 = vmatpush2.msra.mxu0 %v468
  %1787 = vmatprep.subr.mxu0 %v467
  %1788 = vmatpush2.msra.mxu0 %v466
  %1789 = vmatprep.subr.mxu0 %v465
  %1790 = vmatpush2.msra.mxu0 %v464
  %1791 = vmatprep.subr.mxu0 %v463
  %1792 = vmatpush2.msra.mxu0 %v462
  %1793 = vmatprep.subr.mxu0 %v461
  %1794 = vmatpush2.msra.mxu0 %v460
  %1795 = vmatprep.subr.mxu0 %v459
  %1796 = vmatpush2.msra.mxu0 %v458
  %1797 = vmatprep.subr.mxu0 %v457
  %1798 = vmatpush2.msra.mxu0 %v456
  %1799 = vmatprep.subr.mxu0 %v455
  %1800 = vmatpush2.msra.mxu0 %v454
  %1801 = vmatprep.subr.mxu0 %v453
  %1802 = vmatpush2.msra.mxu0 %v452
  %1803 = vmatprep.subr.mxu0 %v451
  %1804 = vmatpush2.msra.mxu0 %v450
  %1805 = vmatprep.subr.mxu0 %v449
  %1806 = vmatpush2.msra.mxu0 %v448
  %1807 = vmatprep.subr.mxu0 %v447
  %1808 = vmatpush2.msra.mxu0 %v446
  %1809 = vmatprep.subr.mxu0 %v445
  %1810 = vmatpush2.msra.mxu0 %v444
  %1811 = vmatprep.mubr.f32.mxu0 %v1303
  %1812 = vmatmul.mubr.f32.gmra.mxu0 %v1295
  %v1813 = vpop.f32.mrf.mxu0
  %v1814 = vadd.f32 %v1743, %v1813
  %v1815 = vpop.f32.mrf.mxu0
  %v1816 = vadd.f32 %v1745, %v1815
  %1817 = vdwg.mxu0
  %1818 = vmatprep.subr.mxu0 %v507
  %1819 = vmatpush1.msra.mxu0 %v506
  %1820 = vmatprep.subr.mxu0 %v505
  %1821 = vmatpush1.msra.mxu0 %v504
  %1822 = vmatprep.subr.mxu0 %v503
  %1823 = vmatpush1.msra.mxu0 %v502
  %1824 = vmatprep.subr.mxu0 %v501
  %1825 = vmatpush1.msra.mxu0 %v500
  %1826 = vmatprep.subr.mxu0 %v499
  %1827 = vmatpush1.msra.mxu0 %v498
  %1828 = vmatprep.subr.mxu0 %v497
  %1829 = vmatpush1.msra.mxu0 %v496
  %1830 = vmatprep.subr.mxu0 %v495
  %1831 = vmatpush1.msra.mxu0 %v494
  %1832 = vmatprep.subr.mxu0 %v493
  %1833 = vmatpush1.msra.mxu0 %v492
  %1834 = vmatprep.subr.mxu0 %v491
  %1835 = vmatpush1.msra.mxu0 %v490
  %1836 = vmatprep.subr.mxu0 %v489
  %1837 = vmatpush1.msra.mxu0 %v488
  %1838 = vmatprep.subr.mxu0 %v487
  %1839 = vmatpush1.msra.mxu0 %v486
  %1840 = vmatprep.subr.mxu0 %v485
  %1841 = vmatpush1.msra.mxu0 %v484
  %1842 = vmatprep.subr.mxu0 %v483
  %1843 = vmatpush1.msra.mxu0 %v482
  %1844 = vmatprep.subr.mxu0 %v481
  %1845 = vmatpush1.msra.mxu0 %v480
  %1846 = vmatprep.subr.mxu0 %v479
  %1847 = vmatpush1.msra.mxu0 %v478
  %1848 = vmatprep.subr.mxu0 %v477
  %1849 = vmatpush1.msra.mxu0 %v476
  %1850 = vmatprep.subr.mxu0 %v539
  %1851 = vmatpush2.msra.mxu0 %v538
  %1852 = vmatprep.subr.mxu0 %v537
  %1853 = vmatpush2.msra.mxu0 %v536
  %1854 = vmatprep.subr.mxu0 %v535
  %1855 = vmatpush2.msra.mxu0 %v534
  %1856 = vmatprep.subr.mxu0 %v533
  %1857 = vmatpush2.msra.mxu0 %v532
  %1858 = vmatprep.subr.mxu0 %v531
  %1859 = vmatpush2.msra.mxu0 %v530
  %1860 = vmatprep.subr.mxu0 %v529
  %1861 = vmatpush2.msra.mxu0 %v528
  %1862 = vmatprep.subr.mxu0 %v527
  %1863 = vmatpush2.msra.mxu0 %v526
  %1864 = vmatprep.subr.mxu0 %v525
  %1865 = vmatpush2.msra.mxu0 %v524
  %1866 = vmatprep.subr.mxu0 %v523
  %1867 = vmatpush2.msra.mxu0 %v522
  %1868 = vmatprep.subr.mxu0 %v521
  %1869 = vmatpush2.msra.mxu0 %v520
  %1870 = vmatprep.subr.mxu0 %v519
  %1871 = vmatpush2.msra.mxu0 %v518
  %1872 = vmatprep.subr.mxu0 %v517
  %1873 = vmatpush2.msra.mxu0 %v516
  %1874 = vmatprep.subr.mxu0 %v515
  %1875 = vmatpush2.msra.mxu0 %v514
  %1876 = vmatprep.subr.mxu0 %v513
  %1877 = vmatpush2.msra.mxu0 %v512
  %1878 = vmatprep.subr.mxu0 %v511
  %1879 = vmatpush2.msra.mxu0 %v510
  %1880 = vmatprep.subr.mxu0 %v509
  %1881 = vmatpush2.msra.mxu0 %v508
  %1882 = vmatprep.mubr.f32.mxu0 %v1304
  %1883 = vmatmul.mubr.f32.gmra.mxu0 %v1302
  %v1884 = vpop.f32.mrf.mxu0
  %v1885 = vadd.f32 %v1814, %v1884
  %v1886 = vpop.f32.mrf.mxu0
  %v1887 = vadd.f32 %v1816, %v1886
  %1888 = vdwg.mxu0
  %v1889 = vmul.f32 %v1885, %v1204
  %v1890 = vmul.f32 %v1887, %v1208
  %v1891 = vadd.f32 %v1889, %v1217
  %v1892 = vadd.f32 %v1890, %v1221
  %v1893 = vtanh.pop %v1891
  %v1894 = vtanh.pop %v1892
  %v1895 = vmax.f32 %v1226, %v1893
  %v1896 = vmax.f32 %v1227, %v1894
  %s1897 = scalar_lea.vmem %s0, 64
  %v1898 = vld [vmem:[%s1897] sm:$0xff]
  %v1899 = vld [vmem:[%s1897 + $0x8] sm:$0xff]
  %v1900 = vld [vmem:[%s1897 + $0x10] sm:$0xff]
  %v1901 = vld [vmem:[%s1897 + $0x18] sm:$0xff]
  %v1906 = vcombine.high %v1898, %v1898
  %v1908 = vunpack.c.l.s4 1983009808
  %v1909 = vunpack.c.0.s8 %v1908
  %v1910 = vlaneseq
  %v1911 = vshrl.u32 %v1910, 7
  %v1912 = vsub.s32 %v1909, %v1911
  %v1913 = vrot.slane %v1898, %v1912
  %v1915 = vunpack.c.l.s4 1983009808
  %v1916 = vunpack.c.0.s8 %v1915
  %v1917 = vlaneseq
  %v1918 = vshrl.u32 %v1917, 7
  %v1919 = vsub.s32 %v1916, %v1918
  %v1920 = vrot.slane %v1906, %v1919
  %v1921 = vcombine.high %v1913, %v1913
  %v1922 = vcombine.high %v1920, %v1920
  %v1923 = vcombine.high %v1899, %v1899
  %v1925 = vunpack.c.l.s4 1983009808
  %v1926 = vunpack.c.0.s8 %v1925
  %v1927 = vlaneseq
  %v1928 = vshrl.u32 %v1927, 7
  %v1929 = vsub.s32 %v1926, %v1928
  %v1930 = vrot.slane %v1899, %v1929
  %v1932 = vunpack.c.l.s4 1983009808
  %v1933 = vunpack.c.0.s8 %v1932
  %v1934 = vlaneseq
  %v1935 = vshrl.u32 %v1934, 7
  %v1936 = vsub.s32 %v1933, %v1935
  %v1937 = vrot.slane %v1923, %v1936
  %v1938 = vcombine.high %v1930, %v1930
  %v1939 = vcombine.high %v1937, %v1937
  %v1940 = vcombine.high %v1900, %v1900
  %v1942 = vunpack.c.l.s4 1983009808
  %v1943 = vunpack.c.0.s8 %v1942
  %v1944 = vlaneseq
  %v1945 = vshrl.u32 %v1944, 7
  %v1946 = vsub.s32 %v1943, %v1945
  %v1947 = vrot.slane %v1900, %v1946
  %v1949 = vunpack.c.l.s4 1983009808
  %v1950 = vunpack.c.0.s8 %v1949
  %v1951 = vlaneseq
  %v1952 = vshrl.u32 %v1951, 7
  %v1953 = vsub.s32 %v1950, %v1952
  %v1954 = vrot.slane %v1940, %v1953
  %v1955 = vcombine.high %v1947, %v1947
  %v1956 = vcombine.high %v1954, %v1954
  %v1957 = vcombine.high %v1901, %v1901
  %v1959 = vunpack.c.l.s4 1983009808
  %v1960 = vunpack.c.0.s8 %v1959
  %v1961 = vlaneseq
  %v1962 = vshrl.u32 %v1961, 7
  %v1963 = vsub.s32 %v1960, %v1962
  %v1964 = vrot.slane %v1901, %v1963
  %v1966 = vunpack.c.l.s4 1983009808
  %v1967 = vunpack.c.0.s8 %v1966
  %v1968 = vlaneseq
  %v1969 = vshrl.u32 %v1968, 7
  %v1970 = vsub.s32 %v1967, %v1969
  %v1971 = vrot.slane %v1957, %v1970
  %v1972 = vcombine.high %v1964, %v1964
  %v1973 = vcombine.high %v1971, %v1971
  %1990 = vmatprep.subr.mxu0 %v59
  %1991 = vmatpush1.msra.mxu0 %v58
  %1992 = vmatprep.subr.mxu0 %v57
  %1993 = vmatpush1.msra.mxu0 %v56
  %1994 = vmatprep.subr.mxu0 %v55
  %1995 = vmatpush1.msra.mxu0 %v54
  %1996 = vmatprep.subr.mxu0 %v53
  %1997 = vmatpush1.msra.mxu0 %v52
  %1998 = vmatprep.subr.mxu0 %v51
  %1999 = vmatpush1.msra.mxu0 %v50
  %2000 = vmatprep.subr.mxu0 %v49
  %2001 = vmatpush1.msra.mxu0 %v48
  %2002 = vmatprep.subr.mxu0 %v47
  %2003 = vmatpush1.msra.mxu0 %v46
  %2004 = vmatprep.subr.mxu0 %v45
  %2005 = vmatpush1.msra.mxu0 %v44
  %2006 = vmatprep.subr.mxu0 %v43
  %2007 = vmatpush1.msra.mxu0 %v42
  %2008 = vmatprep.subr.mxu0 %v41
  %2009 = vmatpush1.msra.mxu0 %v40
  %2010 = vmatprep.subr.mxu0 %v39
  %2011 = vmatpush1.msra.mxu0 %v38
  %2012 = vmatprep.subr.mxu0 %v37
  %2013 = vmatpush1.msra.mxu0 %v36
  %2014 = vmatprep.subr.mxu0 %v35
  %2015 = vmatpush1.msra.mxu0 %v34
  %2016 = vmatprep.subr.mxu0 %v33
  %2017 = vmatpush1.msra.mxu0 %v32
  %2018 = vmatprep.subr.mxu0 %v31
  %2019 = vmatpush1.msra.mxu0 %v30
  %2020 = vmatprep.subr.mxu0 %v29
  %2021 = vmatpush1.msra.mxu0 %v28
  %2022 = vmatprep.subr.mxu0 %v91
  %2023 = vmatpush2.msra.mxu0 %v90
  %2024 = vmatprep.subr.mxu0 %v89
  %2025 = vmatpush2.msra.mxu0 %v88
  %2026 = vmatprep.subr.mxu0 %v87
  %2027 = vmatpush2.msra.mxu0 %v86
  %2028 = vmatprep.subr.mxu0 %v85
  %2029 = vmatpush2.msra.mxu0 %v84
  %2030 = vmatprep.subr.mxu0 %v83
  %2031 = vmatpush2.msra.mxu0 %v82
  %2032 = vmatprep.subr.mxu0 %v81
  %2033 = vmatpush2.msra.mxu0 %v80
  %2034 = vmatprep.subr.mxu0 %v79
  %2035 = vmatpush2.msra.mxu0 %v78
  %2036 = vmatprep.subr.mxu0 %v77
  %2037 = vmatpush2.msra.mxu0 %v76
  %2038 = vmatprep.subr.mxu0 %v75
  %2039 = vmatpush2.msra.mxu0 %v74
  %2040 = vmatprep.subr.mxu0 %v73
  %2041 = vmatpush2.msra.mxu0 %v72
  %2042 = vmatprep.subr.mxu0 %v71
  %2043 = vmatpush2.msra.mxu0 %v70
  %2044 = vmatprep.subr.mxu0 %v69
  %2045 = vmatpush2.msra.mxu0 %v68
  %2046 = vmatprep.subr.mxu0 %v67
  %2047 = vmatpush2.msra.mxu0 %v66
  %2048 = vmatprep.subr.mxu0 %v65
  %2049 = vmatpush2.msra.mxu0 %v64
  %2050 = vmatprep.subr.mxu0 %v63
  %2051 = vmatpush2.msra.mxu0 %v62
  %2052 = vmatprep.subr.mxu0 %v61
  %2053 = vmatpush2.msra.mxu0 %v60
  %2054 = vmatprep.mubr.f32.mxu0 %v1921
  %2055 = vmatmul.mubr.f32.gmra.mxu0 %v1913
  %v2056 = vpop.f32.mrf.mxu0
  %v2057 = vadd.f32 0.0, %v2056
  %v2058 = vpop.f32.mrf.mxu0
  %v2059 = vadd.f32 0.0, %v2058
  %2060 = vdwg.mxu0
  %2061 = vmatprep.subr.mxu0 %v123
  %2062 = vmatpush1.msra.mxu0 %v122
  %2063 = vmatprep.subr.mxu0 %v121
  %2064 = vmatpush1.msra.mxu0 %v120
  %2065 = vmatprep.subr.mxu0 %v119
  %2066 = vmatpush1.msra.mxu0 %v118
  %2067 = vmatprep.subr.mxu0 %v117
  %2068 = vmatpush1.msra.mxu0 %v116
  %2069 = vmatprep.subr.mxu0 %v115
  %2070 = vmatpush1.msra.mxu0 %v114
  %2071 = vmatprep.subr.mxu0 %v113
  %2072 = vmatpush1.msra.mxu0 %v112
  %2073 = vmatprep.subr.mxu0 %v111
  %2074 = vmatpush1.msra.mxu0 %v110
  %2075 = vmatprep.subr.mxu0 %v109
  %2076 = vmatpush1.msra.mxu0 %v108
  %2077 = vmatprep.subr.mxu0 %v107
  %2078 = vmatpush1.msra.mxu0 %v106
  %2079 = vmatprep.subr.mxu0 %v105
  %2080 = vmatpush1.msra.mxu0 %v104
  %2081 = vmatprep.subr.mxu0 %v103
  %2082 = vmatpush1.msra.mxu0 %v102
  %2083 = vmatprep.subr.mxu0 %v101
  %2084 = vmatpush1.msra.mxu0 %v100
  %2085 = vmatprep.subr.mxu0 %v99
  %2086 = vmatpush1.msra.mxu0 %v98
  %2087 = vmatprep.subr.mxu0 %v97
  %2088 = vmatpush1.msra.mxu0 %v96
  %2089 = vmatprep.subr.mxu0 %v95
  %2090 = vmatpush1.msra.mxu0 %v94
  %2091 = vmatprep.subr.mxu0 %v93
  %2092 = vmatpush1.msra.mxu0 %v92
  %2093 = vmatprep.subr.mxu0 %v155
  %2094 = vmatpush2.msra.mxu0 %v154
  %2095 = vmatprep.subr.mxu0 %v153
  %2096 = vmatpush2.msra.mxu0 %v152
  %2097 = vmatprep.subr.mxu0 %v151
  %2098 = vmatpush2.msra.mxu0 %v150
  %2099 = vmatprep.subr.mxu0 %v149
  %2100 = vmatpush2.msra.mxu0 %v148
  %2101 = vmatprep.subr.mxu0 %v147
  %2102 = vmatpush2.msra.mxu0 %v146
  %2103 = vmatprep.subr.mxu0 %v145
  %2104 = vmatpush2.msra.mxu0 %v144
  %2105 = vmatprep.subr.mxu0 %v143
  %2106 = vmatpush2.msra.mxu0 %v142
  %2107 = vmatprep.subr.mxu0 %v141
  %2108 = vmatpush2.msra.mxu0 %v140
  %2109 = vmatprep.subr.mxu0 %v139
  %2110 = vmatpush2.msra.mxu0 %v138
  %2111 = vmatprep.subr.mxu0 %v137
  %2112 = vmatpush2.msra.mxu0 %v136
  %2113 = vmatprep.subr.mxu0 %v135
  %2114 = vmatpush2.msra.mxu0 %v134
  %2115 = vmatprep.subr.mxu0 %v133
  %2116 = vmatpush2.msra.mxu0 %v132
  %2117 = vmatprep.subr.mxu0 %v131
  %2118 = vmatpush2.msra.mxu0 %v130
  %2119 = vmatprep.subr.mxu0 %v129
  %2120 = vmatpush2.msra.mxu0 %v128
  %2121 = vmatprep.subr.mxu0 %v127
  %2122 = vmatpush2.msra.mxu0 %v126
  %2123 = vmatprep.subr.mxu0 %v125
  %2124 = vmatpush2.msra.mxu0 %v124
  %2125 = vmatprep.mubr.f32.mxu0 %v1922
  %2126 = vmatmul.mubr.f32.gmra.mxu0 %v1920
  %v2127 = vpop.f32.mrf.mxu0
  %v2128 = vadd.f32 %v2057, %v2127
  %v2129 = vpop.f32.mrf.mxu0
  %v2130 = vadd.f32 %v2059, %v2129
  %2131 = vdwg.mxu0
  %2132 = vmatprep.subr.mxu0 %v187
  %2133 = vmatpush1.msra.mxu0 %v186
  %2134 = vmatprep.subr.mxu0 %v185
  %2135 = vmatpush1.msra.mxu0 %v184
  %2136 = vmatprep.subr.mxu0 %v183
  %2137 = vmatpush1.msra.mxu0 %v182
  %2138 = vmatprep.subr.mxu0 %v181
  %2139 = vmatpush1.msra.mxu0 %v180
  %2140 = vmatprep.subr.mxu0 %v179
  %2141 = vmatpush1.msra.mxu0 %v178
  %2142 = vmatprep.subr.mxu0 %v177
  %2143 = vmatpush1.msra.mxu0 %v176
  %2144 = vmatprep.subr.mxu0 %v175
  %2145 = vmatpush1.msra.mxu0 %v174
  %2146 = vmatprep.subr.mxu0 %v173
  %2147 = vmatpush1.msra.mxu0 %v172
  %2148 = vmatprep.subr.mxu0 %v171
  %2149 = vmatpush1.msra.mxu0 %v170
  %2150 = vmatprep.subr.mxu0 %v169
  %2151 = vmatpush1.msra.mxu0 %v168
  %2152 = vmatprep.subr.mxu0 %v167
  %2153 = vmatpush1.msra.mxu0 %v166
  %2154 = vmatprep.subr.mxu0 %v165
  %2155 = vmatpush1.msra.mxu0 %v164
  %2156 = vmatprep.subr.mxu0 %v163
  %2157 = vmatpush1.msra.mxu0 %v162
  %2158 = vmatprep.subr.mxu0 %v161
  %2159 = vmatpush1.msra.mxu0 %v160
  %2160 = vmatprep.subr.mxu0 %v159
  %2161 = vmatpush1.msra.mxu0 %v158
  %2162 = vmatprep.subr.mxu0 %v157
  %2163 = vmatpush1.msra.mxu0 %v156
  %2164 = vmatprep.subr.mxu0 %v219
  %2165 = vmatpush2.msra.mxu0 %v218
  %2166 = vmatprep.subr.mxu0 %v217
  %2167 = vmatpush2.msra.mxu0 %v216
  %2168 = vmatprep.subr.mxu0 %v215
  %2169 = vmatpush2.msra.mxu0 %v214
  %2170 = vmatprep.subr.mxu0 %v213
  %2171 = vmatpush2.msra.mxu0 %v212
  %2172 = vmatprep.subr.mxu0 %v211
  %2173 = vmatpush2.msra.mxu0 %v210
  %2174 = vmatprep.subr.mxu0 %v209
  %2175 = vmatpush2.msra.mxu0 %v208
  %2176 = vmatprep.subr.mxu0 %v207
  %2177 = vmatpush2.msra.mxu0 %v206
  %2178 = vmatprep.subr.mxu0 %v205
  %2179 = vmatpush2.msra.mxu0 %v204
  %2180 = vmatprep.subr.mxu0 %v203
  %2181 = vmatpush2.msra.mxu0 %v202
  %2182 = vmatprep.subr.mxu0 %v201
  %2183 = vmatpush2.msra.mxu0 %v200
  %2184 = vmatprep.subr.mxu0 %v199
  %2185 = vmatpush2.msra.mxu0 %v198
  %2186 = vmatprep.subr.mxu0 %v197
  %2187 = vmatpush2.msra.mxu0 %v196
  %2188 = vmatprep.subr.mxu0 %v195
  %2189 = vmatpush2.msra.mxu0 %v194
  %2190 = vmatprep.subr.mxu0 %v193
  %2191 = vmatpush2.msra.mxu0 %v192
  %2192 = vmatprep.subr.mxu0 %v191
  %2193 = vmatpush2.msra.mxu0 %v190
  %2194 = vmatprep.subr.mxu0 %v189
  %2195 = vmatpush2.msra.mxu0 %v188
  %2196 = vmatprep.mubr.f32.mxu0 %v1938
  %2197 = vmatmul.mubr.f32.gmra.mxu0 %v1930
  %v2198 = vpop.f32.mrf.mxu0
  %v2199 = vadd.f32 %v2128, %v2198
  %v2200 = vpop.f32.mrf.mxu0
  %v2201 = vadd.f32 %v2130, %v2200
  %2202 = vdwg.mxu0
  %2203 = vmatprep.subr.mxu0 %v251
  %2204 = vmatpush1.msra.mxu0 %v250
  %2205 = vmatprep.subr.mxu0 %v249
  %2206 = vmatpush1.msra.mxu0 %v248
  %2207 = vmatprep.subr.mxu0 %v247
  %2208 = vmatpush1.msra.mxu0 %v246
  %2209 = vmatprep.subr.mxu0 %v245
  %2210 = vmatpush1.msra.mxu0 %v244
  %2211 = vmatprep.subr.mxu0 %v243
  %2212 = vmatpush1.msra.mxu0 %v242
  %2213 = vmatprep.subr.mxu0 %v241
  %2214 = vmatpush1.msra.mxu0 %v240
  %2215 = vmatprep.subr.mxu0 %v239
  %2216 = vmatpush1.msra.mxu0 %v238
  %2217 = vmatprep.subr.mxu0 %v237
  %2218 = vmatpush1.msra.mxu0 %v236
  %2219 = vmatprep.subr.mxu0 %v235
  %2220 = vmatpush1.msra.mxu0 %v234
  %2221 = vmatprep.subr.mxu0 %v233
  %2222 = vmatpush1.msra.mxu0 %v232
  %2223 = vmatprep.subr.mxu0 %v231
  %2224 = vmatpush1.msra.mxu0 %v230
  %2225 = vmatprep.subr.mxu0 %v229
  %2226 = vmatpush1.msra.mxu0 %v228
  %2227 = vmatprep.subr.mxu0 %v227
  %2228 = vmatpush1.msra.mxu0 %v226
  %2229 = vmatprep.subr.mxu0 %v225
  %2230 = vmatpush1.msra.mxu0 %v224
  %2231 = vmatprep.subr.mxu0 %v223
  %2232 = vmatpush1.msra.mxu0 %v222
  %2233 = vmatprep.subr.mxu0 %v221
  %2234 = vmatpush1.msra.mxu0 %v220
  %2235 = vmatprep.subr.mxu0 %v283
  %2236 = vmatpush2.msra.mxu0 %v282
  %2237 = vmatprep.subr.mxu0 %v281
  %2238 = vmatpush2.msra.mxu0 %v280
  %2239 = vmatprep.subr.mxu0 %v279
  %2240 = vmatpush2.msra.mxu0 %v278
  %2241 = vmatprep.subr.mxu0 %v277
  %2242 = vmatpush2.msra.mxu0 %v276
  %2243 = vmatprep.subr.mxu0 %v275
  %2244 = vmatpush2.msra.mxu0 %v274
  %2245 = vmatprep.subr.mxu0 %v273
  %2246 = vmatpush2.msra.mxu0 %v272
  %2247 = vmatprep.subr.mxu0 %v271
  %2248 = vmatpush2.msra.mxu0 %v270
  %2249 = vmatprep.subr.mxu0 %v269
  %2250 = vmatpush2.msra.mxu0 %v268
  %2251 = vmatprep.subr.mxu0 %v267
  %2252 = vmatpush2.msra.mxu0 %v266
  %2253 = vmatprep.subr.mxu0 %v265
  %2254 = vmatpush2.msra.mxu0 %v264
  %2255 = vmatprep.subr.mxu0 %v263
  %2256 = vmatpush2.msra.mxu0 %v262
  %2257 = vmatprep.subr.mxu0 %v261
  %2258 = vmatpush2.msra.mxu0 %v260
  %2259 = vmatprep.subr.mxu0 %v259
  %2260 = vmatpush2.msra.mxu0 %v258
  %2261 = vmatprep.subr.mxu0 %v257
  %2262 = vmatpush2.msra.mxu0 %v256
  %2263 = vmatprep.subr.mxu0 %v255
  %2264 = vmatpush2.msra.mxu0 %v254
  %2265 = vmatprep.subr.mxu0 %v253
  %2266 = vmatpush2.msra.mxu0 %v252
  %2267 = vmatprep.mubr.f32.mxu0 %v1939
  %2268 = vmatmul.mubr.f32.gmra.mxu0 %v1937
  %v2269 = vpop.f32.mrf.mxu0
  %v2270 = vadd.f32 %v2199, %v2269
  %v2271 = vpop.f32.mrf.mxu0
  %v2272 = vadd.f32 %v2201, %v2271
  %2273 = vdwg.mxu0
  %2274 = vmatprep.subr.mxu0 %v315
  %2275 = vmatpush1.msra.mxu0 %v314
  %2276 = vmatprep.subr.mxu0 %v313
  %2277 = vmatpush1.msra.mxu0 %v312
  %2278 = vmatprep.subr.mxu0 %v311
  %2279 = vmatpush1.msra.mxu0 %v310
  %2280 = vmatprep.subr.mxu0 %v309
  %2281 = vmatpush1.msra.mxu0 %v308
  %2282 = vmatprep.subr.mxu0 %v307
  %2283 = vmatpush1.msra.mxu0 %v306
  %2284 = vmatprep.subr.mxu0 %v305
  %2285 = vmatpush1.msra.mxu0 %v304
  %2286 = vmatprep.subr.mxu0 %v303
  %2287 = vmatpush1.msra.mxu0 %v302
  %2288 = vmatprep.subr.mxu0 %v301
  %2289 = vmatpush1.msra.mxu0 %v300
  %2290 = vmatprep.subr.mxu0 %v299
  %2291 = vmatpush1.msra.mxu0 %v298
  %2292 = vmatprep.subr.mxu0 %v297
  %2293 = vmatpush1.msra.mxu0 %v296
  %2294 = vmatprep.subr.mxu0 %v295
  %2295 = vmatpush1.msra.mxu0 %v294
  %2296 = vmatprep.subr.mxu0 %v293
  %2297 = vmatpush1.msra.mxu0 %v292
  %2298 = vmatprep.subr.mxu0 %v291
  %2299 = vmatpush1.msra.mxu0 %v290
  %2300 = vmatprep.subr.mxu0 %v289
  %2301 = vmatpush1.msra.mxu0 %v288
  %2302 = vmatprep.subr.mxu0 %v287
  %2303 = vmatpush1.msra.mxu0 %v286
  %2304 = vmatprep.subr.mxu0 %v285
  %2305 = vmatpush1.msra.mxu0 %v284
  %2306 = vmatprep.subr.mxu0 %v347
  %2307 = vmatpush2.msra.mxu0 %v346
  %2308 = vmatprep.subr.mxu0 %v345
  %2309 = vmatpush2.msra.mxu0 %v344
  %2310 = vmatprep.subr.mxu0 %v343
  %2311 = vmatpush2.msra.mxu0 %v342
  %2312 = vmatprep.subr.mxu0 %v341
  %2313 = vmatpush2.msra.mxu0 %v340
  %2314 = vmatprep.subr.mxu0 %v339
  %2315 = vmatpush2.msra.mxu0 %v338
  %2316 = vmatprep.subr.mxu0 %v337
  %2317 = vmatpush2.msra.mxu0 %v336
  %2318 = vmatprep.subr.mxu0 %v335
  %2319 = vmatpush2.msra.mxu0 %v334
  %2320 = vmatprep.subr.mxu0 %v333
  %2321 = vmatpush2.msra.mxu0 %v332
  %2322 = vmatprep.subr.mxu0 %v331
  %2323 = vmatpush2.msra.mxu0 %v330
  %2324 = vmatprep.subr.mxu0 %v329
  %2325 = vmatpush2.msra.mxu0 %v328
  %2326 = vmatprep.subr.mxu0 %v327
  %2327 = vmatpush2.msra.mxu0 %v326
  %2328 = vmatprep.subr.mxu0 %v325
  %2329 = vmatpush2.msra.mxu0 %v324
  %2330 = vmatprep.subr.mxu0 %v323
  %2331 = vmatpush2.msra.mxu0 %v322
  %2332 = vmatprep.subr.mxu0 %v321
  %2333 = vmatpush2.msra.mxu0 %v320
  %2334 = vmatprep.subr.mxu0 %v319
  %2335 = vmatpush2.msra.mxu0 %v318
  %2336 = vmatprep.subr.mxu0 %v317
  %2337 = vmatpush2.msra.mxu0 %v316
  %2338 = vmatprep.mubr.f32.mxu0 %v1955
  %2339 = vmatmul.mubr.f32.gmra.mxu0 %v1947
  %v2340 = vpop.f32.mrf.mxu0
  %v2341 = vadd.f32 %v2270, %v2340
  %v2342 = vpop.f32.mrf.mxu0
  %v2343 = vadd.f32 %v2272, %v2342
  %2344 = vdwg.mxu0
  %2345 = vmatprep.subr.mxu0 %v379
  %2346 = vmatpush1.msra.mxu0 %v378
  %2347 = vmatprep.subr.mxu0 %v377
  %2348 = vmatpush1.msra.mxu0 %v376
  %2349 = vmatprep.subr.mxu0 %v375
  %2350 = vmatpush1.msra.mxu0 %v374
  %2351 = vmatprep.subr.mxu0 %v373
  %2352 = vmatpush1.msra.mxu0 %v372
  %2353 = vmatprep.subr.mxu0 %v371
  %2354 = vmatpush1.msra.mxu0 %v370
  %2355 = vmatprep.subr.mxu0 %v369
  %2356 = vmatpush1.msra.mxu0 %v368
  %2357 = vmatprep.subr.mxu0 %v367
  %2358 = vmatpush1.msra.mxu0 %v366
  %2359 = vmatprep.subr.mxu0 %v365
  %2360 = vmatpush1.msra.mxu0 %v364
  %2361 = vmatprep.subr.mxu0 %v363
  %2362 = vmatpush1.msra.mxu0 %v362
  %2363 = vmatprep.subr.mxu0 %v361
  %2364 = vmatpush1.msra.mxu0 %v360
  %2365 = vmatprep.subr.mxu0 %v359
  %2366 = vmatpush1.msra.mxu0 %v358
  %2367 = vmatprep.subr.mxu0 %v357
  %2368 = vmatpush1.msra.mxu0 %v356
  %2369 = vmatprep.subr.mxu0 %v355
  %2370 = vmatpush1.msra.mxu0 %v354
  %2371 = vmatprep.subr.mxu0 %v353
  %2372 = vmatpush1.msra.mxu0 %v352
  %2373 = vmatprep.subr.mxu0 %v351
  %2374 = vmatpush1.msra.mxu0 %v350
  %2375 = vmatprep.subr.mxu0 %v349
  %2376 = vmatpush1.msra.mxu0 %v348
  %2377 = vmatprep.subr.mxu0 %v411
  %2378 = vmatpush2.msra.mxu0 %v410
  %2379 = vmatprep.subr.mxu0 %v409
  %2380 = vmatpush2.msra.mxu0 %v408
  %2381 = vmatprep.subr.mxu0 %v407
  %2382 = vmatpush2.msra.mxu0 %v406
  %2383 = vmatprep.subr.mxu0 %v405
  %2384 = vmatpush2.msra.mxu0 %v404
  %2385 = vmatprep.subr.mxu0 %v403
  %2386 = vmatpush2.msra.mxu0 %v402
  %2387 = vmatprep.subr.mxu0 %v401
  %2388 = vmatpush2.msra.mxu0 %v400
  %2389 = vmatprep.subr.mxu0 %v399
  %2390 = vmatpush2.msra.mxu0 %v398
  %2391 = vmatprep.subr.mxu0 %v397
  %2392 = vmatpush2.msra.mxu0 %v396
  %2393 = vmatprep.subr.mxu0 %v395
  %2394 = vmatpush2.msra.mxu0 %v394
  %2395 = vmatprep.subr.mxu0 %v393
  %2396 = vmatpush2.msra.mxu0 %v392
  %2397 = vmatprep.subr.mxu0 %v391
  %2398 = vmatpush2.msra.mxu0 %v390
  %2399 = vmatprep.subr.mxu0 %v389
  %2400 = vmatpush2.msra.mxu0 %v388
  %2401 = vmatprep.subr.mxu0 %v387
  %2402 = vmatpush2.msra.mxu0 %v386
  %2403 = vmatprep.subr.mxu0 %v385
  %2404 = vmatpush2.msra.mxu0 %v384
  %2405 = vmatprep.subr.mxu0 %v383
  %2406 = vmatpush2.msra.mxu0 %v382
  %2407 = vmatprep.subr.mxu0 %v381
  %2408 = vmatpush2.msra.mxu0 %v380
  %2409 = vmatprep.mubr.f32.mxu0 %v1956
  %2410 = vmatmul.mubr.f32.gmra.mxu0 %v1954
  %v2411 = vpop.f32.mrf.mxu0
  %v2412 = vadd.f32 %v2341, %v2411
  %v2413 = vpop.f32.mrf.mxu0
  %v2414 = vadd.f32 %v2343, %v2413
  %2415 = vdwg.mxu0
  %2416 = vmatprep.subr.mxu0 %v443
  %2417 = vmatpush1.msra.mxu0 %v442
  %2418 = vmatprep.subr.mxu0 %v441
  %2419 = vmatpush1.msra.mxu0 %v440
  %2420 = vmatprep.subr.mxu0 %v439
  %2421 = vmatpush1.msra.mxu0 %v438
  %2422 = vmatprep.subr.mxu0 %v437
  %2423 = vmatpush1.msra.mxu0 %v436
  %2424 = vmatprep.subr.mxu0 %v435
  %2425 = vmatpush1.msra.mxu0 %v434
  %2426 = vmatprep.subr.mxu0 %v433
  %2427 = vmatpush1.msra.mxu0 %v432
  %2428 = vmatprep.subr.mxu0 %v431
  %2429 = vmatpush1.msra.mxu0 %v430
  %2430 = vmatprep.subr.mxu0 %v429
  %2431 = vmatpush1.msra.mxu0 %v428
  %2432 = vmatprep.subr.mxu0 %v427
  %2433 = vmatpush1.msra.mxu0 %v426
  %2434 = vmatprep.subr.mxu0 %v425
  %2435 = vmatpush1.msra.mxu0 %v424
  %2436 = vmatprep.subr.mxu0 %v423
  %2437 = vmatpush1.msra.mxu0 %v422
  %2438 = vmatprep.subr.mxu0 %v421
  %2439 = vmatpush1.msra.mxu0 %v420
  %2440 = vmatprep.subr.mxu0 %v419
  %2441 = vmatpush1.msra.mxu0 %v418
  %2442 = vmatprep.subr.mxu0 %v417
  %2443 = vmatpush1.msra.mxu0 %v416
  %2444 = vmatprep.subr.mxu0 %v415
  %2445 = vmatpush1.msra.mxu0 %v414
  %2446 = vmatprep.subr.mxu0 %v413
  %2447 = vmatpush1.msra.mxu0 %v412
  %2448 = vmatprep.subr.mxu0 %v475
  %2449 = vmatpush2.msra.mxu0 %v474
  %2450 = vmatprep.subr.mxu0 %v473
  %2451 = vmatpush2.msra.mxu0 %v472
  %2452 = vmatprep.subr.mxu0 %v471
  %2453 = vmatpush2.msra.mxu0 %v470
  %2454 = vmatprep.subr.mxu0 %v469
  %2455 = vmatpush2.msra.mxu0 %v468
  %2456 = vmatprep.subr.mxu0 %v467
  %2457 = vmatpush2.msra.mxu0 %v466
  %2458 = vmatprep.subr.mxu0 %v465
  %2459 = vmatpush2.msra.mxu0 %v464
  %2460 = vmatprep.subr.mxu0 %v463
  %2461 = vmatpush2.msra.mxu0 %v462
  %2462 = vmatprep.subr.mxu0 %v461
  %2463 = vmatpush2.msra.mxu0 %v460
  %2464 = vmatprep.subr.mxu0 %v459
  %2465 = vmatpush2.msra.mxu0 %v458
  %2466 = vmatprep.subr.mxu0 %v457
  %2467 = vmatpush2.msra.mxu0 %v456
  %2468 = vmatprep.subr.mxu0 %v455
  %2469 = vmatpush2.msra.mxu0 %v454
  %2470 = vmatprep.subr.mxu0 %v453
  %2471 = vmatpush2.msra.mxu0 %v452
  %2472 = vmatprep.subr.mxu0 %v451
  %2473 = vmatpush2.msra.mxu0 %v450
  %2474 = vmatprep.subr.mxu0 %v449
  %2475 = vmatpush2.msra.mxu0 %v448
  %2476 = vmatprep.subr.mxu0 %v447
  %2477 = vmatpush2.msra.mxu0 %v446
  %2478 = vmatprep.subr.mxu0 %v445
  %2479 = vmatpush2.msra.mxu0 %v444
  %2480 = vmatprep.mubr.f32.mxu0 %v1972
  %2481 = vmatmul.mubr.f32.gmra.mxu0 %v1964
  %v2482 = vpop.f32.mrf.mxu0
  %v2483 = vadd.f32 %v2412, %v2482
  %v2484 = vpop.f32.mrf.mxu0
  %v2485 = vadd.f32 %v2414, %v2484
  %2486 = vdwg.mxu0
  %2487 = vmatprep.subr.mxu0 %v507
  %2488 = vmatpush1.msra.mxu0 %v506
  %2489 = vmatprep.subr.mxu0 %v505
  %2490 = vmatpush1.msra.mxu0 %v504
  %2491 = vmatprep.subr.mxu0 %v503
  %2492 = vmatpush1.msra.mxu0 %v502
  %2493 = vmatprep.subr.mxu0 %v501
  %2494 = vmatpush1.msra.mxu0 %v500
  %2495 = vmatprep.subr.mxu0 %v499
  %2496 = vmatpush1.msra.mxu0 %v498
  %2497 = vmatprep.subr.mxu0 %v497
  %2498 = vmatpush1.msra.mxu0 %v496
  %2499 = vmatprep.subr.mxu0 %v495
  %2500 = vmatpush1.msra.mxu0 %v494
  %2501 = vmatprep.subr.mxu0 %v493
  %2502 = vmatpush1.msra.mxu0 %v492
  %2503 = vmatprep.subr.mxu0 %v491
  %2504 = vmatpush1.msra.mxu0 %v490
  %2505 = vmatprep.subr.mxu0 %v489
  %2506 = vmatpush1.msra.mxu0 %v488
  %2507 = vmatprep.subr.mxu0 %v487
  %2508 = vmatpush1.msra.mxu0 %v486
  %2509 = vmatprep.subr.mxu0 %v485
  %2510 = vmatpush1.msra.mxu0 %v484
  %2511 = vmatprep.subr.mxu0 %v483
  %2512 = vmatpush1.msra.mxu0 %v482
  %2513 = vmatprep.subr.mxu0 %v481
  %2514 = vmatpush1.msra.mxu0 %v480
  %2515 = vmatprep.subr.mxu0 %v479
  %2516 = vmatpush1.msra.mxu0 %v478
  %2517 = vmatprep.subr.mxu0 %v477
  %2518 = vmatpush1.msra.mxu0 %v476
  %2519 = vmatprep.subr.mxu0 %v539
  %2520 = vmatpush2.msra.mxu0 %v538
  %2521 = vmatprep.subr.mxu0 %v537
  %2522 = vmatpush2.msra.mxu0 %v536
  %2523 = vmatprep.subr.mxu0 %v535
  %2524 = vmatpush2.msra.mxu0 %v534
  %2525 = vmatprep.subr.mxu0 %v533
  %2526 = vmatpush2.msra.mxu0 %v532
  %2527 = vmatprep.subr.mxu0 %v531
  %2528 = vmatpush2.msra.mxu0 %v530
  %2529 = vmatprep.subr.mxu0 %v529
  %2530 = vmatpush2.msra.mxu0 %v528
  %2531 = vmatprep.subr.mxu0 %v527
  %2532 = vmatpush2.msra.mxu0 %v526
  %2533 = vmatprep.subr.mxu0 %v525
  %2534 = vmatpush2.msra.mxu0 %v524
  %2535 = vmatprep.subr.mxu0 %v523
  %2536 = vmatpush2.msra.mxu0 %v522
  %2537 = vmatprep.subr.mxu0 %v521
  %2538 = vmatpush2.msra.mxu0 %v520
  %2539 = vmatprep.subr.mxu0 %v519
  %2540 = vmatpush2.msra.mxu0 %v518
  %2541 = vmatprep.subr.mxu0 %v517
  %2542 = vmatpush2.msra.mxu0 %v516
  %2543 = vmatprep.subr.mxu0 %v515
  %2544 = vmatpush2.msra.mxu0 %v514
  %2545 = vmatprep.subr.mxu0 %v513
  %2546 = vmatpush2.msra.mxu0 %v512
  %2547 = vmatprep.subr.mxu0 %v511
  %2548 = vmatpush2.msra.mxu0 %v510
  %2549 = vmatprep.subr.mxu0 %v509
  %2550 = vmatpush2.msra.mxu0 %v508
  %2551 = vmatprep.mubr.f32.mxu0 %v1973
  %2552 = vmatmul.mubr.f32.gmra.mxu0 %v1971
  %v2553 = vpop.f32.mrf.mxu0
  %v2554 = vadd.f32 %v2483, %v2553
  %v2555 = vpop.f32.mrf.mxu0
  %v2556 = vadd.f32 %v2485, %v2555
  %2557 = vdwg.mxu0
  %v2558 = vmul.f32 %v2554, %v1204
  %v2559 = vmul.f32 %v2556, %v1208
  %v2560 = vadd.f32 %v2558, %v1217
  %v2561 = vadd.f32 %v2559, %v1221
  %v2562 = vtanh.pop %v2560
  %v2563 = vtanh.pop %v2561
  %v2564 = vmax.f32 %v1895, %v2562
  %v2565 = vmax.f32 %v1896, %v2563
  %s2566 = scalar_lea.vmem %s0, 96
  %v2567 = vld [vmem:[%s2566] sm:$0xff]
  %v2568 = vld [vmem:[%s2566 + $0x8] sm:$0xff]
  %v2569 = vld [vmem:[%s2566 + $0x10] sm:$0xff]
  %v2570 = vld [vmem:[%s2566 + $0x18] sm:$0xff]
  %v2575 = vcombine.high %v2567, %v2567
  %v2577 = vunpack.c.l.s4 1983009808
  %v2578 = vunpack.c.0.s8 %v2577
  %v2579 = vlaneseq
  %v2580 = vshrl.u32 %v2579, 7
  %v2581 = vsub.s32 %v2578, %v2580
  %v2582 = vrot.slane %v2567, %v2581
  %v2584 = vunpack.c.l.s4 1983009808
  %v2585 = vunpack.c.0.s8 %v2584
  %v2586 = vlaneseq
  %v2587 = vshrl.u32 %v2586, 7
  %v2588 = vsub.s32 %v2585, %v2587
  %v2589 = vrot.slane %v2575, %v2588
  %v2590 = vcombine.high %v2582, %v2582
  %v2591 = vcombine.high %v2589, %v2589
  %v2592 = vcombine.high %v2568, %v2568
  %v2594 = vunpack.c.l.s4 1983009808
  %v2595 = vunpack.c.0.s8 %v2594
  %v2596 = vlaneseq
  %v2597 = vshrl.u32 %v2596, 7
  %v2598 = vsub.s32 %v2595, %v2597
  %v2599 = vrot.slane %v2568, %v2598
  %v2601 = vunpack.c.l.s4 1983009808
  %v2602 = vunpack.c.0.s8 %v2601
  %v2603 = vlaneseq
  %v2604 = vshrl.u32 %v2603, 7
  %v2605 = vsub.s32 %v2602, %v2604
  %v2606 = vrot.slane %v2592, %v2605
  %v2607 = vcombine.high %v2599, %v2599
  %v2608 = vcombine.high %v2606, %v2606
  %v2609 = vcombine.high %v2569, %v2569
  %v2611 = vunpack.c.l.s4 1983009808
  %v2612 = vunpack.c.0.s8 %v2611
  %v2613 = vlaneseq
  %v2614 = vshrl.u32 %v2613, 7
  %v2615 = vsub.s32 %v2612, %v2614
  %v2616 = vrot.slane %v2569, %v2615
  %v2618 = vunpack.c.l.s4 1983009808
  %v2619 = vunpack.c.0.s8 %v2618
  %v2620 = vlaneseq
  %v2621 = vshrl.u32 %v2620, 7
  %v2622 = vsub.s32 %v2619, %v2621
  %v2623 = vrot.slane %v2609, %v2622
  %v2624 = vcombine.high %v2616, %v2616
  %v2625 = vcombine.high %v2623, %v2623
  %v2626 = vcombine.high %v2570, %v2570
  %v2628 = vunpack.c.l.s4 1983009808
  %v2629 = vunpack.c.0.s8 %v2628
  %v2630 = vlaneseq
  %v2631 = vshrl.u32 %v2630, 7
  %v2632 = vsub.s32 %v2629, %v2631
  %v2633 = vrot.slane %v2570, %v2632
  %v2635 = vunpack.c.l.s4 1983009808
  %v2636 = vunpack.c.0.s8 %v2635
  %v2637 = vlaneseq
  %v2638 = vshrl.u32 %v2637, 7
  %v2639 = vsub.s32 %v2636, %v2638
  %v2640 = vrot.slane %v2626, %v2639
  %v2641 = vcombine.high %v2633, %v2633
  %v2642 = vcombine.high %v2640, %v2640
  %2659 = vmatprep.subr.mxu0 %v59
  %2660 = vmatpush1.msra.mxu0 %v58
  %2661 = vmatprep.subr.mxu0 %v57
  %2662 = vmatpush1.msra.mxu0 %v56
  %2663 = vmatprep.subr.mxu0 %v55
  %2664 = vmatpush1.msra.mxu0 %v54
  %2665 = vmatprep.subr.mxu0 %v53
  %2666 = vmatpush1.msra.mxu0 %v52
  %2667 = vmatprep.subr.mxu0 %v51
  %2668 = vmatpush1.msra.mxu0 %v50
  %2669 = vmatprep.subr.mxu0 %v49
  %2670 = vmatpush1.msra.mxu0 %v48
  %2671 = vmatprep.subr.mxu0 %v47
  %2672 = vmatpush1.msra.mxu0 %v46
  %2673 = vmatprep.subr.mxu0 %v45
  %2674 = vmatpush1.msra.mxu0 %v44
  %2675 = vmatprep.subr.mxu0 %v43
  %2676 = vmatpush1.msra.mxu0 %v42
  %2677 = vmatprep.subr.mxu0 %v41
  %2678 = vmatpush1.msra.mxu0 %v40
  %2679 = vmatprep.subr.mxu0 %v39
  %2680 = vmatpush1.msra.mxu0 %v38
  %2681 = vmatprep.subr.mxu0 %v37
  %2682 = vmatpush1.msra.mxu0 %v36
  %2683 = vmatprep.subr.mxu0 %v35
  %2684 = vmatpush1.msra.mxu0 %v34
  %2685 = vmatprep.subr.mxu0 %v33
  %2686 = vmatpush1.msra.mxu0 %v32
  %2687 = vmatprep.subr.mxu0 %v31
  %2688 = vmatpush1.msra.mxu0 %v30
  %2689 = vmatprep.subr.mxu0 %v29
  %2690 = vmatpush1.msra.mxu0 %v28
  %2691 = vmatprep.subr.mxu0 %v91
  %2692 = vmatpush2.msra.mxu0 %v90
  %2693 = vmatprep.subr.mxu0 %v89
  %2694 = vmatpush2.msra.mxu0 %v88
  %2695 = vmatprep.subr.mxu0 %v87
  %2696 = vmatpush2.msra.mxu0 %v86
  %2697 = vmatprep.subr.mxu0 %v85
  %2698 = vmatpush2.msra.mxu0 %v84
  %2699 = vmatprep.subr.mxu0 %v83
  %2700 = vmatpush2.msra.mxu0 %v82
  %2701 = vmatprep.subr.mxu0 %v81
  %2702 = vmatpush2.msra.mxu0 %v80
  %2703 = vmatprep.subr.mxu0 %v79
  %2704 = vmatpush2.msra.mxu0 %v78
  %2705 = vmatprep.subr.mxu0 %v77
  %2706 = vmatpush2.msra.mxu0 %v76
  %2707 = vmatprep.subr.mxu0 %v75
  %2708 = vmatpush2.msra.mxu0 %v74
  %2709 = vmatprep.subr.mxu0 %v73
  %2710 = vmatpush2.msra.mxu0 %v72
  %2711 = vmatprep.subr.mxu0 %v71
  %2712 = vmatpush2.msra.mxu0 %v70
  %2713 = vmatprep.subr.mxu0 %v69
  %2714 = vmatpush2.msra.mxu0 %v68
  %2715 = vmatprep.subr.mxu0 %v67
  %2716 = vmatpush2.msra.mxu0 %v66
  %2717 = vmatprep.subr.mxu0 %v65
  %2718 = vmatpush2.msra.mxu0 %v64
  %2719 = vmatprep.subr.mxu0 %v63
  %2720 = vmatpush2.msra.mxu0 %v62
  %2721 = vmatprep.subr.mxu0 %v61
  %2722 = vmatpush2.msra.mxu0 %v60
  %2723 = vmatprep.mubr.f32.mxu0 %v2590
  %2724 = vmatmul.mubr.f32.gmra.mxu0 %v2582
  %v2725 = vpop.f32.mrf.mxu0
  %v2726 = vadd.f32 0.0, %v2725
  %v2727 = vpop.f32.mrf.mxu0
  %v2728 = vadd.f32 0.0, %v2727
  %2729 = vdwg.mxu0
  %2730 = vmatprep.subr.mxu0 %v123
  %2731 = vmatpush1.msra.mxu0 %v122
  %2732 = vmatprep.subr.mxu0 %v121
  %2733 = vmatpush1.msra.mxu0 %v120
  %2734 = vmatprep.subr.mxu0 %v119
  %2735 = vmatpush1.msra.mxu0 %v118
  %2736 = vmatprep.subr.mxu0 %v117
  %2737 = vmatpush1.msra.mxu0 %v116
  %2738 = vmatprep.subr.mxu0 %v115
  %2739 = vmatpush1.msra.mxu0 %v114
  %2740 = vmatprep.subr.mxu0 %v113
  %2741 = vmatpush1.msra.mxu0 %v112
  %2742 = vmatprep.subr.mxu0 %v111
  %2743 = vmatpush1.msra.mxu0 %v110
  %2744 = vmatprep.subr.mxu0 %v109
  %2745 = vmatpush1.msra.mxu0 %v108
  %2746 = vmatprep.subr.mxu0 %v107
  %2747 = vmatpush1.msra.mxu0 %v106
  %2748 = vmatprep.subr.mxu0 %v105
  %2749 = vmatpush1.msra.mxu0 %v104
  %2750 = vmatprep.subr.mxu0 %v103
  %2751 = vmatpush1.msra.mxu0 %v102
  %2752 = vmatprep.subr.mxu0 %v101
  %2753 = vmatpush1.msra.mxu0 %v100
  %2754 = vmatprep.subr.mxu0 %v99
  %2755 = vmatpush1.msra.mxu0 %v98
  %2756 = vmatprep.subr.mxu0 %v97
  %2757 = vmatpush1.msra.mxu0 %v96
  %2758 = vmatprep.subr.mxu0 %v95
  %2759 = vmatpush1.msra.mxu0 %v94
  %2760 = vmatprep.subr.mxu0 %v93
  %2761 = vmatpush1.msra.mxu0 %v92
  %2762 = vmatprep.subr.mxu0 %v155
  %2763 = vmatpush2.msra.mxu0 %v154
  %2764 = vmatprep.subr.mxu0 %v153
  %2765 = vmatpush2.msra.mxu0 %v152
  %2766 = vmatprep.subr.mxu0 %v151
  %2767 = vmatpush2.msra.mxu0 %v150
  %2768 = vmatprep.subr.mxu0 %v149
  %2769 = vmatpush2.msra.mxu0 %v148
  %2770 = vmatprep.subr.mxu0 %v147
  %2771 = vmatpush2.msra.mxu0 %v146
  %2772 = vmatprep.subr.mxu0 %v145
  %2773 = vmatpush2.msra.mxu0 %v144
  %2774 = vmatprep.subr.mxu0 %v143
  %2775 = vmatpush2.msra.mxu0 %v142
  %2776 = vmatprep.subr.mxu0 %v141
  %2777 = vmatpush2.msra.mxu0 %v140
  %2778 = vmatprep.subr.mxu0 %v139
  %2779 = vmatpush2.msra.mxu0 %v138
  %2780 = vmatprep.subr.mxu0 %v137
  %2781 = vmatpush2.msra.mxu0 %v136
  %2782 = vmatprep.subr.mxu0 %v135
  %2783 = vmatpush2.msra.mxu0 %v134
  %2784 = vmatprep.subr.mxu0 %v133
  %2785 = vmatpush2.msra.mxu0 %v132
  %2786 = vmatprep.subr.mxu0 %v131
  %2787 = vmatpush2.msra.mxu0 %v130
  %2788 = vmatprep.subr.mxu0 %v129
  %2789 = vmatpush2.msra.mxu0 %v128
  %2790 = vmatprep.subr.mxu0 %v127
  %2791 = vmatpush2.msra.mxu0 %v126
  %2792 = vmatprep.subr.mxu0 %v125
  %2793 = vmatpush2.msra.mxu0 %v124
  %2794 = vmatprep.mubr.f32.mxu0 %v2591
  %2795 = vmatmul.mubr.f32.gmra.mxu0 %v2589
  %v2796 = vpop.f32.mrf.mxu0
  %v2797 = vadd.f32 %v2726, %v2796
  %v2798 = vpop.f32.mrf.mxu0
  %v2799 = vadd.f32 %v2728, %v2798
  %2800 = vdwg.mxu0
  %2801 = vmatprep.subr.mxu0 %v187
  %2802 = vmatpush1.msra.mxu0 %v186
  %2803 = vmatprep.subr.mxu0 %v185
  %2804 = vmatpush1.msra.mxu0 %v184
  %2805 = vmatprep.subr.mxu0 %v183
  %2806 = vmatpush1.msra.mxu0 %v182
  %2807 = vmatprep.subr.mxu0 %v181
  %2808 = vmatpush1.msra.mxu0 %v180
  %2809 = vmatprep.subr.mxu0 %v179
  %2810 = vmatpush1.msra.mxu0 %v178
  %2811 = vmatprep.subr.mxu0 %v177
  %2812 = vmatpush1.msra.mxu0 %v176
  %2813 = vmatprep.subr.mxu0 %v175
  %2814 = vmatpush1.msra.mxu0 %v174
  %2815 = vmatprep.subr.mxu0 %v173
  %2816 = vmatpush1.msra.mxu0 %v172
  %2817 = vmatprep.subr.mxu0 %v171
  %2818 = vmatpush1.msra.mxu0 %v170
  %2819 = vmatprep.subr.mxu0 %v169
  %2820 = vmatpush1.msra.mxu0 %v168
  %2821 = vmatprep.subr.mxu0 %v167
  %2822 = vmatpush1.msra.mxu0 %v166
  %2823 = vmatprep.subr.mxu0 %v165
  %2824 = vmatpush1.msra.mxu0 %v164
  %2825 = vmatprep.subr.mxu0 %v163
  %2826 = vmatpush1.msra.mxu0 %v162
  %2827 = vmatprep.subr.mxu0 %v161
  %2828 = vmatpush1.msra.mxu0 %v160
  %2829 = vmatprep.subr.mxu0 %v159
  %2830 = vmatpush1.msra.mxu0 %v158
  %2831 = vmatprep.subr.mxu0 %v157
  %2832 = vmatpush1.msra.mxu0 %v156
  %2833 = vmatprep.subr.mxu0 %v219
  %2834 = vmatpush2.msra.mxu0 %v218
  %2835 = vmatprep.subr.mxu0 %v217
  %2836 = vmatpush2.msra.mxu0 %v216
  %2837 = vmatprep.subr.mxu0 %v215
  %2838 = vmatpush2.msra.mxu0 %v214
  %2839 = vmatprep.subr.mxu0 %v213
  %2840 = vmatpush2.msra.mxu0 %v212
  %2841 = vmatprep.subr.mxu0 %v211
  %2842 = vmatpush2.msra.mxu0 %v210
  %2843 = vmatprep.subr.mxu0 %v209
  %2844 = vmatpush2.msra.mxu0 %v208
  %2845 = vmatprep.subr.mxu0 %v207
  %2846 = vmatpush2.msra.mxu0 %v206
  %2847 = vmatprep.subr.mxu0 %v205
  %2848 = vmatpush2.msra.mxu0 %v204
  %2849 = vmatprep.subr.mxu0 %v203
  %2850 = vmatpush2.msra.mxu0 %v202
  %2851 = vmatprep.subr.mxu0 %v201
  %2852 = vmatpush2.msra.mxu0 %v200
  %2853 = vmatprep.subr.mxu0 %v199
  %2854 = vmatpush2.msra.mxu0 %v198
  %2855 = vmatprep.subr.mxu0 %v197
  %2856 = vmatpush2.msra.mxu0 %v196
  %2857 = vmatprep.subr.mxu0 %v195
  %2858 = vmatpush2.msra.mxu0 %v194
  %2859 = vmatprep.subr.mxu0 %v193
  %2860 = vmatpush2.msra.mxu0 %v192
  %2861 = vmatprep.subr.mxu0 %v191
  %2862 = vmatpush2.msra.mxu0 %v190
  %2863 = vmatprep.subr.mxu0 %v189
  %2864 = vmatpush2.msra.mxu0 %v188
  %2865 = vmatprep.mubr.f32.mxu0 %v2607
  %2866 = vmatmul.mubr.f32.gmra.mxu0 %v2599
  %v2867 = vpop.f32.mrf.mxu0
  %v2868 = vadd.f32 %v2797, %v2867
  %v2869 = vpop.f32.mrf.mxu0
  %v2870 = vadd.f32 %v2799, %v2869
  %2871 = vdwg.mxu0
  %2872 = vmatprep.subr.mxu0 %v251
  %2873 = vmatpush1.msra.mxu0 %v250
  %2874 = vmatprep.subr.mxu0 %v249
  %2875 = vmatpush1.msra.mxu0 %v248
  %2876 = vmatprep.subr.mxu0 %v247
  %2877 = vmatpush1.msra.mxu0 %v246
  %2878 = vmatprep.subr.mxu0 %v245
  %2879 = vmatpush1.msra.mxu0 %v244
  %2880 = vmatprep.subr.mxu0 %v243
  %2881 = vmatpush1.msra.mxu0 %v242
  %2882 = vmatprep.subr.mxu0 %v241
  %2883 = vmatpush1.msra.mxu0 %v240
  %2884 = vmatprep.subr.mxu0 %v239
  %2885 = vmatpush1.msra.mxu0 %v238
  %2886 = vmatprep.subr.mxu0 %v237
  %2887 = vmatpush1.msra.mxu0 %v236
  %2888 = vmatprep.subr.mxu0 %v235
  %2889 = vmatpush1.msra.mxu0 %v234
  %2890 = vmatprep.subr.mxu0 %v233
  %2891 = vmatpush1.msra.mxu0 %v232
  %2892 = vmatprep.subr.mxu0 %v231
  %2893 = vmatpush1.msra.mxu0 %v230
  %2894 = vmatprep.subr.mxu0 %v229
  %2895 = vmatpush1.msra.mxu0 %v228
  %2896 = vmatprep.subr.mxu0 %v227
  %2897 = vmatpush1.msra.mxu0 %v226
  %2898 = vmatprep.subr.mxu0 %v225
  %2899 = vmatpush1.msra.mxu0 %v224
  %2900 = vmatprep.subr.mxu0 %v223
  %2901 = vmatpush1.msra.mxu0 %v222
  %2902 = vmatprep.subr.mxu0 %v221
  %2903 = vmatpush1.msra.mxu0 %v220
  %2904 = vmatprep.subr.mxu0 %v283
  %2905 = vmatpush2.msra.mxu0 %v282
  %2906 = vmatprep.subr.mxu0 %v281
  %2907 = vmatpush2.msra.mxu0 %v280
  %2908 = vmatprep.subr.mxu0 %v279
  %2909 = vmatpush2.msra.mxu0 %v278
  %2910 = vmatprep.subr.mxu0 %v277
  %2911 = vmatpush2.msra.mxu0 %v276
  %2912 = vmatprep.subr.mxu0 %v275
  %2913 = vmatpush2.msra.mxu0 %v274
  %2914 = vmatprep.subr.mxu0 %v273
  %2915 = vmatpush2.msra.mxu0 %v272
  %2916 = vmatprep.subr.mxu0 %v271
  %2917 = vmatpush2.msra.mxu0 %v270
  %2918 = vmatprep.subr.mxu0 %v269
  %2919 = vmatpush2.msra.mxu0 %v268
  %2920 = vmatprep.subr.mxu0 %v267
  %2921 = vmatpush2.msra.mxu0 %v266
  %2922 = vmatprep.subr.mxu0 %v265
  %2923 = vmatpush2.msra.mxu0 %v264
  %2924 = vmatprep.subr.mxu0 %v263
  %2925 = vmatpush2.msra.mxu0 %v262
  %2926 = vmatprep.subr.mxu0 %v261
  %2927 = vmatpush2.msra.mxu0 %v260
  %2928 = vmatprep.subr.mxu0 %v259
  %2929 = vmatpush2.msra.mxu0 %v258
  %2930 = vmatprep.subr.mxu0 %v257
  %2931 = vmatpush2.msra.mxu0 %v256
  %2932 = vmatprep.subr.mxu0 %v255
  %2933 = vmatpush2.msra.mxu0 %v254
  %2934 = vmatprep.subr.mxu0 %v253
  %2935 = vmatpush2.msra.mxu0 %v252
  %2936 = vmatprep.mubr.f32.mxu0 %v2608
  %2937 = vmatmul.mubr.f32.gmra.mxu0 %v2606
  %v2938 = vpop.f32.mrf.mxu0
  %v2939 = vadd.f32 %v2868, %v2938
  %v2940 = vpop.f32.mrf.mxu0
  %v2941 = vadd.f32 %v2870, %v2940
  %2942 = vdwg.mxu0
  %2943 = vmatprep.subr.mxu0 %v315
  %2944 = vmatpush1.msra.mxu0 %v314
  %2945 = vmatprep.subr.mxu0 %v313
  %2946 = vmatpush1.msra.mxu0 %v312
  %2947 = vmatprep.subr.mxu0 %v311
  %2948 = vmatpush1.msra.mxu0 %v310
  %2949 = vmatprep.subr.mxu0 %v309
  %2950 = vmatpush1.msra.mxu0 %v308
  %2951 = vmatprep.subr.mxu0 %v307
  %2952 = vmatpush1.msra.mxu0 %v306
  %2953 = vmatprep.subr.mxu0 %v305
  %2954 = vmatpush1.msra.mxu0 %v304
  %2955 = vmatprep.subr.mxu0 %v303
  %2956 = vmatpush1.msra.mxu0 %v302
  %2957 = vmatprep.subr.mxu0 %v301
  %2958 = vmatpush1.msra.mxu0 %v300
  %2959 = vmatprep.subr.mxu0 %v299
  %2960 = vmatpush1.msra.mxu0 %v298
  %2961 = vmatprep.subr.mxu0 %v297
  %2962 = vmatpush1.msra.mxu0 %v296
  %2963 = vmatprep.subr.mxu0 %v295
  %2964 = vmatpush1.msra.mxu0 %v294
  %2965 = vmatprep.subr.mxu0 %v293
  %2966 = vmatpush1.msra.mxu0 %v292
  %2967 = vmatprep.subr.mxu0 %v291
  %2968 = vmatpush1.msra.mxu0 %v290
  %2969 = vmatprep.subr.mxu0 %v289
  %2970 = vmatpush1.msra.mxu0 %v288
  %2971 = vmatprep.subr.mxu0 %v287
  %2972 = vmatpush1.msra.mxu0 %v286
  %2973 = vmatprep.subr.mxu0 %v285
  %2974 = vmatpush1.msra.mxu0 %v284
  %2975 = vmatprep.subr.mxu0 %v347
  %2976 = vmatpush2.msra.mxu0 %v346
  %2977 = vmatprep.subr.mxu0 %v345
  %2978 = vmatpush2.msra.mxu0 %v344
  %2979 = vmatprep.subr.mxu0 %v343
  %2980 = vmatpush2.msra.mxu0 %v342
  %2981 = vmatprep.subr.mxu0 %v341
  %2982 = vmatpush2.msra.mxu0 %v340
  %2983 = vmatprep.subr.mxu0 %v339
  %2984 = vmatpush2.msra.mxu0 %v338
  %2985 = vmatprep.subr.mxu0 %v337
  %2986 = vmatpush2.msra.mxu0 %v336
  %2987 = vmatprep.subr.mxu0 %v335
  %2988 = vmatpush2.msra.mxu0 %v334
  %2989 = vmatprep.subr.mxu0 %v333
  %2990 = vmatpush2.msra.mxu0 %v332
  %2991 = vmatprep.subr.mxu0 %v331
  %2992 = vmatpush2.msra.mxu0 %v330
  %2993 = vmatprep.subr.mxu0 %v329
  %2994 = vmatpush2.msra.mxu0 %v328
  %2995 = vmatprep.subr.mxu0 %v327
  %2996 = vmatpush2.msra.mxu0 %v326
  %2997 = vmatprep.subr.mxu0 %v325
  %2998 = vmatpush2.msra.mxu0 %v324
  %2999 = vmatprep.subr.mxu0 %v323
  %3000 = vmatpush2.msra.mxu0 %v322
  %3001 = vmatprep.subr.mxu0 %v321
  %3002 = vmatpush2.msra.mxu0 %v320
  %3003 = vmatprep.subr.mxu0 %v319
  %3004 = vmatpush2.msra.mxu0 %v318
  %3005 = vmatprep.subr.mxu0 %v317
  %3006 = vmatpush2.msra.mxu0 %v316
  %3007 = vmatprep.mubr.f32.mxu0 %v2624
  %3008 = vmatmul.mubr.f32.gmra.mxu0 %v2616
  %v3009 = vpop.f32.mrf.mxu0
  %v3010 = vadd.f32 %v2939, %v3009
  %v3011 = vpop.f32.mrf.mxu0
  %v3012 = vadd.f32 %v2941, %v3011
  %3013 = vdwg.mxu0
  %3014 = vmatprep.subr.mxu0 %v379
  %3015 = vmatpush1.msra.mxu0 %v378
  %3016 = vmatprep.subr.mxu0 %v377
  %3017 = vmatpush1.msra.mxu0 %v376
  %3018 = vmatprep.subr.mxu0 %v375
  %3019 = vmatpush1.msra.mxu0 %v374
  %3020 = vmatprep.subr.mxu0 %v373
  %3021 = vmatpush1.msra.mxu0 %v372
  %3022 = vmatprep.subr.mxu0 %v371
  %3023 = vmatpush1.msra.mxu0 %v370
  %3024 = vmatprep.subr.mxu0 %v369
  %3025 = vmatpush1.msra.mxu0 %v368
  %3026 = vmatprep.subr.mxu0 %v367
  %3027 = vmatpush1.msra.mxu0 %v366
  %3028 = vmatprep.subr.mxu0 %v365
  %3029 = vmatpush1.msra.mxu0 %v364
  %3030 = vmatprep.subr.mxu0 %v363
  %3031 = vmatpush1.msra.mxu0 %v362
  %3032 = vmatprep.subr.mxu0 %v361
  %3033 = vmatpush1.msra.mxu0 %v360
  %3034 = vmatprep.subr.mxu0 %v359
  %3035 = vmatpush1.msra.mxu0 %v358
  %3036 = vmatprep.subr.mxu0 %v357
  %3037 = vmatpush1.msra.mxu0 %v356
  %3038 = vmatprep.subr.mxu0 %v355
  %3039 = vmatpush1.msra.mxu0 %v354
  %3040 = vmatprep.subr.mxu0 %v353
  %3041 = vmatpush1.msra.mxu0 %v352
  %3042 = vmatprep.subr.mxu0 %v351
  %3043 = vmatpush1.msra.mxu0 %v350
  %3044 = vmatprep.subr.mxu0 %v349
  %3045 = vmatpush1.msra.mxu0 %v348
  %3046 = vmatprep.subr.mxu0 %v411
  %3047 = vmatpush2.msra.mxu0 %v410
  %3048 = vmatprep.subr.mxu0 %v409
  %3049 = vmatpush2.msra.mxu0 %v408
  %3050 = vmatprep.subr.mxu0 %v407
  %3051 = vmatpush2.msra.mxu0 %v406
  %3052 = vmatprep.subr.mxu0 %v405
  %3053 = vmatpush2.msra.mxu0 %v404
  %3054 = vmatprep.subr.mxu0 %v403
  %3055 = vmatpush2.msra.mxu0 %v402
  %3056 = vmatprep.subr.mxu0 %v401
  %3057 = vmatpush2.msra.mxu0 %v400
  %3058 = vmatprep.subr.mxu0 %v399
  %3059 = vmatpush2.msra.mxu0 %v398
  %3060 = vmatprep.subr.mxu0 %v397
  %3061 = vmatpush2.msra.mxu0 %v396
  %3062 = vmatprep.subr.mxu0 %v395
  %3063 = vmatpush2.msra.mxu0 %v394
  %3064 = vmatprep.subr.mxu0 %v393
  %3065 = vmatpush2.msra.mxu0 %v392
  %3066 = vmatprep.subr.mxu0 %v391
  %3067 = vmatpush2.msra.mxu0 %v390
  %3068 = vmatprep.subr.mxu0 %v389
  %3069 = vmatpush2.msra.mxu0 %v388
  %3070 = vmatprep.subr.mxu0 %v387
  %3071 = vmatpush2.msra.mxu0 %v386
  %3072 = vmatprep.subr.mxu0 %v385
  %3073 = vmatpush2.msra.mxu0 %v384
  %3074 = vmatprep.subr.mxu0 %v383
  %3075 = vmatpush2.msra.mxu0 %v382
  %3076 = vmatprep.subr.mxu0 %v381
  %3077 = vmatpush2.msra.mxu0 %v380
  %3078 = vmatprep.mubr.f32.mxu0 %v2625
  %3079 = vmatmul.mubr.f32.gmra.mxu0 %v2623
  %v3080 = vpop.f32.mrf.mxu0
  %v3081 = vadd.f32 %v3010, %v3080
  %v3082 = vpop.f32.mrf.mxu0
  %v3083 = vadd.f32 %v3012, %v3082
  %3084 = vdwg.mxu0
  %3085 = vmatprep.subr.mxu0 %v443
  %3086 = vmatpush1.msra.mxu0 %v442
  %3087 = vmatprep.subr.mxu0 %v441
  %3088 = vmatpush1.msra.mxu0 %v440
  %3089 = vmatprep.subr.mxu0 %v439
  %3090 = vmatpush1.msra.mxu0 %v438
  %3091 = vmatprep.subr.mxu0 %v437
  %3092 = vmatpush1.msra.mxu0 %v436
  %3093 = vmatprep.subr.mxu0 %v435
  %3094 = vmatpush1.msra.mxu0 %v434
  %3095 = vmatprep.subr.mxu0 %v433
  %3096 = vmatpush1.msra.mxu0 %v432
  %3097 = vmatprep.subr.mxu0 %v431
  %3098 = vmatpush1.msra.mxu0 %v430
  %3099 = vmatprep.subr.mxu0 %v429
  %3100 = vmatpush1.msra.mxu0 %v428
  %3101 = vmatprep.subr.mxu0 %v427
  %3102 = vmatpush1.msra.mxu0 %v426
  %3103 = vmatprep.subr.mxu0 %v425
  %3104 = vmatpush1.msra.mxu0 %v424
  %3105 = vmatprep.subr.mxu0 %v423
  %3106 = vmatpush1.msra.mxu0 %v422
  %3107 = vmatprep.subr.mxu0 %v421
  %3108 = vmatpush1.msra.mxu0 %v420
  %3109 = vmatprep.subr.mxu0 %v419
  %3110 = vmatpush1.msra.mxu0 %v418
  %3111 = vmatprep.subr.mxu0 %v417
  %3112 = vmatpush1.msra.mxu0 %v416
  %3113 = vmatprep.subr.mxu0 %v415
  %3114 = vmatpush1.msra.mxu0 %v414
  %3115 = vmatprep.subr.mxu0 %v413
  %3116 = vmatpush1.msra.mxu0 %v412
  %3117 = vmatprep.subr.mxu0 %v475
  %3118 = vmatpush2.msra.mxu0 %v474
  %3119 = vmatprep.subr.mxu0 %v473
  %3120 = vmatpush2.msra.mxu0 %v472
  %3121 = vmatprep.subr.mxu0 %v471
  %3122 = vmatpush2.msra.mxu0 %v470
  %3123 = vmatprep.subr.mxu0 %v469
  %3124 = vmatpush2.msra.mxu0 %v468
  %3125 = vmatprep.subr.mxu0 %v467
  %3126 = vmatpush2.msra.mxu0 %v466
  %3127 = vmatprep.subr.mxu0 %v465
  %3128 = vmatpush2.msra.mxu0 %v464
  %3129 = vmatprep.subr.mxu0 %v463
  %3130 = vmatpush2.msra.mxu0 %v462
  %3131 = vmatprep.subr.mxu0 %v461
  %3132 = vmatpush2.msra.mxu0 %v460
  %3133 = vmatprep.subr.mxu0 %v459
  %3134 = vmatpush2.msra.mxu0 %v458
  %3135 = vmatprep.subr.mxu0 %v457
  %3136 = vmatpush2.msra.mxu0 %v456
  %3137 = vmatprep.subr.mxu0 %v455
  %3138 = vmatpush2.msra.mxu0 %v454
  %3139 = vmatprep.subr.mxu0 %v453
  %3140 = vmatpush2.msra.mxu0 %v452
  %3141 = vmatprep.subr.mxu0 %v451
  %3142 = vmatpush2.msra.mxu0 %v450
  %3143 = vmatprep.subr.mxu0 %v449
  %3144 = vmatpush2.msra.mxu0 %v448
  %3145 = vmatprep.subr.mxu0 %v447
  %3146 = vmatpush2.msra.mxu0 %v446
  %3147 = vmatprep.subr.mxu0 %v445
  %3148 = vmatpush2.msra.mxu0 %v444
  %3149 = vmatprep.mubr.f32.mxu0 %v2641
  %3150 = vmatmul.mubr.f32.gmra.mxu0 %v2633
  %v3151 = vpop.f32.mrf.mxu0
  %v3152 = vadd.f32 %v3081, %v3151
  %v3153 = vpop.f32.mrf.mxu0
  %v3154 = vadd.f32 %v3083, %v3153
  %3155 = vdwg.mxu0
  %3156 = vmatprep.subr.mxu0 %v507
  %3157 = vmatpush1.msra.mxu0 %v506
  %3158 = vmatprep.subr.mxu0 %v505
  %3159 = vmatpush1.msra.mxu0 %v504
  %3160 = vmatprep.subr.mxu0 %v503
  %3161 = vmatpush1.msra.mxu0 %v502
  %3162 = vmatprep.subr.mxu0 %v501
  %3163 = vmatpush1.msra.mxu0 %v500
  %3164 = vmatprep.subr.mxu0 %v499
  %3165 = vmatpush1.msra.mxu0 %v498
  %3166 = vmatprep.subr.mxu0 %v497
  %3167 = vmatpush1.msra.mxu0 %v496
  %3168 = vmatprep.subr.mxu0 %v495
  %3169 = vmatpush1.msra.mxu0 %v494
  %3170 = vmatprep.subr.mxu0 %v493
  %3171 = vmatpush1.msra.mxu0 %v492
  %3172 = vmatprep.subr.mxu0 %v491
  %3173 = vmatpush1.msra.mxu0 %v490
  %3174 = vmatprep.subr.mxu0 %v489
  %3175 = vmatpush1.msra.mxu0 %v488
  %3176 = vmatprep.subr.mxu0 %v487
  %3177 = vmatpush1.msra.mxu0 %v486
  %3178 = vmatprep.subr.mxu0 %v485
  %3179 = vmatpush1.msra.mxu0 %v484
  %3180 = vmatprep.subr.mxu0 %v483
  %3181 = vmatpush1.msra.mxu0 %v482
  %3182 = vmatprep.subr.mxu0 %v481
  %3183 = vmatpush1.msra.mxu0 %v480
  %3184 = vmatprep.subr.mxu0 %v479
  %3185 = vmatpush1.msra.mxu0 %v478
  %3186 = vmatprep.subr.mxu0 %v477
  %3187 = vmatpush1.msra.mxu0 %v476
  %3188 = vmatprep.subr.mxu0 %v539
  %3189 = vmatpush2.msra.mxu0 %v538
  %3190 = vmatprep.subr.mxu0 %v537
  %3191 = vmatpush2.msra.mxu0 %v536
  %3192 = vmatprep.subr.mxu0 %v535
  %3193 = vmatpush2.msra.mxu0 %v534
  %3194 = vmatprep.subr.mxu0 %v533
  %3195 = vmatpush2.msra.mxu0 %v532
  %3196 = vmatprep.subr.mxu0 %v531
  %3197 = vmatpush2.msra.mxu0 %v530
  %3198 = vmatprep.subr.mxu0 %v529
  %3199 = vmatpush2.msra.mxu0 %v528
  %3200 = vmatprep.subr.mxu0 %v527
  %3201 = vmatpush2.msra.mxu0 %v526
  %3202 = vmatprep.subr.mxu0 %v525
  %3203 = vmatpush2.msra.mxu0 %v524
  %3204 = vmatprep.subr.mxu0 %v523
  %3205 = vmatpush2.msra.mxu0 %v522
  %3206 = vmatprep.subr.mxu0 %v521
  %3207 = vmatpush2.msra.mxu0 %v520
  %3208 = vmatprep.subr.mxu0 %v519
  %3209 = vmatpush2.msra.mxu0 %v518
  %3210 = vmatprep.subr.mxu0 %v517
  %3211 = vmatpush2.msra.mxu0 %v516
  %3212 = vmatprep.subr.mxu0 %v515
  %3213 = vmatpush2.msra.mxu0 %v514
  %3214 = vmatprep.subr.mxu0 %v513
  %3215 = vmatpush2.msra.mxu0 %v512
  %3216 = vmatprep.subr.mxu0 %v511
  %3217 = vmatpush2.msra.mxu0 %v510
  %3218 = vmatprep.subr.mxu0 %v509
  %3219 = vmatpush2.msra.mxu0 %v508
  %3220 = vmatprep.mubr.f32.mxu0 %v2642
  %3221 = vmatmul.mubr.f32.gmra.mxu0 %v2640
  %v3222 = vpop.f32.mrf.mxu0
  %v3223 = vadd.f32 %v3152, %v3222
  %v3224 = vpop.f32.mrf.mxu0
  %v3225 = vadd.f32 %v3154, %v3224
  %3226 = vdwg.mxu0
  %v3227 = vmul.f32 %v3223, %v1204
  %v3228 = vmul.f32 %v3225, %v1208
  %v3229 = vadd.f32 %v3227, %v1217
  %v3230 = vadd.f32 %v3228, %v1221
  %v3231 = vtanh.pop %v3229
  %v3232 = vtanh.pop %v3230
  %v3233 = vmax.f32 %v2564, %v3231
  %v3234 = vmax.f32 %v2565, %v3232
  %v3235 = vld [vmem:[%s4] sm:$0xff]
  %v3236 = vld [vmem:[%s4 + $0x8] sm:$0xff]
  %v3237 = vld [vmem:[%s4 + $0x10] sm:$0xff]
  %v3238 = vld [vmem:[%s4 + $0x18] sm:$0xff]
  %v3239 = vld [vmem:[%s4 + $0x20] sm:$0xff]
  %v3240 = vld [vmem:[%s4 + $0x28] sm:$0xff]
  %v3241 = vld [vmem:[%s4 + $0x30] sm:$0xff]
  %v3242 = vld [vmem:[%s4 + $0x38] sm:$0xff]
  %v3243 = vld [vmem:[%s4 + $0x40] sm:$0xff]
  %v3244 = vld [vmem:[%s4 + $0x48] sm:$0xff]
  %v3245 = vld [vmem:[%s4 + $0x50] sm:$0xff]
  %v3246 = vld [vmem:[%s4 + $0x58] sm:$0xff]
  %v3247 = vld [vmem:[%s4 + $0x60] sm:$0xff]
  %v3248 = vld [vmem:[%s4 + $0x68] sm:$0xff]
  %v3249 = vld [vmem:[%s4 + $0x70] sm:$0xff]
  %v3250 = vld [vmem:[%s4 + $0x78] sm:$0xff]
  %v3251 = vld [vmem:[%s4 + $0x80] sm:$0xff]
  %v3252 = vld [vmem:[%s4 + $0x88] sm:$0xff]
  %v3253 = vld [vmem:[%s4 + $0x90] sm:$0xff]
  %v3254 = vld [vmem:[%s4 + $0x98] sm:$0xff]
  %v3255 = vld [vmem:[%s4 + $0xa0] sm:$0xff]
  %v3256 = vld [vmem:[%s4 + $0xa8] sm:$0xff]
  %v3257 = vld [vmem:[%s4 + $0xb0] sm:$0xff]
  %v3258 = vld [vmem:[%s4 + $0xb8] sm:$0xff]
  %v3259 = vld [vmem:[%s4 + $0xc0] sm:$0xff]
  %v3260 = vld [vmem:[%s4 + $0xc8] sm:$0xff]
  %v3261 = vld [vmem:[%s4 + $0xd0] sm:$0xff]
  %v3262 = vld [vmem:[%s4 + $0xd8] sm:$0xff]
  %v3263 = vld [vmem:[%s4 + $0xe0] sm:$0xff]
  %v3264 = vld [vmem:[%s4 + $0xe8] sm:$0xff]
  %v3265 = vld [vmem:[%s4 + $0xf0] sm:$0xff]
  %v3266 = vld [vmem:[%s4 + $0xf8] sm:$0xff]
  %v3267 = vld [vmem:[%s4 + $0x100] sm:$0xff]
  %v3268 = vld [vmem:[%s4 + $0x108] sm:$0xff]
  %v3269 = vld [vmem:[%s4 + $0x110] sm:$0xff]
  %v3270 = vld [vmem:[%s4 + $0x118] sm:$0xff]
  %v3271 = vld [vmem:[%s4 + $0x120] sm:$0xff]
  %v3272 = vld [vmem:[%s4 + $0x128] sm:$0xff]
  %v3273 = vld [vmem:[%s4 + $0x130] sm:$0xff]
  %v3274 = vld [vmem:[%s4 + $0x138] sm:$0xff]
  %v3275 = vld [vmem:[%s4 + $0x140] sm:$0xff]
  %v3276 = vld [vmem:[%s4 + $0x148] sm:$0xff]
  %v3277 = vld [vmem:[%s4 + $0x150] sm:$0xff]
  %v3278 = vld [vmem:[%s4 + $0x158] sm:$0xff]
  %v3279 = vld [vmem:[%s4 + $0x160] sm:$0xff]
  %v3280 = vld [vmem:[%s4 + $0x168] sm:$0xff]
  %v3281 = vld [vmem:[%s4 + $0x170] sm:$0xff]
  %v3282 = vld [vmem:[%s4 + $0x178] sm:$0xff]
  %v3283 = vld [vmem:[%s4 + $0x180] sm:$0xff]
  %v3284 = vld [vmem:[%s4 + $0x188] sm:$0xff]
  %v3285 = vld [vmem:[%s4 + $0x190] sm:$0xff]
  %v3286 = vld [vmem:[%s4 + $0x198] sm:$0xff]
  %v3287 = vld [vmem:[%s4 + $0x1a0] sm:$0xff]
  %v3288 = vld [vmem:[%s4 + $0x1a8] sm:$0xff]
  %v3289 = vld [vmem:[%s4 + $0x1b0] sm:$0xff]
  %v3290 = vld [vmem:[%s4 + $0x1b8] sm:$0xff]
  %v3291 = vld [vmem:[%s4 + $0x1c0] sm:$0xff]
  %v3292 = vld [vmem:[%s4 + $0x1c8] sm:$0xff]
  %v3293 = vld [vmem:[%s4 + $0x1d0] sm:$0xff]
  %v3294 = vld [vmem:[%s4 + $0x1d8] sm:$0xff]
  %v3295 = vld [vmem:[%s4 + $0x1e0] sm:$0xff]
  %v3296 = vld [vmem:[%s4 + $0x1e8] sm:$0xff]
  %v3297 = vld [vmem:[%s4 + $0x1f0] sm:$0xff]
  %v3298 = vld [vmem:[%s4 + $0x1f8] sm:$0xff]
  %v3299 = vld [vmem:[%s4 + $0x200] sm:$0xff]
  %v3300 = vld [vmem:[%s4 + $0x208] sm:$0xff]
  %v3301 = vld [vmem:[%s4 + $0x210] sm:$0xff]
  %v3302 = vld [vmem:[%s4 + $0x218] sm:$0xff]
  %v3303 = vld [vmem:[%s4 + $0x220] sm:$0xff]
  %v3304 = vld [vmem:[%s4 + $0x228] sm:$0xff]
  %v3305 = vld [vmem:[%s4 + $0x230] sm:$0xff]
  %v3306 = vld [vmem:[%s4 + $0x238] sm:$0xff]
  %v3307 = vld [vmem:[%s4 + $0x240] sm:$0xff]
  %v3308 = vld [vmem:[%s4 + $0x248] sm:$0xff]
  %v3309 = vld [vmem:[%s4 + $0x250] sm:$0xff]
  %v3310 = vld [vmem:[%s4 + $0x258] sm:$0xff]
  %v3311 = vld [vmem:[%s4 + $0x260] sm:$0xff]
  %v3312 = vld [vmem:[%s4 + $0x268] sm:$0xff]
  %v3313 = vld [vmem:[%s4 + $0x270] sm:$0xff]
  %v3314 = vld [vmem:[%s4 + $0x278] sm:$0xff]
  %v3315 = vld [vmem:[%s4 + $0x280] sm:$0xff]
  %v3316 = vld [vmem:[%s4 + $0x288] sm:$0xff]
  %v3317 = vld [vmem:[%s4 + $0x290] sm:$0xff]
  %v3318 = vld [vmem:[%s4 + $0x298] sm:$0xff]
  %v3319 = vld [vmem:[%s4 + $0x2a0] sm:$0xff]
  %v3320 = vld [vmem:[%s4 + $0x2a8] sm:$0xff]
  %v3321 = vld [vmem:[%s4 + $0x2b0] sm:$0xff]
  %v3322 = vld [vmem:[%s4 + $0x2b8] sm:$0xff]
  %v3323 = vld [vmem:[%s4 + $0x2c0] sm:$0xff]
  %v3324 = vld [vmem:[%s4 + $0x2c8] sm:$0xff]
  %v3325 = vld [vmem:[%s4 + $0x2d0] sm:$0xff]
  %v3326 = vld [vmem:[%s4 + $0x2d8] sm:$0xff]
  %v3327 = vld [vmem:[%s4 + $0x2e0] sm:$0xff]
  %v3328 = vld [vmem:[%s4 + $0x2e8] sm:$0xff]
  %v3329 = vld [vmem:[%s4 + $0x2f0] sm:$0xff]
  %v3330 = vld [vmem:[%s4 + $0x2f8] sm:$0xff]
  %v3331 = vld [vmem:[%s4 + $0x300] sm:$0xff]
  %v3332 = vld [vmem:[%s4 + $0x308] sm:$0xff]
  %v3333 = vld [vmem:[%s4 + $0x310] sm:$0xff]
  %v3334 = vld [vmem:[%s4 + $0x318] sm:$0xff]
  %v3335 = vld [vmem:[%s4 + $0x320] sm:$0xff]
  %v3336 = vld [vmem:[%s4 + $0x328] sm:$0xff]
  %v3337 = vld [vmem:[%s4 + $0x330] sm:$0xff]
  %v3338 = vld [vmem:[%s4 + $0x338] sm:$0xff]
  %v3339 = vld [vmem:[%s4 + $0x340] sm:$0xff]
  %v3340 = vld [vmem:[%s4 + $0x348] sm:$0xff]
  %v3341 = vld [vmem:[%s4 + $0x350] sm:$0xff]
  %v3342 = vld [vmem:[%s4 + $0x358] sm:$0xff]
  %v3343 = vld [vmem:[%s4 + $0x360] sm:$0xff]
  %v3344 = vld [vmem:[%s4 + $0x368] sm:$0xff]
  %v3345 = vld [vmem:[%s4 + $0x370] sm:$0xff]
  %v3346 = vld [vmem:[%s4 + $0x378] sm:$0xff]
  %v3347 = vld [vmem:[%s4 + $0x380] sm:$0xff]
  %v3348 = vld [vmem:[%s4 + $0x388] sm:$0xff]
  %v3349 = vld [vmem:[%s4 + $0x390] sm:$0xff]
  %v3350 = vld [vmem:[%s4 + $0x398] sm:$0xff]
  %v3351 = vld [vmem:[%s4 + $0x3a0] sm:$0xff]
  %v3352 = vld [vmem:[%s4 + $0x3a8] sm:$0xff]
  %v3353 = vld [vmem:[%s4 + $0x3b0] sm:$0xff]
  %v3354 = vld [vmem:[%s4 + $0x3b8] sm:$0xff]
  %v3355 = vld [vmem:[%s4 + $0x3c0] sm:$0xff]
  %v3356 = vld [vmem:[%s4 + $0x3c8] sm:$0xff]
  %v3357 = vld [vmem:[%s4 + $0x3d0] sm:$0xff]
  %v3358 = vld [vmem:[%s4 + $0x3d8] sm:$0xff]
  %v3359 = vld [vmem:[%s4 + $0x3e0] sm:$0xff]
  %v3360 = vld [vmem:[%s4 + $0x3e8] sm:$0xff]
  %v3361 = vld [vmem:[%s4 + $0x3f0] sm:$0xff]
  %v3362 = vld [vmem:[%s4 + $0x3f8] sm:$0xff]
  %3363 = vmatprep.subr.mxu0 %v3296
  %3364 = vmatpush1.msra.mxu0 %v3295
  %3365 = vmatprep.subr.mxu0 %v3292
  %3366 = vmatpush1.msra.mxu0 %v3291
  %3367 = vmatprep.subr.mxu0 %v3288
  %3368 = vmatpush1.msra.mxu0 %v3287
  %3369 = vmatprep.subr.mxu0 %v3284
  %3370 = vmatpush1.msra.mxu0 %v3283
  %3371 = vmatprep.subr.mxu0 %v3280
  %3372 = vmatpush1.msra.mxu0 %v3279
  %3373 = vmatprep.subr.mxu0 %v3276
  %3374 = vmatpush1.msra.mxu0 %v3275
  %3375 = vmatprep.subr.mxu0 %v3272
  %3376 = vmatpush1.msra.mxu0 %v3271
  %3377 = vmatprep.subr.mxu0 %v3268
  %3378 = vmatpush1.msra.mxu0 %v3267
  %3379 = vmatprep.subr.mxu0 %v3264
  %3380 = vmatpush1.msra.mxu0 %v3263
  %3381 = vmatprep.subr.mxu0 %v3260
  %3382 = vmatpush1.msra.mxu0 %v3259
  %3383 = vmatprep.subr.mxu0 %v3256
  %3384 = vmatpush1.msra.mxu0 %v3255
  %3385 = vmatprep.subr.mxu0 %v3252
  %3386 = vmatpush1.msra.mxu0 %v3251
  %3387 = vmatprep.subr.mxu0 %v3248
  %3388 = vmatpush1.msra.mxu0 %v3247
  %3389 = vmatprep.subr.mxu0 %v3244
  %3390 = vmatpush1.msra.mxu0 %v3243
  %3391 = vmatprep.subr.mxu0 %v3240
  %3392 = vmatpush1.msra.mxu0 %v3239
  %3393 = vmatprep.subr.mxu0 %v3236
  %3394 = vmatpush1.msra.mxu0 %v3235
  %3395 = vmatprep.subr.mxu0 %v3360
  %3396 = vmatpush2.msra.mxu0 %v3359
  %3397 = vmatprep.subr.mxu0 %v3356
  %3398 = vmatpush2.msra.mxu0 %v3355
  %3399 = vmatprep.subr.mxu0 %v3352
  %3400 = vmatpush2.msra.mxu0 %v3351
  %3401 = vmatprep.subr.mxu0 %v3348
  %3402 = vmatpush2.msra.mxu0 %v3347
  %3403 = vmatprep.subr.mxu0 %v3344
  %3404 = vmatpush2.msra.mxu0 %v3343
  %3405 = vmatprep.subr.mxu0 %v3340
  %3406 = vmatpush2.msra.mxu0 %v3339
  %3407 = vmatprep.subr.mxu0 %v3336
  %3408 = vmatpush2.msra.mxu0 %v3335
  %3409 = vmatprep.subr.mxu0 %v3332
  %3410 = vmatpush2.msra.mxu0 %v3331
  %3411 = vmatprep.subr.mxu0 %v3328
  %3412 = vmatpush2.msra.mxu0 %v3327
  %3413 = vmatprep.subr.mxu0 %v3324
  %3414 = vmatpush2.msra.mxu0 %v3323
  %3415 = vmatprep.subr.mxu0 %v3320
  %3416 = vmatpush2.msra.mxu0 %v3319
  %3417 = vmatprep.subr.mxu0 %v3316
  %3418 = vmatpush2.msra.mxu0 %v3315
  %3419 = vmatprep.subr.mxu0 %v3312
  %3420 = vmatpush2.msra.mxu0 %v3311
  %3421 = vmatprep.subr.mxu0 %v3308
  %3422 = vmatpush2.msra.mxu0 %v3307
  %3423 = vmatprep.subr.mxu0 %v3304
  %3424 = vmatpush2.msra.mxu0 %v3303
  %3425 = vmatprep.subr.mxu0 %v3300
  %3426 = vmatpush2.msra.mxu0 %v3299
  %3427 = vmatprep.mubr.f32.mxu0 %v3234
  %3428 = vmatmul.mubr.f32.gmra.mxu0 %v3233
  %v3429 = vpop.f32.mrf.mxu0
  %v3430 = vadd.f32 0.0, %v3429
  %v3431 = vpop.f32.mrf.mxu0
  %v3432 = vadd.f32 0.0, %v3431
  %3433 = vdwg.mxu0
  %3434 = vmatprep.subr.mxu0 %v3298
  %3435 = vmatpush1.msra.mxu0 %v3297
  %3436 = vmatprep.subr.mxu0 %v3294
  %3437 = vmatpush1.msra.mxu0 %v3293
  %3438 = vmatprep.subr.mxu0 %v3290
  %3439 = vmatpush1.msra.mxu0 %v3289
  %3440 = vmatprep.subr.mxu0 %v3286
  %3441 = vmatpush1.msra.mxu0 %v3285
  %3442 = vmatprep.subr.mxu0 %v3282
  %3443 = vmatpush1.msra.mxu0 %v3281
  %3444 = vmatprep.subr.mxu0 %v3278
  %3445 = vmatpush1.msra.mxu0 %v3277
  %3446 = vmatprep.subr.mxu0 %v3274
  %3447 = vmatpush1.msra.mxu0 %v3273
  %3448 = vmatprep.subr.mxu0 %v3270
  %3449 = vmatpush1.msra.mxu0 %v3269
  %3450 = vmatprep.subr.mxu0 %v3266
  %3451 = vmatpush1.msra.mxu0 %v3265
  %3452 = vmatprep.subr.mxu0 %v3262
  %3453 = vmatpush1.msra.mxu0 %v3261
  %3454 = vmatprep.subr.mxu0 %v3258
  %3455 = vmatpush1.msra.mxu0 %v3257
  %3456 = vmatprep.subr.mxu0 %v3254
  %3457 = vmatpush1.msra.mxu0 %v3253
  %3458 = vmatprep.subr.mxu0 %v3250
  %3459 = vmatpush1.msra.mxu0 %v3249
  %3460 = vmatprep.subr.mxu0 %v3246
  %3461 = vmatpush1.msra.mxu0 %v3245
  %3462 = vmatprep.subr.mxu0 %v3242
  %3463 = vmatpush1.msra.mxu0 %v3241
  %3464 = vmatprep.subr.mxu0 %v3238
  %3465 = vmatpush1.msra.mxu0 %v3237
  %3466 = vmatprep.subr.mxu0 %v3362
  %3467 = vmatpush2.msra.mxu0 %v3361
  %3468 = vmatprep.subr.mxu0 %v3358
  %3469 = vmatpush2.msra.mxu0 %v3357
  %3470 = vmatprep.subr.mxu0 %v3354
  %3471 = vmatpush2.msra.mxu0 %v3353
  %3472 = vmatprep.subr.mxu0 %v3350
  %3473 = vmatpush2.msra.mxu0 %v3349
  %3474 = vmatprep.subr.mxu0 %v3346
  %3475 = vmatpush2.msra.mxu0 %v3345
  %3476 = vmatprep.subr.mxu0 %v3342
  %3477 = vmatpush2.msra.mxu0 %v3341
  %3478 = vmatprep.subr.mxu0 %v3338
  %3479 = vmatpush2.msra.mxu0 %v3337
  %3480 = vmatprep.subr.mxu0 %v3334
  %3481 = vmatpush2.msra.mxu0 %v3333
  %3482 = vmatprep.subr.mxu0 %v3330
  %3483 = vmatpush2.msra.mxu0 %v3329
  %3484 = vmatprep.subr.mxu0 %v3326
  %3485 = vmatpush2.msra.mxu0 %v3325
  %3486 = vmatprep.subr.mxu0 %v3322
  %3487 = vmatpush2.msra.mxu0 %v3321
  %3488 = vmatprep.subr.mxu0 %v3318
  %3489 = vmatpush2.msra.mxu0 %v3317
  %3490 = vmatprep.subr.mxu0 %v3314
  %3491 = vmatpush2.msra.mxu0 %v3313
  %3492 = vmatprep.subr.mxu0 %v3310
  %3493 = vmatpush2.msra.mxu0 %v3309
  %3494 = vmatprep.subr.mxu0 %v3306
  %3495 = vmatpush2.msra.mxu0 %v3305
  %3496 = vmatprep.subr.mxu0 %v3302
  %3497 = vmatpush2.msra.mxu0 %v3301
  %3498 = vmatprep.mubr.f32.mxu0 %v3234
  %3499 = vmatmul.mubr.f32.gmra.mxu0 %v3233
  %v3500 = vpop.f32.mrf.mxu0
  %v3501 = vadd.f32 0.0, %v3500
  %v3502 = vpop.f32.mrf.mxu0
  %v3503 = vadd.f32 0.0, %v3502
  %3504 = vdwg.mxu0
  %v3505 = vld [vmem:[%s5] sm:$0xf]
  %v3507 = vlaneseq
  %v3508 = vshrl.u32 %v3507, 7
  %v3509 = vsub.s32 0, %v3508
  %v3510 = vrot.slane %v3505, %v3509
  %v3511 = vlaneseq
  %v3512 = vshrl.u32 %v3511, 7
  %v3513 = vsub.s32 1, %v3512
  %v3514 = vrot.slane %v3505, %v3513
  %v3515 = vlaneseq
  %v3516 = vshrl.u32 %v3515, 7
  %v3517 = vsub.s32 2, %v3516
  %v3518 = vrot.slane %v3505, %v3517
  %v3519 = vlaneseq
  %v3520 = vshrl.u32 %v3519, 7
  %v3521 = vsub.s32 3, %v3520
  %v3522 = vrot.slane %v3505, %v3521
  %v3527 = vmul.f32 %v3430, %v3510
  %v3528 = vmul.f32 %v3432, %v3514
  %v3529 = vmul.f32 %v3501, %v3518
  %v3530 = vmul.f32 %v3503, %v3522
  %v3531 = vld [vmem:[%s6] sm:$0xf]
  %v3533 = vlaneseq
  %v3534 = vshrl.u32 %v3533, 7
  %v3535 = vsub.s32 0, %v3534
  %v3536 = vrot.slane %v3531, %v3535
  %v3537 = vlaneseq
  %v3538 = vshrl.u32 %v3537, 7
  %v3539 = vsub.s32 1, %v3538
  %v3540 = vrot.slane %v3531, %v3539
  %v3541 = vlaneseq
  %v3542 = vshrl.u32 %v3541, 7
  %v3543 = vsub.s32 2, %v3542
  %v3544 = vrot.slane %v3531, %v3543
  %v3545 = vlaneseq
  %v3546 = vshrl.u32 %v3545, 7
  %v3547 = vsub.s32 3, %v3546
  %v3548 = vrot.slane %v3531, %v3547
  %v3553 = vadd.f32 %v3527, %v3536
  %v3554 = vadd.f32 %v3528, %v3540
  %v3555 = vadd.f32 %v3529, %v3544
  %v3556 = vadd.f32 %v3530, %v3548
  %v3557 = vtanh.pop %v3553
  %v3558 = vtanh.pop %v3554
  %v3559 = vtanh.pop %v3555
  %v3560 = vtanh.pop %v3556
  %v3565 = vcombine.low %v3557, %v3558
  %v3566 = vcombine.low %v3559, %v3560
  %v3568 = vunpack.c.l.s4 1983009808
  %v3569 = vunpack.c.0.s8 %v3568
  %v3570 = vlaneseq
  %v3571 = vshrl.u32 %v3570, 7
  %v3572 = vsub.s32 %v3569, %v3571
  %v3573 = vrot.slane %v3565, %v3572
  %v3575 = vunpack.c.l.s4 1983009808
  %v3576 = vunpack.c.0.s8 %v3575
  %v3577 = vlaneseq
  %v3578 = vshrl.u32 %v3577, 7
  %v3579 = vsub.s32 %v3576, %v3578
  %v3580 = vrot.slane %v3566, %v3579
  %v3581 = vcombine.low %v3573, %v3580
  %3583 = vst [vmem:[%s7] sm:$0xff] %v3581
  // Predicated region
  $region30: #{model_forward.3} parent=0 // pred_check
    _
  $region31: #{model_forward.3} parent=0 // pred_check_branch
    %3585 = sbr.rel (0) target = $region33
  $region32: #{model_forward.3} parent=0 // pred_region
    _
  $region33: #{model_forward.3} parent=0 // pred_fallthru
    _
  // Predicated region
  $region34: #{model_forward.3} parent=0 // pred_check
    _
  $region35: #{model_forward.3} parent=0 // pred_check_branch
    %3587 = sbr.rel (0) target = $region37
  $region36: #{model_forward.3} parent=0 // pred_region
    _
  $region37: #{model_forward.3} parent=0 // pred_fallthru
    _

</llo_original>
